<compile_context>
chip_gen: v7x
topology: tpu7x:2x2x1
jax: 0.10.0
libtpu: 0.0.40
codegen_flags: <defaults>
</compile_context>

<pallas_src>
import math

import jax
import jax.numpy as jnp
from jax.experimental import pallas as pl
from jax.experimental.pallas import tpu as pltpu

# ---- module hyper-parameters (small, consistent with defaults / scaled down) ----
N_LAYERS = 2
N_HEADS = 2
HIDDEN = 32
INNER = 64
SEQ = 8
BATCH = 2
HEAD = HIDDEN // N_HEADS
LN_EPS = 1e-12

# Row layout of the per-layer (8, 128) bias/LayerNorm slab.
_R_BQKV, _R_BD, _R_LN1G, _R_LN1B, _R_B1, _R_B2, _R_LN2G, _R_LN2B = range(8)


def _layernorm(x, gamma, beta, eps):
    mean = jnp.mean(x, axis=-1, keepdims=True)
    var = jnp.mean((x - mean) ** 2, axis=-1, keepdims=True)
    return (x - mean) * jax.lax.rsqrt(var + eps) * gamma + beta


def _gelu_exact(x):
    # RecBole FeedForward uses exact erf-based GELU.
    return x * 0.5 * (1.0 + jax.lax.erf(x / math.sqrt(2.0)))


def _tensorcores_per_chip():
    """Best-effort detection of chips exposing 2 TensorCores to one Pallas program."""
    try:
        kind = jax.devices()[0].device_kind.lower()
    except Exception:  # pragma: no cover - defensive
        return 1
    if "lite" in kind:          # v5e / v6e style naming
        return 1
    for tag in ("v7", "v4", "v5p"):
        if tag in kind:
            return 2
    return 1


# ------------------------------ Pallas kernel ------------------------------
def _make_encoder_kernel(bb, store_all):
    """Kernel processing `bb` batch elements per grid step."""

    def encoder_kernel(x_ref, mask_ref, pk_ref, pv_ref, tk_ref, tv_ref,
                       wqkv_ref, wd_ref, w1_ref, w2_ref, bias_ref, out_ref):
        S, H = SEQ, HIDDEN
        inv_sqrt_d = 1.0 / math.sqrt(HEAD)

        # All batch rows folded into M for the linear layers.
        h = x_ref[...].reshape(bb * S, H)                      # (bb*S, H) f32

        for l in range(N_LAYERS):                              # static unroll over layers
            wqkv = wqkv_ref[l]                                 # (H, 3H)   bf16
            wd = wd_ref[l]                                     # (H, H)    bf16
            w1 = w1_ref[l]                                     # (H, INNER) bf16
            w2 = w2_ref[l]                                     # (INNER, H) bf16
            bias = bias_ref[l]                                 # (8, 128)  f32

            bqkv = bias[_R_BQKV:_R_BQKV + 1, :3 * H]           # (1, 3H)
            bd = bias[_R_BD:_R_BD + 1, :H]
            ln1g = bias[_R_LN1G:_R_LN1G + 1, :H]
            ln1b = bias[_R_LN1B:_R_LN1B + 1, :H]
            b1 = bias[_R_B1:_R_B1 + 1, :INNER]
            b2 = bias[_R_B2:_R_B2 + 1, :H]
            ln2g = bias[_R_LN2G:_R_LN2G + 1, :H]
            ln2b = bias[_R_LN2B:_R_LN2B + 1, :H]

            # Fused Q/K/V projection over all bb*S rows (bf16 operands, f32 accumulate).
            qkv = jnp.dot(h.astype(jnp.bfloat16), wqkv,
                          preferred_element_type=jnp.float32) + bqkv      # (bb*S, 3H) f32

            ctx_rows = []
            for b in range(bb):                                # static unroll over batch
                rows = slice(b * S, (b + 1) * S)
                q = qkv[rows, 0:H]                             # (S, H) f32
                # Merge positional terms: q@k.T + q@posK.T == q@(k+posK).T, same for V.
                k_eff = qkv[rows, H:2 * H] + pk_ref[b]         # (S, H)
                v_eff = qkv[rows, 2 * H:3 * H] + pv_ref[b]     # (S, H)
                mask = mask_ref[b]                             # (S, S) additive mask
                time_k = tk_ref[b]                             # (S, S, H) f32
                time_v = tv_ref[b]                             # (S, S, H) f32

                q_bf = q.astype(jnp.bfloat16)
                k_bf = k_eff.astype(jnp.bfloat16)
                v_bf = v_eff.astype(jnp.bfloat16)

                # One full-width VPU pass over time_k shared by both heads.
                tkq = time_k * q[:, None, :]                   # (S, S, H) f32

                head_ctx = []
                prob_list = []
                for hh in range(N_HEADS):                      # static unroll over heads
                    sl = slice(hh * HEAD, (hh + 1) * HEAD)
                    scores = jnp.dot(q_bf[:, sl], k_bf[:, sl].T,
                                     preferred_element_type=jnp.float32)   # (S, S)
                    scores = scores + jnp.sum(tkq[:, :, sl], axis=-1)      # time term
                    scores = scores * inv_sqrt_d + mask

                    # numerically-stable softmax; reciprocal on the EUP slot.
                    m = jnp.max(scores, axis=-1, keepdims=True)
                    e = jnp.exp(scores - m)
                    probs = e * pl.reciprocal(jnp.sum(e, axis=-1, keepdims=True),
                                              approx=True)                 # (S, S) f32
                    prob_list.append(probs)
                    head_ctx.append(jnp.dot(probs.astype(jnp.bfloat16), v_bf[:, sl],
                                            preferred_element_type=jnp.float32))

                ctx = jnp.concatenate(head_ctx, axis=-1)       # (S, H)

                # time_v term hoisted over heads: broadcast per-head probs across that
                # head's lanes and do ONE multiply+reduce over the full (S, S, H) tensor.
                probs_full = jnp.concatenate(
                    [jnp.broadcast_to(p[:, :, None], (S, S, HEAD)) for p in prob_list],
                    axis=-1)                                   # (S, S, H)
                ctx = ctx + jnp.sum(probs_full * time_v, axis=1)           # (S, H)

                ctx_rows.append(ctx)

            ctx_all = (jnp.concatenate(ctx_rows, axis=0) if bb > 1
                       else ctx_rows[0])                       # (bb*S, H)

            # Single output projection for all heads and all batch rows (one MXU push).
            attn = jnp.dot(ctx_all.astype(jnp.bfloat16), wd,
                           preferred_element_type=jnp.float32) + bd
            attn = _layernorm(attn + h, ln1g, ln1b, LN_EPS)

            # point-wise feed-forward + residual + LayerNorm (all bb*S rows at once)
            h1 = jnp.dot(attn.astype(jnp.bfloat16), w1,
                         preferred_element_type=jnp.float32) + b1
            h1 = _gelu_exact(h1)
            h2 = jnp.dot(h1.astype(jnp.bfloat16), w2,
                         preferred_element_type=jnp.float32) + b2
            h = _layernorm(h2 + attn, ln2g, ln2b, LN_EPS)

            if store_all:
                out_ref[l] = h.reshape(bb, S, H)
            elif l == N_LAYERS - 1:
                out_ref[0] = h.reshape(bb, S, H)

    return encoder_kernel


# ------------------------------ wrapper ------------------------------
def _pack_params(layer_params):
    """Stack per-layer weights (bf16, leading layer axis) and pack all bias/LN vectors
    into one lane-aligned (L, 8, 128) f32 slab (cuts DMA descriptor count)."""
    wqkv = jnp.stack([jnp.concatenate([p["wq"], p["wk"], p["wv"]], axis=1)
                      for p in layer_params]).astype(jnp.bfloat16)   # (L, H, 3H)
    wd = jnp.stack([p["wd"] for p in layer_params]).astype(jnp.bfloat16)   # (L, H, H)
    w1 = jnp.stack([p["w1"] for p in layer_params]).astype(jnp.bfloat16)   # (L, H, INNER)
    w2 = jnp.stack([p["w2"] for p in layer_params]).astype(jnp.bfloat16)   # (L, INNER, H)

    def row(vec):
        v = jnp.asarray(vec, jnp.float32).reshape(-1)
        return jnp.pad(v, (0, 128 - v.shape[0]))

    slabs = []
    for p in layer_params:
        rows = [
            row(jnp.concatenate([p["bq"].reshape(-1), p["bk"].reshape(-1),
                                 p["bv"].reshape(-1)])),
            row(p["bd"]), row(p["ln1g"]), row(p["ln1b"]),
            row(p["b1"]), row(p["b2"]), row(p["ln2g"]), row(p["ln2b"]),
        ]
        slabs.append(jnp.stack(rows))                               # (8, 128)
    bias_slab = jnp.stack(slabs)                                    # (L, 8, 128) f32
    return wqkv, wd, w1, w2, bias_slab


def time_aware_transformer_encoder(x, mask, pos_k, pos_v, time_k, time_v,
                                   layer_params, output_all_encoded_layers=True):
    B, S, H = x.shape
    L = len(layer_params)
    wqkv, wd, w1, w2, bias_slab = _pack_params(layer_params)
    mask2d = mask[:, 0]                                             # (B, S, S)

    # One batch element per grid step only where a second TensorCore can take it
    # (v7x / megacore); single-TC chips fold the whole batch into one grid step.
    bb = 1 if (_tensorcores_per_chip() >= 2 and B > 1) else B
    grid = (B // bb,)
    n_out = L if output_all_encoded_layers else 1

    seq_spec = pl.BlockSpec((bb, S, H), lambda g: (g, 0, 0))
    mask_spec = pl.BlockSpec((bb, S, S), lambda g: (g, 0, 0))
    time_spec = pl.BlockSpec((bb, S, S, H), lambda g: (g, 0, 0, 0))

    def full_spec(a):
        nd = a.ndim
        return pl.BlockSpec(a.shape, lambda g, _nd=nd: (0,) * _nd)

    out = pl.pallas_call(
        _make_encoder_kernel(bb, output_all_encoded_layers),
        grid=grid,
        in_specs=[seq_spec, mask_spec, seq_spec, seq_spec, time_spec, time_spec,
                  full_spec(wqkv), full_spec(wd), full_spec(w1), full_spec(w2),
                  full_spec(bias_slab)],
        out_specs=pl.BlockSpec((n_out, bb, S, H), lambda g: (0, g, 0, 0)),
        out_shape=jax.ShapeDtypeStruct((n_out, B, S, H), jnp.float32),
        compiler_params=pltpu.CompilerParams(dimension_semantics=("parallel",)),
    )(x, mask2d, pos_k, pos_v, time_k, time_v, wqkv, wd, w1, w2, bias_slab)

    return [out[i] for i in range(n_out)]


# --------------------- pure-JAX reference (for checking) ---------------------
def ref_layer(x, mask, pos_k, pos_v, time_k, time_v, p):
    B, S, H = x.shape
    nh, hd = N_HEADS, HEAD

    def split(t):  # (B,S,H) -> (B,nh,S,hd)
        return t.reshape(B, S, nh, hd).transpose(0, 2, 1, 3)

    q = split(x @ p["wq"] + p["bq"])
    k = split(x @ p["wk"] + p["bk"])
    v = split(x @ p["wv"] + p["bv"])
    pk = split(pos_k)
    pv = split(pos_v)
    tk = time_k.reshape(B, S, S, nh, hd).transpose(0, 3, 1, 2, 4)
    tv = time_v.reshape(B, S, S, nh, hd).transpose(0, 3, 1, 2, 4)

    scores = jnp.einsum("bhid,bhjd->bhij", q, k)
    scores = scores + jnp.einsum("bhid,bhjd->bhij", q, pk)
    scores = scores + jnp.einsum("bhijd,bhid->bhij", tk, q)
    scores = scores / math.sqrt(hd) + mask
    probs = jax.nn.softmax(scores, axis=-1)

    ctx = jnp.einsum("bhij,bhjd->bhid", probs, v)
    ctx = ctx + jnp.einsum("bhij,bhjd->bhid", probs, pv)
    ctx = ctx + jnp.einsum("bhij,bhijd->bhid", probs, tv)
    ctx = ctx.transpose(0, 2, 1, 3).reshape(B, S, H)

    attn = ctx @ p["wd"] + p["bd"]
    attn = _layernorm(attn + x, p["ln1g"], p["ln1b"], LN_EPS)
    h1 = _gelu_exact(attn @ p["w1"] + p["b1"])
    h2 = h1 @ p["w2"] + p["b2"]
    return _layernorm(h2 + attn, p["ln2g"], p["ln2b"], LN_EPS)


# ------------------------------ parameter init ------------------------------
def init_layer_params(key):
    ks = jax.random.split(key, 6)
    n01 = lambda k, shape: (0.02 * jax.random.normal(k, shape)).astype(jnp.float32)
    return {
        "wq": n01(ks[0], (HIDDEN, HIDDEN)), "bq": jnp.zeros((1, HIDDEN), jnp.float32),
        "wk": n01(ks[1], (HIDDEN, HIDDEN)), "bk": jnp.zeros((1, HIDDEN), jnp.float32),
        "wv": n01(ks[2], (HIDDEN, HIDDEN)), "bv": jnp.zeros((1, HIDDEN), jnp.float32),
        "wd": n01(ks[3], (HIDDEN, HIDDEN)), "bd": jnp.zeros((1, HIDDEN), jnp.float32),
        "ln1g": jnp.ones((1, HIDDEN), jnp.float32), "ln1b": jnp.zeros((1, HIDDEN), jnp.float32),
        "w1": n01(ks[4], (HIDDEN, INNER)), "b1": jnp.zeros((1, INNER), jnp.float32),
        "w2": n01(ks[5], (INNER, HIDDEN)), "b2": jnp.zeros((1, HIDDEN), jnp.float32),
        "ln2g": jnp.ones((1, HIDDEN), jnp.float32), "ln2b": jnp.zeros((1, HIDDEN), jnp.float32),
    }


if __name__ == "__main__":
    root = jax.random.PRNGKey(0)
    k_in, k_pk, k_pv, k_tk, k_tv, k_l0, k_l1 = jax.random.split(root, 7)

    x = jax.random.normal(k_in, (BATCH, SEQ, HIDDEN), jnp.float32)
    pos_k = jax.random.normal(k_pk, (BATCH, SEQ, HIDDEN), jnp.float32)
    pos_v = jax.random.normal(k_pv, (BATCH, SEQ, HIDDEN), jnp.float32)
    time_k = jax.random.normal(k_tk, (BATCH, SEQ, SEQ, HIDDEN), jnp.float32)
    time_v = jax.random.normal(k_tv, (BATCH, SEQ, SEQ, HIDDEN), jnp.float32)

    # causal additive attention mask, (B, 1, S, S): 0 where allowed, -10000 else
    causal = jnp.tril(jnp.ones((SEQ, SEQ), jnp.float32))
    mask = jnp.where(causal > 0, 0.0, -10000.0)[None, None]
    mask = jnp.broadcast_to(mask, (BATCH, 1, SEQ, SEQ)).astype(jnp.float32)

    layer_params = [init_layer_params(k_l0), init_layer_params(k_l1)]

    # Fused Pallas encoder (output_all_encoded_layers=True -> list of all layer outputs)
    outs = time_aware_transformer_encoder(
        x, mask, pos_k, pos_v, time_k, time_v, layer_params,
        output_all_encoded_layers=True)
    outs = [jax.block_until_ready(o) for o in outs]

    # Pure-JAX f32 reference. Tolerance covers bf16 matmul operands (f32 accumulate),
    # approx reciprocal in the softmax, and the reassociated positional terms.
    h_ref = x
    refs = []
    for p in layer_params:
        h_ref = ref_layer(h_ref, mask, pos_k, pos_v, time_k, time_v, p)
        refs.append(h_ref)

    RTOL = ATOL = 2e-2
    for o, r in zip(outs, refs):
        assert o.shape == (BATCH, SEQ, HIDDEN)
        err = float(jnp.max(jnp.abs(o - r)))
        assert jnp.allclose(o, r, rtol=RTOL, atol=ATOL), err

    # Last-layer-only path (skips intermediate-layer stores, smaller output).
    out_last = time_aware_transformer_encoder(
        x, mask, pos_k, pos_v, time_k, time_v, layer_params,
        output_all_encoded_layers=False)
    out_last = [jax.block_until_ready(o) for o in out_last]
    assert len(out_last) == 1
    err_last = float(jnp.max(jnp.abs(out_last[0] - refs[-1])))
    assert jnp.allclose(out_last[0], refs[-1], rtol=RTOL, atol=ATOL), err_last

    print("KERNEL_OK")
</pallas_src>

<mosaic_0001>
module attributes {stable_mosaic.version = 11 : i64} {
  func.func @encoder_kernel(%arg0: i32, %arg1: memref<2x8x32xf32, #tpu.memory_space<vmem>>, %arg2: memref<2x8x8xf32, #tpu.memory_space<vmem>>, %arg3: memref<2x8x32xf32, #tpu.memory_space<vmem>>, %arg4: memref<2x8x32xf32, #tpu.memory_space<vmem>>, %arg5: memref<2x8x8x32xf32, #tpu.memory_space<vmem>>, %arg6: memref<2x8x8x32xf32, #tpu.memory_space<vmem>>, %arg7: memref<2x32x96xbf16, #tpu.memory_space<vmem>>, %arg8: memref<2x32x32xbf16, #tpu.memory_space<vmem>>, %arg9: memref<2x32x64xbf16, #tpu.memory_space<vmem>>, %arg10: memref<2x64x32xbf16, #tpu.memory_space<vmem>>, %arg11: memref<2x8x128xf32, #tpu.memory_space<vmem>>, %arg12: memref<2x2x8x32xf32, #tpu.memory_space<vmem>>) attributes {dimension_semantics = [#tpu.dimension_semantics<parallel>], iteration_bounds = array<i64: 1>, scalar_prefetch = 0 : i64, scratch_operands = 0 : i64, tpu.core_type = #tpu.core_type<tc>, window_params = [{transform_indices = @transform_0, window_bounds = array<i64: 2, 8, 32>}, {transform_indices = @transform_1, window_bounds = array<i64: 2, 8, 8>}, {transform_indices = @transform_2, window_bounds = array<i64: 2, 8, 32>}, {transform_indices = @transform_3, window_bounds = array<i64: 2, 8, 32>}, {transform_indices = @transform_4, window_bounds = array<i64: 2, 8, 8, 32>}, {transform_indices = @transform_5, window_bounds = array<i64: 2, 8, 8, 32>}, {pipeline_mode = #tpu.pipeline_mode<synchronous>, transform_indices = @transform_6, window_bounds = array<i64: 2, 32, 96>}, {pipeline_mode = #tpu.pipeline_mode<synchronous>, transform_indices = @transform_7, window_bounds = array<i64: 2, 32, 32>}, {pipeline_mode = #tpu.pipeline_mode<synchronous>, transform_indices = @transform_8, window_bounds = array<i64: 2, 32, 64>}, {pipeline_mode = #tpu.pipeline_mode<synchronous>, transform_indices = @transform_9, window_bounds = array<i64: 2, 64, 32>}, {pipeline_mode = #tpu.pipeline_mode<synchronous>, transform_indices = @transform_10, window_bounds = array<i64: 2, 8, 128>}, {transform_indices = @transform_11, window_bounds = array<i64: 2, 2, 8, 32>}]} {
    %c0 = arith.constant 0 : index
    %c0_0 = arith.constant 0 : index
    %c0_1 = arith.constant 0 : index
    %0 = vector.load %arg1[%c0, %c0_0, %c0_1] : memref<2x8x32xf32, #tpu.memory_space<vmem>>, vector<2x8x32xf32>
    %1 = vector.shape_cast %0 : vector<2x8x32xf32> to vector<16x32xf32>
    %c0_2 = arith.constant 0 : index
    %c0_3 = arith.constant 0 : index
    %c0_4 = arith.constant 0 : index
    %2 = vector.load %arg7[%c0_2, %c0_3, %c0_4] : memref<2x32x96xbf16, #tpu.memory_space<vmem>>, vector<1x32x96xbf16>
    %3 = vector.shape_cast %2 : vector<1x32x96xbf16> to vector<32x96xbf16>
    %c0_5 = arith.constant 0 : index
    %c0_6 = arith.constant 0 : index
    %c0_7 = arith.constant 0 : index
    %4 = vector.load %arg8[%c0_5, %c0_6, %c0_7] : memref<2x32x32xbf16, #tpu.memory_space<vmem>>, vector<1x32x32xbf16>
    %5 = vector.shape_cast %4 : vector<1x32x32xbf16> to vector<32x32xbf16>
    %c0_8 = arith.constant 0 : index
    %c0_9 = arith.constant 0 : index
    %c0_10 = arith.constant 0 : index
    %6 = vector.load %arg9[%c0_8, %c0_9, %c0_10] : memref<2x32x64xbf16, #tpu.memory_space<vmem>>, vector<1x32x64xbf16>
    %7 = vector.shape_cast %6 : vector<1x32x64xbf16> to vector<32x64xbf16>
    %c0_11 = arith.constant 0 : index
    %c0_12 = arith.constant 0 : index
    %c0_13 = arith.constant 0 : index
    %8 = vector.load %arg10[%c0_11, %c0_12, %c0_13] : memref<2x64x32xbf16, #tpu.memory_space<vmem>>, vector<1x64x32xbf16>
    %9 = vector.shape_cast %8 : vector<1x64x32xbf16> to vector<64x32xbf16>
    %c0_14 = arith.constant 0 : index
    %c0_15 = arith.constant 0 : index
    %c0_16 = arith.constant 0 : index
    %10 = vector.load %arg11[%c0_14, %c0_15, %c0_16] : memref<2x8x128xf32, #tpu.memory_space<vmem>>, vector<1x8x128xf32>
    %11 = vector.shape_cast %10 : vector<1x8x128xf32> to vector<8x128xf32>
    %12 = vector.extract_strided_slice %11 {offsets = [0, 0], sizes = [1, 96], strides = [1, 1]} : vector<8x128xf32> to vector<1x96xf32>
    %13 = vector.extract_strided_slice %11 {offsets = [1, 0], sizes = [1, 32], strides = [1, 1]} : vector<8x128xf32> to vector<1x32xf32>
    %14 = vector.extract_strided_slice %11 {offsets = [2, 0], sizes = [1, 32], strides = [1, 1]} : vector<8x128xf32> to vector<1x32xf32>
    %15 = vector.extract_strided_slice %11 {offsets = [3, 0], sizes = [1, 32], strides = [1, 1]} : vector<8x128xf32> to vector<1x32xf32>
    %16 = vector.extract_strided_slice %11 {offsets = [4, 0], sizes = [1, 64], strides = [1, 1]} : vector<8x128xf32> to vector<1x64xf32>
    %17 = vector.extract_strided_slice %11 {offsets = [5, 0], sizes = [1, 32], strides = [1, 1]} : vector<8x128xf32> to vector<1x32xf32>
    %18 = vector.extract_strided_slice %11 {offsets = [6, 0], sizes = [1, 32], strides = [1, 1]} : vector<8x128xf32> to vector<1x32xf32>
    %19 = vector.extract_strided_slice %11 {offsets = [7, 0], sizes = [1, 32], strides = [1, 1]} : vector<8x128xf32> to vector<1x32xf32>
    %20 = arith.truncf %1 : vector<16x32xf32> to vector<16x32xbf16>
    %cst = arith.constant dense<0.000000e+00> : vector<16x96xf32>
    %21 = tpu.matmul %20, %3, %cst {dimension_numbers = #tpu.dot_dimension_numbers<[1], [0], [0], [1], [0, 0, 1, 1], [], []>} : vector<16x32xbf16>, vector<32x96xbf16>, vector<16x96xf32> -> vector<16x96xf32>
    %22 = vector.broadcast %12 : vector<1x96xf32> to vector<16x96xf32>
    %23 = arith.addf %21, %22 : vector<16x96xf32>
    %24 = vector.extract_strided_slice %23 {offsets = [0, 0], sizes = [8, 32], strides = [1, 1]} : vector<16x96xf32> to vector<8x32xf32>
    %25 = vector.extract_strided_slice %23 {offsets = [0, 32], sizes = [8, 32], strides = [1, 1]} : vector<16x96xf32> to vector<8x32xf32>
    %c0_17 = arith.constant 0 : index
    %c0_18 = arith.constant 0 : index
    %c0_19 = arith.constant 0 : index
    %26 = vector.load %arg3[%c0_17, %c0_18, %c0_19] : memref<2x8x32xf32, #tpu.memory_space<vmem>>, vector<1x8x32xf32>
    %27 = vector.shape_cast %26 : vector<1x8x32xf32> to vector<8x32xf32>
    %28 = arith.addf %25, %27 : vector<8x32xf32>
    %29 = vector.extract_strided_slice %23 {offsets = [0, 64], sizes = [8, 32], strides = [1, 1]} : vector<16x96xf32> to vector<8x32xf32>
    %c0_20 = arith.constant 0 : index
    %c0_21 = arith.constant 0 : index
    %c0_22 = arith.constant 0 : index
    %30 = vector.load %arg4[%c0_20, %c0_21, %c0_22] : memref<2x8x32xf32, #tpu.memory_space<vmem>>, vector<1x8x32xf32>
    %31 = vector.shape_cast %30 : vector<1x8x32xf32> to vector<8x32xf32>
    %32 = arith.addf %29, %31 : vector<8x32xf32>
    %c0_23 = arith.constant 0 : index
    %c0_24 = arith.constant 0 : index
    %c0_25 = arith.constant 0 : index
    %33 = vector.load %arg2[%c0_23, %c0_24, %c0_25] : memref<2x8x8xf32, #tpu.memory_space<vmem>>, vector<1x8x8xf32>
    %34 = vector.shape_cast %33 : vector<1x8x8xf32> to vector<8x8xf32>
    %c0_26 = arith.constant 0 : index
    %c0_27 = arith.constant 0 : index
    %c0_28 = arith.constant 0 : index
    %c0_29 = arith.constant 0 : index
    %35 = vector.load %arg5[%c0_26, %c0_27, %c0_28, %c0_29] : memref<2x8x8x32xf32, #tpu.memory_space<vmem>>, vector<1x8x8x32xf32>
    %36 = vector.shape_cast %35 : vector<1x8x8x32xf32> to vector<8x8x32xf32>
    %c0_30 = arith.constant 0 : index
    %c0_31 = arith.constant 0 : index
    %c0_32 = arith.constant 0 : index
    %c0_33 = arith.constant 0 : index
    %37 = vector.load %arg6[%c0_30, %c0_31, %c0_32, %c0_33] : memref<2x8x8x32xf32, #tpu.memory_space<vmem>>, vector<1x8x8x32xf32>
    %38 = vector.shape_cast %37 : vector<1x8x8x32xf32> to vector<8x8x32xf32>
    %39 = arith.truncf %24 : vector<8x32xf32> to vector<8x32xbf16>
    %40 = arith.truncf %28 : vector<8x32xf32> to vector<8x32xbf16>
    %41 = arith.truncf %32 : vector<8x32xf32> to vector<8x32xbf16>
    %42 = vector.shape_cast %24 : vector<8x32xf32> to vector<8x1x32xf32>
    %43 = vector.broadcast %42 : vector<8x1x32xf32> to vector<8x8x32xf32>
    %44 = arith.mulf %36, %43 : vector<8x8x32xf32>
    %45 = vector.extract_strided_slice %39 {offsets = [0, 0], sizes = [8, 16], strides = [1, 1]} : vector<8x32xbf16> to vector<8x16xbf16>
    %46 = vector.extract_strided_slice %40 {offsets = [0, 0], sizes = [8, 16], strides = [1, 1]} : vector<8x32xbf16> to vector<8x16xbf16>
    %47 = tpu.transpose %46, [1, 0] : vector<8x16xbf16> -> vector<16x8xbf16>
    %cst_34 = arith.constant dense<0.000000e+00> : vector<8x8xf32>
    %48 = tpu.matmul %45, %47, %cst_34 {dimension_numbers = #tpu.dot_dimension_numbers<[1], [0], [0], [1], [0, 0, 1, 1], [], []>} : vector<8x16xbf16>, vector<16x8xbf16>, vector<8x8xf32> -> vector<8x8xf32>
    %49 = vector.extract_strided_slice %44 {offsets = [0, 0, 0], sizes = [8, 8, 16], strides = [1, 1, 1]} : vector<8x8x32xf32> to vector<8x8x16xf32>
    %cst_35 = arith.constant dense<0.000000e+00> : vector<8x8xf32>
    %50 = vector.multi_reduction <add>, %49, %cst_35 [2] : vector<8x8x16xf32> to vector<8x8xf32>
    %51 = arith.addf %48, %50 : vector<8x8xf32>
    %cst_36 = arith.constant 2.500000e-01 : f32
    %52 = vector.broadcast %cst_36 : f32 to vector<8x8xf32>
    %53 = arith.mulf %51, %52 : vector<8x8xf32>
    %54 = arith.addf %53, %34 : vector<8x8xf32>
    %cst_37 = arith.constant dense<0xFF800000> : vector<8xf32>
    %55 = vector.multi_reduction <maximumf>, %54, %cst_37 [1] : vector<8x8xf32> to vector<8xf32>
    %56 = vector.shape_cast %55 : vector<8xf32> to vector<8x1xf32>
    %57 = vector.broadcast %56 : vector<8x1xf32> to vector<8x8xf32>
    %58 = arith.subf %54, %57 : vector<8x8xf32>
    %59 = math.exp %58 : vector<8x8xf32>
    %cst_38 = arith.constant dense<0.000000e+00> : vector<8xf32>
    %60 = vector.multi_reduction <add>, %59, %cst_38 [1] : vector<8x8xf32> to vector<8xf32>
    %61 = vector.shape_cast %60 : vector<8xf32> to vector<8x1xf32>
    %62 = tpu.reciprocal %61 {approx = true} : vector<8x1xf32> -> vector<8x1xf32>
    %63 = vector.broadcast %62 : vector<8x1xf32> to vector<8x8xf32>
    %64 = arith.mulf %59, %63 : vector<8x8xf32>
    %65 = arith.truncf %64 : vector<8x8xf32> to vector<8x8xbf16>
    %66 = vector.extract_strided_slice %41 {offsets = [0, 0], sizes = [8, 16], strides = [1, 1]} : vector<8x32xbf16> to vector<8x16xbf16>
    %cst_39 = arith.constant dense<0.000000e+00> : vector<8x16xf32>
    %67 = tpu.matmul %65, %66, %cst_39 {dimension_numbers = #tpu.dot_dimension_numbers<[1], [0], [0], [1], [0, 0, 1, 1], [], []>} : vector<8x8xbf16>, vector<8x16xbf16>, vector<8x16xf32> -> vector<8x16xf32>
    %68 = vector.extract_strided_slice %39 {offsets = [0, 16], sizes = [8, 16], strides = [1, 1]} : vector<8x32xbf16> to vector<8x16xbf16>
    %69 = vector.extract_strided_slice %40 {offsets = [0, 16], sizes = [8, 16], strides = [1, 1]} : vector<8x32xbf16> to vector<8x16xbf16>
    %70 = tpu.transpose %69, [1, 0] : vector<8x16xbf16> -> vector<16x8xbf16>
    %cst_40 = arith.constant dense<0.000000e+00> : vector<8x8xf32>
    %71 = tpu.matmul %68, %70, %cst_40 {dimension_numbers = #tpu.dot_dimension_numbers<[1], [0], [0], [1], [0, 0, 1, 1], [], []>} : vector<8x16xbf16>, vector<16x8xbf16>, vector<8x8xf32> -> vector<8x8xf32>
    %72 = vector.extract_strided_slice %44 {offsets = [0, 0, 16], sizes = [8, 8, 16], strides = [1, 1, 1]} : vector<8x8x32xf32> to vector<8x8x16xf32>
    %cst_41 = arith.constant dense<0.000000e+00> : vector<8x8xf32>
    %73 = vector.multi_reduction <add>, %72, %cst_41 [2] : vector<8x8x16xf32> to vector<8x8xf32>
    %74 = arith.addf %71, %73 : vector<8x8xf32>
    %cst_42 = arith.constant 2.500000e-01 : f32
    %75 = vector.broadcast %cst_42 : f32 to vector<8x8xf32>
    %76 = arith.mulf %74, %75 : vector<8x8xf32>
    %77 = arith.addf %76, %34 : vector<8x8xf32>
    %cst_43 = arith.constant dense<0xFF800000> : vector<8xf32>
    %78 = vector.multi_reduction <maximumf>, %77, %cst_43 [1] : vector<8x8xf32> to vector<8xf32>
    %79 = vector.shape_cast %78 : vector<8xf32> to vector<8x1xf32>
    %80 = vector.broadcast %79 : vector<8x1xf32> to vector<8x8xf32>
    %81 = arith.subf %77, %80 : vector<8x8xf32>
    %82 = math.exp %81 : vector<8x8xf32>
    %cst_44 = arith.constant dense<0.000000e+00> : vector<8xf32>
    %83 = vector.multi_reduction <add>, %82, %cst_44 [1] : vector<8x8xf32> to vector<8xf32>
    %84 = vector.shape_cast %83 : vector<8xf32> to vector<8x1xf32>
    %85 = tpu.reciprocal %84 {approx = true} : vector<8x1xf32> -> vector<8x1xf32>
    %86 = vector.broadcast %85 : vector<8x1xf32> to vector<8x8xf32>
    %87 = arith.mulf %82, %86 : vector<8x8xf32>
    %88 = arith.truncf %87 : vector<8x8xf32> to vector<8x8xbf16>
    %89 = vector.extract_strided_slice %41 {offsets = [0, 16], sizes = [8, 16], strides = [1, 1]} : vector<8x32xbf16> to vector<8x16xbf16>
    %cst_45 = arith.constant dense<0.000000e+00> : vector<8x16xf32>
    %90 = tpu.matmul %88, %89, %cst_45 {dimension_numbers = #tpu.dot_dimension_numbers<[1], [0], [0], [1], [0, 0, 1, 1], [], []>} : vector<8x8xbf16>, vector<8x16xbf16>, vector<8x16xf32> -> vector<8x16xf32>
    %91 = tpu.concatenate %67, %90 in 1 : vector<8x16xf32>, vector<8x16xf32> -> vector<8x32xf32>
    %92 = vector.shape_cast %64 : vector<8x8xf32> to vector<8x8x1xf32>
    %93 = vector.shape_cast %92 : vector<8x8x1xf32> to vector<8x8x1xf32>
    %94 = vector.broadcast %93 : vector<8x8x1xf32> to vector<8x8x16xf32>
    %95 = vector.shape_cast %87 : vector<8x8xf32> to vector<8x8x1xf32>
    %96 = vector.shape_cast %95 : vector<8x8x1xf32> to vector<8x8x1xf32>
    %97 = vector.broadcast %96 : vector<8x8x1xf32> to vector<8x8x16xf32>
    %98 = tpu.concatenate %94, %97 in 2 : vector<8x8x16xf32>, vector<8x8x16xf32> -> vector<8x8x32xf32>
    %99 = arith.mulf %98, %38 : vector<8x8x32xf32>
    %cst_46 = arith.constant dense<0.000000e+00> : vector<8x32xf32>
    %100 = vector.multi_reduction <add>, %99, %cst_46 [1] : vector<8x8x32xf32> to vector<8x32xf32>
    %101 = arith.addf %91, %100 : vector<8x32xf32>
    %102 = vector.extract_strided_slice %23 {offsets = [8, 0], sizes = [8, 32], strides = [1, 1]} : vector<16x96xf32> to vector<8x32xf32>
    %103 = vector.extract_strided_slice %23 {offsets = [8, 32], sizes = [8, 32], strides = [1, 1]} : vector<16x96xf32> to vector<8x32xf32>
    %c1 = arith.constant 1 : index
    %c0_47 = arith.constant 0 : index
    %c0_48 = arith.constant 0 : index
    %104 = vector.load %arg3[%c1, %c0_47, %c0_48] : memref<2x8x32xf32, #tpu.memory_space<vmem>>, vector<1x8x32xf32>
    %105 = vector.shape_cast %104 : vector<1x8x32xf32> to vector<8x32xf32>
    %106 = arith.addf %103, %105 : vector<8x32xf32>
    %107 = vector.extract_strided_slice %23 {offsets = [8, 64], sizes = [8, 32], strides = [1, 1]} : vector<16x96xf32> to vector<8x32xf32>
    %c1_49 = arith.constant 1 : index
    %c0_50 = arith.constant 0 : index
    %c0_51 = arith.constant 0 : index
    %108 = vector.load %arg4[%c1_49, %c0_50, %c0_51] : memref<2x8x32xf32, #tpu.memory_space<vmem>>, vector<1x8x32xf32>
    %109 = vector.shape_cast %108 : vector<1x8x32xf32> to vector<8x32xf32>
    %110 = arith.addf %107, %109 : vector<8x32xf32>
    %c1_52 = arith.constant 1 : index
    %c0_53 = arith.constant 0 : index
    %c0_54 = arith.constant 0 : index
    %111 = vector.load %arg2[%c1_52, %c0_53, %c0_54] : memref<2x8x8xf32, #tpu.memory_space<vmem>>, vector<1x8x8xf32>
    %112 = vector.shape_cast %111 : vector<1x8x8xf32> to vector<8x8xf32>
    %c1_55 = arith.constant 1 : index
    %c0_56 = arith.constant 0 : index
    %c0_57 = arith.constant 0 : index
    %c0_58 = arith.constant 0 : index
    %113 = vector.load %arg5[%c1_55, %c0_56, %c0_57, %c0_58] : memref<2x8x8x32xf32, #tpu.memory_space<vmem>>, vector<1x8x8x32xf32>
    %114 = vector.shape_cast %113 : vector<1x8x8x32xf32> to vector<8x8x32xf32>
    %c1_59 = arith.constant 1 : index
    %c0_60 = arith.constant 0 : index
    %c0_61 = arith.constant 0 : index
    %c0_62 = arith.constant 0 : index
    %115 = vector.load %arg6[%c1_59, %c0_60, %c0_61, %c0_62] : memref<2x8x8x32xf32, #tpu.memory_space<vmem>>, vector<1x8x8x32xf32>
    %116 = vector.shape_cast %115 : vector<1x8x8x32xf32> to vector<8x8x32xf32>
    %117 = arith.truncf %102 : vector<8x32xf32> to vector<8x32xbf16>
    %118 = arith.truncf %106 : vector<8x32xf32> to vector<8x32xbf16>
    %119 = arith.truncf %110 : vector<8x32xf32> to vector<8x32xbf16>
    %120 = vector.shape_cast %102 : vector<8x32xf32> to vector<8x1x32xf32>
    %121 = vector.broadcast %120 : vector<8x1x32xf32> to vector<8x8x32xf32>
    %122 = arith.mulf %114, %121 : vector<8x8x32xf32>
    %123 = vector.extract_strided_slice %117 {offsets = [0, 0], sizes = [8, 16], strides = [1, 1]} : vector<8x32xbf16> to vector<8x16xbf16>
    %124 = vector.extract_strided_slice %118 {offsets = [0, 0], sizes = [8, 16], strides = [1, 1]} : vector<8x32xbf16> to vector<8x16xbf16>
    %125 = tpu.transpose %124, [1, 0] : vector<8x16xbf16> -> vector<16x8xbf16>
    %cst_63 = arith.constant dense<0.000000e+00> : vector<8x8xf32>
    %126 = tpu.matmul %123, %125, %cst_63 {dimension_numbers = #tpu.dot_dimension_numbers<[1], [0], [0], [1], [0, 0, 1, 1], [], []>} : vector<8x16xbf16>, vector<16x8xbf16>, vector<8x8xf32> -> vector<8x8xf32>
    %127 = vector.extract_strided_slice %122 {offsets = [0, 0, 0], sizes = [8, 8, 16], strides = [1, 1, 1]} : vector<8x8x32xf32> to vector<8x8x16xf32>
    %cst_64 = arith.constant dense<0.000000e+00> : vector<8x8xf32>
    %128 = vector.multi_reduction <add>, %127, %cst_64 [2] : vector<8x8x16xf32> to vector<8x8xf32>
    %129 = arith.addf %126, %128 : vector<8x8xf32>
    %cst_65 = arith.constant 2.500000e-01 : f32
    %130 = vector.broadcast %cst_65 : f32 to vector<8x8xf32>
    %131 = arith.mulf %129, %130 : vector<8x8xf32>
    %132 = arith.addf %131, %112 : vector<8x8xf32>
    %cst_66 = arith.constant dense<0xFF800000> : vector<8xf32>
    %133 = vector.multi_reduction <maximumf>, %132, %cst_66 [1] : vector<8x8xf32> to vector<8xf32>
    %134 = vector.shape_cast %133 : vector<8xf32> to vector<8x1xf32>
    %135 = vector.broadcast %134 : vector<8x1xf32> to vector<8x8xf32>
    %136 = arith.subf %132, %135 : vector<8x8xf32>
    %137 = math.exp %136 : vector<8x8xf32>
    %cst_67 = arith.constant dense<0.000000e+00> : vector<8xf32>
    %138 = vector.multi_reduction <add>, %137, %cst_67 [1] : vector<8x8xf32> to vector<8xf32>
    %139 = vector.shape_cast %138 : vector<8xf32> to vector<8x1xf32>
    %140 = tpu.reciprocal %139 {approx = true} : vector<8x1xf32> -> vector<8x1xf32>
    %141 = vector.broadcast %140 : vector<8x1xf32> to vector<8x8xf32>
    %142 = arith.mulf %137, %141 : vector<8x8xf32>
    %143 = arith.truncf %142 : vector<8x8xf32> to vector<8x8xbf16>
    %144 = vector.extract_strided_slice %119 {offsets = [0, 0], sizes = [8, 16], strides = [1, 1]} : vector<8x32xbf16> to vector<8x16xbf16>
    %cst_68 = arith.constant dense<0.000000e+00> : vector<8x16xf32>
    %145 = tpu.matmul %143, %144, %cst_68 {dimension_numbers = #tpu.dot_dimension_numbers<[1], [0], [0], [1], [0, 0, 1, 1], [], []>} : vector<8x8xbf16>, vector<8x16xbf16>, vector<8x16xf32> -> vector<8x16xf32>
    %146 = vector.extract_strided_slice %117 {offsets = [0, 16], sizes = [8, 16], strides = [1, 1]} : vector<8x32xbf16> to vector<8x16xbf16>
    %147 = vector.extract_strided_slice %118 {offsets = [0, 16], sizes = [8, 16], strides = [1, 1]} : vector<8x32xbf16> to vector<8x16xbf16>
    %148 = tpu.transpose %147, [1, 0] : vector<8x16xbf16> -> vector<16x8xbf16>
    %cst_69 = arith.constant dense<0.000000e+00> : vector<8x8xf32>
    %149 = tpu.matmul %146, %148, %cst_69 {dimension_numbers = #tpu.dot_dimension_numbers<[1], [0], [0], [1], [0, 0, 1, 1], [], []>} : vector<8x16xbf16>, vector<16x8xbf16>, vector<8x8xf32> -> vector<8x8xf32>
    %150 = vector.extract_strided_slice %122 {offsets = [0, 0, 16], sizes = [8, 8, 16], strides = [1, 1, 1]} : vector<8x8x32xf32> to vector<8x8x16xf32>
    %cst_70 = arith.constant dense<0.000000e+00> : vector<8x8xf32>
    %151 = vector.multi_reduction <add>, %150, %cst_70 [2] : vector<8x8x16xf32> to vector<8x8xf32>
    %152 = arith.addf %149, %151 : vector<8x8xf32>
    %cst_71 = arith.constant 2.500000e-01 : f32
    %153 = vector.broadcast %cst_71 : f32 to vector<8x8xf32>
    %154 = arith.mulf %152, %153 : vector<8x8xf32>
    %155 = arith.addf %154, %112 : vector<8x8xf32>
    %cst_72 = arith.constant dense<0xFF800000> : vector<8xf32>
    %156 = vector.multi_reduction <maximumf>, %155, %cst_72 [1] : vector<8x8xf32> to vector<8xf32>
    %157 = vector.shape_cast %156 : vector<8xf32> to vector<8x1xf32>
    %158 = vector.broadcast %157 : vector<8x1xf32> to vector<8x8xf32>
    %159 = arith.subf %155, %158 : vector<8x8xf32>
    %160 = math.exp %159 : vector<8x8xf32>
    %cst_73 = arith.constant dense<0.000000e+00> : vector<8xf32>
    %161 = vector.multi_reduction <add>, %160, %cst_73 [1] : vector<8x8xf32> to vector<8xf32>
    %162 = vector.shape_cast %161 : vector<8xf32> to vector<8x1xf32>
    %163 = tpu.reciprocal %162 {approx = true} : vector<8x1xf32> -> vector<8x1xf32>
    %164 = vector.broadcast %163 : vector<8x1xf32> to vector<8x8xf32>
    %165 = arith.mulf %160, %164 : vector<8x8xf32>
    %166 = arith.truncf %165 : vector<8x8xf32> to vector<8x8xbf16>
    %167 = vector.extract_strided_slice %119 {offsets = [0, 16], sizes = [8, 16], strides = [1, 1]} : vector<8x32xbf16> to vector<8x16xbf16>
    %cst_74 = arith.constant dense<0.000000e+00> : vector<8x16xf32>
    %168 = tpu.matmul %166, %167, %cst_74 {dimension_numbers = #tpu.dot_dimension_numbers<[1], [0], [0], [1], [0, 0, 1, 1], [], []>} : vector<8x8xbf16>, vector<8x16xbf16>, vector<8x16xf32> -> vector<8x16xf32>
    %169 = tpu.concatenate %145, %168 in 1 : vector<8x16xf32>, vector<8x16xf32> -> vector<8x32xf32>
    %170 = vector.shape_cast %142 : vector<8x8xf32> to vector<8x8x1xf32>
    %171 = vector.shape_cast %170 : vector<8x8x1xf32> to vector<8x8x1xf32>
    %172 = vector.broadcast %171 : vector<8x8x1xf32> to vector<8x8x16xf32>
    %173 = vector.shape_cast %165 : vector<8x8xf32> to vector<8x8x1xf32>
    %174 = vector.shape_cast %173 : vector<8x8x1xf32> to vector<8x8x1xf32>
    %175 = vector.broadcast %174 : vector<8x8x1xf32> to vector<8x8x16xf32>
    %176 = tpu.concatenate %172, %175 in 2 : vector<8x8x16xf32>, vector<8x8x16xf32> -> vector<8x8x32xf32>
    %177 = arith.mulf %176, %116 : vector<8x8x32xf32>
    %cst_75 = arith.constant dense<0.000000e+00> : vector<8x32xf32>
    %178 = vector.multi_reduction <add>, %177, %cst_75 [1] : vector<8x8x32xf32> to vector<8x32xf32>
    %179 = arith.addf %169, %178 : vector<8x32xf32>
    %180 = tpu.concatenate %101, %179 in 0 : vector<8x32xf32>, vector<8x32xf32> -> vector<16x32xf32>
    %181 = arith.truncf %180 : vector<16x32xf32> to vector<16x32xbf16>
    %cst_76 = arith.constant dense<0.000000e+00> : vector<16x32xf32>
    %182 = tpu.matmul %181, %5, %cst_76 {dimension_numbers = #tpu.dot_dimension_numbers<[1], [0], [0], [1], [0, 0, 1, 1], [], []>} : vector<16x32xbf16>, vector<32x32xbf16>, vector<16x32xf32> -> vector<16x32xf32>
    %183 = vector.broadcast %13 : vector<1x32xf32> to vector<16x32xf32>
    %184 = arith.addf %182, %183 : vector<16x32xf32>
    %185 = arith.addf %184, %1 : vector<16x32xf32>
    %cst_77 = arith.constant dense<0.000000e+00> : vector<16xf32>
    %186 = vector.multi_reduction <add>, %185, %cst_77 [1] : vector<16x32xf32> to vector<16xf32>
    %187 = vector.shape_cast %186 : vector<16xf32> to vector<16x1xf32>
    %cst_78 = arith.constant 3.200000e+01 : f32
    %188 = vector.broadcast %cst_78 : f32 to vector<16x1xf32>
    %189 = arith.divf %187, %188 : vector<16x1xf32>
    %190 = vector.broadcast %189 : vector<16x1xf32> to vector<16x32xf32>
    %191 = arith.subf %185, %190 : vector<16x32xf32>
    %192 = arith.mulf %191, %191 : vector<16x32xf32>
    %cst_79 = arith.constant dense<0.000000e+00> : vector<16xf32>
    %193 = vector.multi_reduction <add>, %192, %cst_79 [1] : vector<16x32xf32> to vector<16xf32>
    %194 = vector.shape_cast %193 : vector<16xf32> to vector<16x1xf32>
    %cst_80 = arith.constant 3.200000e+01 : f32
    %195 = vector.broadcast %cst_80 : f32 to vector<16x1xf32>
    %196 = arith.divf %194, %195 : vector<16x1xf32>
    %197 = vector.broadcast %189 : vector<16x1xf32> to vector<16x32xf32>
    %198 = arith.subf %185, %197 : vector<16x32xf32>
    %cst_81 = arith.constant 9.99999996E-13 : f32
    %199 = vector.broadcast %cst_81 : f32 to vector<16x1xf32>
    %200 = arith.addf %196, %199 : vector<16x1xf32>
    %201 = math.rsqrt %200 : vector<16x1xf32>
    %202 = vector.broadcast %201 : vector<16x1xf32> to vector<16x32xf32>
    %203 = arith.mulf %198, %202 : vector<16x32xf32>
    %204 = vector.broadcast %14 : vector<1x32xf32> to vector<16x32xf32>
    %205 = arith.mulf %203, %204 : vector<16x32xf32>
    %206 = vector.broadcast %15 : vector<1x32xf32> to vector<16x32xf32>
    %207 = arith.addf %205, %206 : vector<16x32xf32>
    %208 = arith.truncf %207 : vector<16x32xf32> to vector<16x32xbf16>
    %cst_82 = arith.constant dense<0.000000e+00> : vector<16x64xf32>
    %209 = tpu.matmul %208, %7, %cst_82 {dimension_numbers = #tpu.dot_dimension_numbers<[1], [0], [0], [1], [0, 0, 1, 1], [], []>} : vector<16x32xbf16>, vector<32x64xbf16>, vector<16x64xf32> -> vector<16x64xf32>
    %210 = vector.broadcast %16 : vector<1x64xf32> to vector<16x64xf32>
    %211 = arith.addf %209, %210 : vector<16x64xf32>
    %cst_83 = arith.constant 5.000000e-01 : f32
    %212 = vector.broadcast %cst_83 : f32 to vector<16x64xf32>
    %213 = arith.mulf %211, %212 : vector<16x64xf32>
    %cst_84 = arith.constant 1.41421354 : f32
    %214 = vector.broadcast %cst_84 : f32 to vector<16x64xf32>
    %215 = arith.divf %211, %214 : vector<16x64xf32>
    %216 = math.erf %215 : vector<16x64xf32>
    %cst_85 = arith.constant 1.000000e+00 : f32
    %217 = vector.broadcast %cst_85 : f32 to vector<16x64xf32>
    %218 = arith.addf %217, %216 : vector<16x64xf32>
    %219 = arith.mulf %213, %218 : vector<16x64xf32>
    %220 = arith.truncf %219 : vector<16x64xf32> to vector<16x64xbf16>
    %cst_86 = arith.constant dense<0.000000e+00> : vector<16x32xf32>
    %221 = tpu.matmul %220, %9, %cst_86 {dimension_numbers = #tpu.dot_dimension_numbers<[1], [0], [0], [1], [0, 0, 1, 1], [], []>} : vector<16x64xbf16>, vector<64x32xbf16>, vector<16x32xf32> -> vector<16x32xf32>
    %222 = vector.broadcast %17 : vector<1x32xf32> to vector<16x32xf32>
    %223 = arith.addf %221, %222 : vector<16x32xf32>
    %224 = arith.addf %223, %207 : vector<16x32xf32>
    %cst_87 = arith.constant dense<0.000000e+00> : vector<16xf32>
    %225 = vector.multi_reduction <add>, %224, %cst_87 [1] : vector<16x32xf32> to vector<16xf32>
    %226 = vector.shape_cast %225 : vector<16xf32> to vector<16x1xf32>
    %cst_88 = arith.constant 3.200000e+01 : f32
    %227 = vector.broadcast %cst_88 : f32 to vector<16x1xf32>
    %228 = arith.divf %226, %227 : vector<16x1xf32>
    %229 = vector.broadcast %228 : vector<16x1xf32> to vector<16x32xf32>
    %230 = arith.subf %224, %229 : vector<16x32xf32>
    %231 = arith.mulf %230, %230 : vector<16x32xf32>
    %cst_89 = arith.constant dense<0.000000e+00> : vector<16xf32>
    %232 = vector.multi_reduction <add>, %231, %cst_89 [1] : vector<16x32xf32> to vector<16xf32>
    %233 = vector.shape_cast %232 : vector<16xf32> to vector<16x1xf32>
    %cst_90 = arith.constant 3.200000e+01 : f32
    %234 = vector.broadcast %cst_90 : f32 to vector<16x1xf32>
    %235 = arith.divf %233, %234 : vector<16x1xf32>
    %236 = vector.broadcast %228 : vector<16x1xf32> to vector<16x32xf32>
    %237 = arith.subf %224, %236 : vector<16x32xf32>
    %cst_91 = arith.constant 9.99999996E-13 : f32
    %238 = vector.broadcast %cst_91 : f32 to vector<16x1xf32>
    %239 = arith.addf %235, %238 : vector<16x1xf32>
    %240 = math.rsqrt %239 : vector<16x1xf32>
    %241 = vector.broadcast %240 : vector<16x1xf32> to vector<16x32xf32>
    %242 = arith.mulf %237, %241 : vector<16x32xf32>
    %243 = vector.broadcast %18 : vector<1x32xf32> to vector<16x32xf32>
    %244 = arith.mulf %242, %243 : vector<16x32xf32>
    %245 = vector.broadcast %19 : vector<1x32xf32> to vector<16x32xf32>
    %246 = arith.addf %244, %245 : vector<16x32xf32>
    %247 = vector.shape_cast %246 : vector<16x32xf32> to vector<2x8x32xf32>
    %c0_92 = arith.constant 0 : index
    %c0_93 = arith.constant 0 : index
    %c0_94 = arith.constant 0 : index
    %c0_95 = arith.constant 0 : index
    %248 = vector.load %arg12[%c0_92, %c0_93, %c0_94, %c0_95] : memref<2x2x8x32xf32, #tpu.memory_space<vmem>>, vector<1x2x8x32xf32>
    %249 = vector.shape_cast %248 : vector<1x2x8x32xf32> to vector<2x8x32xf32>
    %250 = vector.shape_cast %247 : vector<2x8x32xf32> to vector<1x2x8x32xf32>
    tpu.vector_store %arg12[%c0_92, %c0_93, %c0_94, %c0_95], %250 {strides = array<i32>} : memref<2x2x8x32xf32, #tpu.memory_space<vmem>>, vector<1x2x8x32xf32>,
    %c1_96 = arith.constant 1 : index
    %c0_97 = arith.constant 0 : index
    %c0_98 = arith.constant 0 : index
    %251 = vector.load %arg7[%c1_96, %c0_97, %c0_98] : memref<2x32x96xbf16, #tpu.memory_space<vmem>>, vector<1x32x96xbf16>
    %252 = vector.shape_cast %251 : vector<1x32x96xbf16> to vector<32x96xbf16>
    %c1_99 = arith.constant 1 : index
    %c0_100 = arith.constant 0 : index
    %c0_101 = arith.constant 0 : index
    %253 = vector.load %arg8[%c1_99, %c0_100, %c0_101] : memref<2x32x32xbf16, #tpu.memory_space<vmem>>, vector<1x32x32xbf16>
    %254 = vector.shape_cast %253 : vector<1x32x32xbf16> to vector<32x32xbf16>
    %c1_102 = arith.constant 1 : index
    %c0_103 = arith.constant 0 : index
    %c0_104 = arith.constant 0 : index
    %255 = vector.load %arg9[%c1_102, %c0_103, %c0_104] : memref<2x32x64xbf16, #tpu.memory_space<vmem>>, vector<1x32x64xbf16>
    %256 = vector.shape_cast %255 : vector<1x32x64xbf16> to vector<32x64xbf16>
    %c1_105 = arith.constant 1 : index
    %c0_106 = arith.constant 0 : index
    %c0_107 = arith.constant 0 : index
    %257 = vector.load %arg10[%c1_105, %c0_106, %c0_107] : memref<2x64x32xbf16, #tpu.memory_space<vmem>>, vector<1x64x32xbf16>
    %258 = vector.shape_cast %257 : vector<1x64x32xbf16> to vector<64x32xbf16>
    %c1_108 = arith.constant 1 : index
    %c0_109 = arith.constant 0 : index
    %c0_110 = arith.constant 0 : index
    %259 = vector.load %arg11[%c1_108, %c0_109, %c0_110] : memref<2x8x128xf32, #tpu.memory_space<vmem>>, vector<1x8x128xf32>
    %260 = vector.shape_cast %259 : vector<1x8x128xf32> to vector<8x128xf32>
    %261 = vector.extract_strided_slice %260 {offsets = [0, 0], sizes = [1, 96], strides = [1, 1]} : vector<8x128xf32> to vector<1x96xf32>
    %262 = vector.extract_strided_slice %260 {offsets = [1, 0], sizes = [1, 32], strides = [1, 1]} : vector<8x128xf32> to vector<1x32xf32>
    %263 = vector.extract_strided_slice %260 {offsets = [2, 0], sizes = [1, 32], strides = [1, 1]} : vector<8x128xf32> to vector<1x32xf32>
    %264 = vector.extract_strided_slice %260 {offsets = [3, 0], sizes = [1, 32], strides = [1, 1]} : vector<8x128xf32> to vector<1x32xf32>
    %265 = vector.extract_strided_slice %260 {offsets = [4, 0], sizes = [1, 64], strides = [1, 1]} : vector<8x128xf32> to vector<1x64xf32>
    %266 = vector.extract_strided_slice %260 {offsets = [5, 0], sizes = [1, 32], strides = [1, 1]} : vector<8x128xf32> to vector<1x32xf32>
    %267 = vector.extract_strided_slice %260 {offsets = [6, 0], sizes = [1, 32], strides = [1, 1]} : vector<8x128xf32> to vector<1x32xf32>
    %268 = vector.extract_strided_slice %260 {offsets = [7, 0], sizes = [1, 32], strides = [1, 1]} : vector<8x128xf32> to vector<1x32xf32>
    %269 = arith.truncf %246 : vector<16x32xf32> to vector<16x32xbf16>
    %cst_111 = arith.constant dense<0.000000e+00> : vector<16x96xf32>
    %270 = tpu.matmul %269, %252, %cst_111 {dimension_numbers = #tpu.dot_dimension_numbers<[1], [0], [0], [1], [0, 0, 1, 1], [], []>} : vector<16x32xbf16>, vector<32x96xbf16>, vector<16x96xf32> -> vector<16x96xf32>
    %271 = vector.broadcast %261 : vector<1x96xf32> to vector<16x96xf32>
    %272 = arith.addf %270, %271 : vector<16x96xf32>
    %273 = vector.extract_strided_slice %272 {offsets = [0, 0], sizes = [8, 32], strides = [1, 1]} : vector<16x96xf32> to vector<8x32xf32>
    %274 = vector.extract_strided_slice %272 {offsets = [0, 32], sizes = [8, 32], strides = [1, 1]} : vector<16x96xf32> to vector<8x32xf32>
    %c0_112 = arith.constant 0 : index
    %c0_113 = arith.constant 0 : index
    %c0_114 = arith.constant 0 : index
    %275 = vector.load %arg3[%c0_112, %c0_113, %c0_114] : memref<2x8x32xf32, #tpu.memory_space<vmem>>, vector<1x8x32xf32>
    %276 = vector.shape_cast %275 : vector<1x8x32xf32> to vector<8x32xf32>
    %277 = arith.addf %274, %276 : vector<8x32xf32>
    %278 = vector.extract_strided_slice %272 {offsets = [0, 64], sizes = [8, 32], strides = [1, 1]} : vector<16x96xf32> to vector<8x32xf32>
    %c0_115 = arith.constant 0 : index
    %c0_116 = arith.constant 0 : index
    %c0_117 = arith.constant 0 : index
    %279 = vector.load %arg4[%c0_115, %c0_116, %c0_117] : memref<2x8x32xf32, #tpu.memory_space<vmem>>, vector<1x8x32xf32>
    %280 = vector.shape_cast %279 : vector<1x8x32xf32> to vector<8x32xf32>
    %281 = arith.addf %278, %280 : vector<8x32xf32>
    %c0_118 = arith.constant 0 : index
    %c0_119 = arith.constant 0 : index
    %c0_120 = arith.constant 0 : index
    %282 = vector.load %arg2[%c0_118, %c0_119, %c0_120] : memref<2x8x8xf32, #tpu.memory_space<vmem>>, vector<1x8x8xf32>
    %283 = vector.shape_cast %282 : vector<1x8x8xf32> to vector<8x8xf32>
    %c0_121 = arith.constant 0 : index
    %c0_122 = arith.constant 0 : index
    %c0_123 = arith.constant 0 : index
    %c0_124 = arith.constant 0 : index
    %284 = vector.load %arg5[%c0_121, %c0_122, %c0_123, %c0_124] : memref<2x8x8x32xf32, #tpu.memory_space<vmem>>, vector<1x8x8x32xf32>
    %285 = vector.shape_cast %284 : vector<1x8x8x32xf32> to vector<8x8x32xf32>
    %c0_125 = arith.constant 0 : index
    %c0_126 = arith.constant 0 : index
    %c0_127 = arith.constant 0 : index
    %c0_128 = arith.constant 0 : index
    %286 = vector.load %arg6[%c0_125, %c0_126, %c0_127, %c0_128] : memref<2x8x8x32xf32, #tpu.memory_space<vmem>>, vector<1x8x8x32xf32>
    %287 = vector.shape_cast %286 : vector<1x8x8x32xf32> to vector<8x8x32xf32>
    %288 = arith.truncf %273 : vector<8x32xf32> to vector<8x32xbf16>
    %289 = arith.truncf %277 : vector<8x32xf32> to vector<8x32xbf16>
    %290 = arith.truncf %281 : vector<8x32xf32> to vector<8x32xbf16>
    %291 = vector.shape_cast %273 : vector<8x32xf32> to vector<8x1x32xf32>
    %292 = vector.broadcast %291 : vector<8x1x32xf32> to vector<8x8x32xf32>
    %293 = arith.mulf %285, %292 : vector<8x8x32xf32>
    %294 = vector.extract_strided_slice %288 {offsets = [0, 0], sizes = [8, 16], strides = [1, 1]} : vector<8x32xbf16> to vector<8x16xbf16>
    %295 = vector.extract_strided_slice %289 {offsets = [0, 0], sizes = [8, 16], strides = [1, 1]} : vector<8x32xbf16> to vector<8x16xbf16>
    %296 = tpu.transpose %295, [1, 0] : vector<8x16xbf16> -> vector<16x8xbf16>
    %cst_129 = arith.constant dense<0.000000e+00> : vector<8x8xf32>
    %297 = tpu.matmul %294, %296, %cst_129 {dimension_numbers = #tpu.dot_dimension_numbers<[1], [0], [0], [1], [0, 0, 1, 1], [], []>} : vector<8x16xbf16>, vector<16x8xbf16>, vector<8x8xf32> -> vector<8x8xf32>
    %298 = vector.extract_strided_slice %293 {offsets = [0, 0, 0], sizes = [8, 8, 16], strides = [1, 1, 1]} : vector<8x8x32xf32> to vector<8x8x16xf32>
    %cst_130 = arith.constant dense<0.000000e+00> : vector<8x8xf32>
    %299 = vector.multi_reduction <add>, %298, %cst_130 [2] : vector<8x8x16xf32> to vector<8x8xf32>
    %300 = arith.addf %297, %299 : vector<8x8xf32>
    %cst_131 = arith.constant 2.500000e-01 : f32
    %301 = vector.broadcast %cst_131 : f32 to vector<8x8xf32>
    %302 = arith.mulf %300, %301 : vector<8x8xf32>
    %303 = arith.addf %302, %283 : vector<8x8xf32>
    %cst_132 = arith.constant dense<0xFF800000> : vector<8xf32>
    %304 = vector.multi_reduction <maximumf>, %303, %cst_132 [1] : vector<8x8xf32> to vector<8xf32>
    %305 = vector.shape_cast %304 : vector<8xf32> to vector<8x1xf32>
    %306 = vector.broadcast %305 : vector<8x1xf32> to vector<8x8xf32>
    %307 = arith.subf %303, %306 : vector<8x8xf32>
    %308 = math.exp %307 : vector<8x8xf32>
    %cst_133 = arith.constant dense<0.000000e+00> : vector<8xf32>
    %309 = vector.multi_reduction <add>, %308, %cst_133 [1] : vector<8x8xf32> to vector<8xf32>
    %310 = vector.shape_cast %309 : vector<8xf32> to vector<8x1xf32>
    %311 = tpu.reciprocal %310 {approx = true} : vector<8x1xf32> -> vector<8x1xf32>
    %312 = vector.broadcast %311 : vector<8x1xf32> to vector<8x8xf32>
    %313 = arith.mulf %308, %312 : vector<8x8xf32>
    %314 = arith.truncf %313 : vector<8x8xf32> to vector<8x8xbf16>
    %315 = vector.extract_strided_slice %290 {offsets = [0, 0], sizes = [8, 16], strides = [1, 1]} : vector<8x32xbf16> to vector<8x16xbf16>
    %cst_134 = arith.constant dense<0.000000e+00> : vector<8x16xf32>
    %316 = tpu.matmul %314, %315, %cst_134 {dimension_numbers = #tpu.dot_dimension_numbers<[1], [0], [0], [1], [0, 0, 1, 1], [], []>} : vector<8x8xbf16>, vector<8x16xbf16>, vector<8x16xf32> -> vector<8x16xf32>
    %317 = vector.extract_strided_slice %288 {offsets = [0, 16], sizes = [8, 16], strides = [1, 1]} : vector<8x32xbf16> to vector<8x16xbf16>
    %318 = vector.extract_strided_slice %289 {offsets = [0, 16], sizes = [8, 16], strides = [1, 1]} : vector<8x32xbf16> to vector<8x16xbf16>
    %319 = tpu.transpose %318, [1, 0] : vector<8x16xbf16> -> vector<16x8xbf16>
    %cst_135 = arith.constant dense<0.000000e+00> : vector<8x8xf32>
    %320 = tpu.matmul %317, %319, %cst_135 {dimension_numbers = #tpu.dot_dimension_numbers<[1], [0], [0], [1], [0, 0, 1, 1], [], []>} : vector<8x16xbf16>, vector<16x8xbf16>, vector<8x8xf32> -> vector<8x8xf32>
    %321 = vector.extract_strided_slice %293 {offsets = [0, 0, 16], sizes = [8, 8, 16], strides = [1, 1, 1]} : vector<8x8x32xf32> to vector<8x8x16xf32>
    %cst_136 = arith.constant dense<0.000000e+00> : vector<8x8xf32>
    %322 = vector.multi_reduction <add>, %321, %cst_136 [2] : vector<8x8x16xf32> to vector<8x8xf32>
    %323 = arith.addf %320, %322 : vector<8x8xf32>
    %cst_137 = arith.constant 2.500000e-01 : f32
    %324 = vector.broadcast %cst_137 : f32 to vector<8x8xf32>
    %325 = arith.mulf %323, %324 : vector<8x8xf32>
    %326 = arith.addf %325, %283 : vector<8x8xf32>
    %cst_138 = arith.constant dense<0xFF800000> : vector<8xf32>
    %327 = vector.multi_reduction <maximumf>, %326, %cst_138 [1] : vector<8x8xf32> to vector<8xf32>
    %328 = vector.shape_cast %327 : vector<8xf32> to vector<8x1xf32>
    %329 = vector.broadcast %328 : vector<8x1xf32> to vector<8x8xf32>
    %330 = arith.subf %326, %329 : vector<8x8xf32>
    %331 = math.exp %330 : vector<8x8xf32>
    %cst_139 = arith.constant dense<0.000000e+00> : vector<8xf32>
    %332 = vector.multi_reduction <add>, %331, %cst_139 [1] : vector<8x8xf32> to vector<8xf32>
    %333 = vector.shape_cast %332 : vector<8xf32> to vector<8x1xf32>
    %334 = tpu.reciprocal %333 {approx = true} : vector<8x1xf32> -> vector<8x1xf32>
    %335 = vector.broadcast %334 : vector<8x1xf32> to vector<8x8xf32>
    %336 = arith.mulf %331, %335 : vector<8x8xf32>
    %337 = arith.truncf %336 : vector<8x8xf32> to vector<8x8xbf16>
    %338 = vector.extract_strided_slice %290 {offsets = [0, 16], sizes = [8, 16], strides = [1, 1]} : vector<8x32xbf16> to vector<8x16xbf16>
    %cst_140 = arith.constant dense<0.000000e+00> : vector<8x16xf32>
    %339 = tpu.matmul %337, %338, %cst_140 {dimension_numbers = #tpu.dot_dimension_numbers<[1], [0], [0], [1], [0, 0, 1, 1], [], []>} : vector<8x8xbf16>, vector<8x16xbf16>, vector<8x16xf32> -> vector<8x16xf32>
    %340 = tpu.concatenate %316, %339 in 1 : vector<8x16xf32>, vector<8x16xf32> -> vector<8x32xf32>
    %341 = vector.shape_cast %313 : vector<8x8xf32> to vector<8x8x1xf32>
    %342 = vector.shape_cast %341 : vector<8x8x1xf32> to vector<8x8x1xf32>
    %343 = vector.broadcast %342 : vector<8x8x1xf32> to vector<8x8x16xf32>
    %344 = vector.shape_cast %336 : vector<8x8xf32> to vector<8x8x1xf32>
    %345 = vector.shape_cast %344 : vector<8x8x1xf32> to vector<8x8x1xf32>
    %346 = vector.broadcast %345 : vector<8x8x1xf32> to vector<8x8x16xf32>
    %347 = tpu.concatenate %343, %346 in 2 : vector<8x8x16xf32>, vector<8x8x16xf32> -> vector<8x8x32xf32>
    %348 = arith.mulf %347, %287 : vector<8x8x32xf32>
    %cst_141 = arith.constant dense<0.000000e+00> : vector<8x32xf32>
    %349 = vector.multi_reduction <add>, %348, %cst_141 [1] : vector<8x8x32xf32> to vector<8x32xf32>
    %350 = arith.addf %340, %349 : vector<8x32xf32>
    %351 = vector.extract_strided_slice %272 {offsets = [8, 0], sizes = [8, 32], strides = [1, 1]} : vector<16x96xf32> to vector<8x32xf32>
    %352 = vector.extract_strided_slice %272 {offsets = [8, 32], sizes = [8, 32], strides = [1, 1]} : vector<16x96xf32> to vector<8x32xf32>
    %c1_142 = arith.constant 1 : index
    %c0_143 = arith.constant 0 : index
    %c0_144 = arith.constant 0 : index
    %353 = vector.load %arg3[%c1_142, %c0_143, %c0_144] : memref<2x8x32xf32, #tpu.memory_space<vmem>>, vector<1x8x32xf32>
    %354 = vector.shape_cast %353 : vector<1x8x32xf32> to vector<8x32xf32>
    %355 = arith.addf %352, %354 : vector<8x32xf32>
    %356 = vector.extract_strided_slice %272 {offsets = [8, 64], sizes = [8, 32], strides = [1, 1]} : vector<16x96xf32> to vector<8x32xf32>
    %c1_145 = arith.constant 1 : index
    %c0_146 = arith.constant 0 : index
    %c0_147 = arith.constant 0 : index
    %357 = vector.load %arg4[%c1_145, %c0_146, %c0_147] : memref<2x8x32xf32, #tpu.memory_space<vmem>>, vector<1x8x32xf32>
    %358 = vector.shape_cast %357 : vector<1x8x32xf32> to vector<8x32xf32>
    %359 = arith.addf %356, %358 : vector<8x32xf32>
    %c1_148 = arith.constant 1 : index
    %c0_149 = arith.constant 0 : index
    %c0_150 = arith.constant 0 : index
    %360 = vector.load %arg2[%c1_148, %c0_149, %c0_150] : memref<2x8x8xf32, #tpu.memory_space<vmem>>, vector<1x8x8xf32>
    %361 = vector.shape_cast %360 : vector<1x8x8xf32> to vector<8x8xf32>
    %c1_151 = arith.constant 1 : index
    %c0_152 = arith.constant 0 : index
    %c0_153 = arith.constant 0 : index
    %c0_154 = arith.constant 0 : index
    %362 = vector.load %arg5[%c1_151, %c0_152, %c0_153, %c0_154] : memref<2x8x8x32xf32, #tpu.memory_space<vmem>>, vector<1x8x8x32xf32>
    %363 = vector.shape_cast %362 : vector<1x8x8x32xf32> to vector<8x8x32xf32>
    %c1_155 = arith.constant 1 : index
    %c0_156 = arith.constant 0 : index
    %c0_157 = arith.constant 0 : index
    %c0_158 = arith.constant 0 : index
    %364 = vector.load %arg6[%c1_155, %c0_156, %c0_157, %c0_158] : memref<2x8x8x32xf32, #tpu.memory_space<vmem>>, vector<1x8x8x32xf32>
    %365 = vector.shape_cast %364 : vector<1x8x8x32xf32> to vector<8x8x32xf32>
    %366 = arith.truncf %351 : vector<8x32xf32> to vector<8x32xbf16>
    %367 = arith.truncf %355 : vector<8x32xf32> to vector<8x32xbf16>
    %368 = arith.truncf %359 : vector<8x32xf32> to vector<8x32xbf16>
    %369 = vector.shape_cast %351 : vector<8x32xf32> to vector<8x1x32xf32>
    %370 = vector.broadcast %369 : vector<8x1x32xf32> to vector<8x8x32xf32>
    %371 = arith.mulf %363, %370 : vector<8x8x32xf32>
    %372 = vector.extract_strided_slice %366 {offsets = [0, 0], sizes = [8, 16], strides = [1, 1]} : vector<8x32xbf16> to vector<8x16xbf16>
    %373 = vector.extract_strided_slice %367 {offsets = [0, 0], sizes = [8, 16], strides = [1, 1]} : vector<8x32xbf16> to vector<8x16xbf16>
    %374 = tpu.transpose %373, [1, 0] : vector<8x16xbf16> -> vector<16x8xbf16>
    %cst_159 = arith.constant dense<0.000000e+00> : vector<8x8xf32>
    %375 = tpu.matmul %372, %374, %cst_159 {dimension_numbers = #tpu.dot_dimension_numbers<[1], [0], [0], [1], [0, 0, 1, 1], [], []>} : vector<8x16xbf16>, vector<16x8xbf16>, vector<8x8xf32> -> vector<8x8xf32>
    %376 = vector.extract_strided_slice %371 {offsets = [0, 0, 0], sizes = [8, 8, 16], strides = [1, 1, 1]} : vector<8x8x32xf32> to vector<8x8x16xf32>
    %cst_160 = arith.constant dense<0.000000e+00> : vector<8x8xf32>
    %377 = vector.multi_reduction <add>, %376, %cst_160 [2] : vector<8x8x16xf32> to vector<8x8xf32>
    %378 = arith.addf %375, %377 : vector<8x8xf32>
    %cst_161 = arith.constant 2.500000e-01 : f32
    %379 = vector.broadcast %cst_161 : f32 to vector<8x8xf32>
    %380 = arith.mulf %378, %379 : vector<8x8xf32>
    %381 = arith.addf %380, %361 : vector<8x8xf32>
    %cst_162 = arith.constant dense<0xFF800000> : vector<8xf32>
    %382 = vector.multi_reduction <maximumf>, %381, %cst_162 [1] : vector<8x8xf32> to vector<8xf32>
    %383 = vector.shape_cast %382 : vector<8xf32> to vector<8x1xf32>
    %384 = vector.broadcast %383 : vector<8x1xf32> to vector<8x8xf32>
    %385 = arith.subf %381, %384 : vector<8x8xf32>
    %386 = math.exp %385 : vector<8x8xf32>
    %cst_163 = arith.constant dense<0.000000e+00> : vector<8xf32>
    %387 = vector.multi_reduction <add>, %386, %cst_163 [1] : vector<8x8xf32> to vector<8xf32>
    %388 = vector.shape_cast %387 : vector<8xf32> to vector<8x1xf32>
    %389 = tpu.reciprocal %388 {approx = true} : vector<8x1xf32> -> vector<8x1xf32>
    %390 = vector.broadcast %389 : vector<8x1xf32> to vector<8x8xf32>
    %391 = arith.mulf %386, %390 : vector<8x8xf32>
    %392 = arith.truncf %391 : vector<8x8xf32> to vector<8x8xbf16>
    %393 = vector.extract_strided_slice %368 {offsets = [0, 0], sizes = [8, 16], strides = [1, 1]} : vector<8x32xbf16> to vector<8x16xbf16>
    %cst_164 = arith.constant dense<0.000000e+00> : vector<8x16xf32>
    %394 = tpu.matmul %392, %393, %cst_164 {dimension_numbers = #tpu.dot_dimension_numbers<[1], [0], [0], [1], [0, 0, 1, 1], [], []>} : vector<8x8xbf16>, vector<8x16xbf16>, vector<8x16xf32> -> vector<8x16xf32>
    %395 = vector.extract_strided_slice %366 {offsets = [0, 16], sizes = [8, 16], strides = [1, 1]} : vector<8x32xbf16> to vector<8x16xbf16>
    %396 = vector.extract_strided_slice %367 {offsets = [0, 16], sizes = [8, 16], strides = [1, 1]} : vector<8x32xbf16> to vector<8x16xbf16>
    %397 = tpu.transpose %396, [1, 0] : vector<8x16xbf16> -> vector<16x8xbf16>
    %cst_165 = arith.constant dense<0.000000e+00> : vector<8x8xf32>
    %398 = tpu.matmul %395, %397, %cst_165 {dimension_numbers = #tpu.dot_dimension_numbers<[1], [0], [0], [1], [0, 0, 1, 1], [], []>} : vector<8x16xbf16>, vector<16x8xbf16>, vector<8x8xf32> -> vector<8x8xf32>
    %399 = vector.extract_strided_slice %371 {offsets = [0, 0, 16], sizes = [8, 8, 16], strides = [1, 1, 1]} : vector<8x8x32xf32> to vector<8x8x16xf32>
    %cst_166 = arith.constant dense<0.000000e+00> : vector<8x8xf32>
    %400 = vector.multi_reduction <add>, %399, %cst_166 [2] : vector<8x8x16xf32> to vector<8x8xf32>
    %401 = arith.addf %398, %400 : vector<8x8xf32>
    %cst_167 = arith.constant 2.500000e-01 : f32
    %402 = vector.broadcast %cst_167 : f32 to vector<8x8xf32>
    %403 = arith.mulf %401, %402 : vector<8x8xf32>
    %404 = arith.addf %403, %361 : vector<8x8xf32>
    %cst_168 = arith.constant dense<0xFF800000> : vector<8xf32>
    %405 = vector.multi_reduction <maximumf>, %404, %cst_168 [1] : vector<8x8xf32> to vector<8xf32>
    %406 = vector.shape_cast %405 : vector<8xf32> to vector<8x1xf32>
    %407 = vector.broadcast %406 : vector<8x1xf32> to vector<8x8xf32>
    %408 = arith.subf %404, %407 : vector<8x8xf32>
    %409 = math.exp %408 : vector<8x8xf32>
    %cst_169 = arith.constant dense<0.000000e+00> : vector<8xf32>
    %410 = vector.multi_reduction <add>, %409, %cst_169 [1] : vector<8x8xf32> to vector<8xf32>
    %411 = vector.shape_cast %410 : vector<8xf32> to vector<8x1xf32>
    %412 = tpu.reciprocal %411 {approx = true} : vector<8x1xf32> -> vector<8x1xf32>
    %413 = vector.broadcast %412 : vector<8x1xf32> to vector<8x8xf32>
    %414 = arith.mulf %409, %413 : vector<8x8xf32>
    %415 = arith.truncf %414 : vector<8x8xf32> to vector<8x8xbf16>
    %416 = vector.extract_strided_slice %368 {offsets = [0, 16], sizes = [8, 16], strides = [1, 1]} : vector<8x32xbf16> to vector<8x16xbf16>
    %cst_170 = arith.constant dense<0.000000e+00> : vector<8x16xf32>
    %417 = tpu.matmul %415, %416, %cst_170 {dimension_numbers = #tpu.dot_dimension_numbers<[1], [0], [0], [1], [0, 0, 1, 1], [], []>} : vector<8x8xbf16>, vector<8x16xbf16>, vector<8x16xf32> -> vector<8x16xf32>
    %418 = tpu.concatenate %394, %417 in 1 : vector<8x16xf32>, vector<8x16xf32> -> vector<8x32xf32>
    %419 = vector.shape_cast %391 : vector<8x8xf32> to vector<8x8x1xf32>
    %420 = vector.shape_cast %419 : vector<8x8x1xf32> to vector<8x8x1xf32>
    %421 = vector.broadcast %420 : vector<8x8x1xf32> to vector<8x8x16xf32>
    %422 = vector.shape_cast %414 : vector<8x8xf32> to vector<8x8x1xf32>
    %423 = vector.shape_cast %422 : vector<8x8x1xf32> to vector<8x8x1xf32>
    %424 = vector.broadcast %423 : vector<8x8x1xf32> to vector<8x8x16xf32>
    %425 = tpu.concatenate %421, %424 in 2 : vector<8x8x16xf32>, vector<8x8x16xf32> -> vector<8x8x32xf32>
    %426 = arith.mulf %425, %365 : vector<8x8x32xf32>
    %cst_171 = arith.constant dense<0.000000e+00> : vector<8x32xf32>
    %427 = vector.multi_reduction <add>, %426, %cst_171 [1] : vector<8x8x32xf32> to vector<8x32xf32>
    %428 = arith.addf %418, %427 : vector<8x32xf32>
    %429 = tpu.concatenate %350, %428 in 0 : vector<8x32xf32>, vector<8x32xf32> -> vector<16x32xf32>
    %430 = arith.truncf %429 : vector<16x32xf32> to vector<16x32xbf16>
    %cst_172 = arith.constant dense<0.000000e+00> : vector<16x32xf32>
    %431 = tpu.matmul %430, %254, %cst_172 {dimension_numbers = #tpu.dot_dimension_numbers<[1], [0], [0], [1], [0, 0, 1, 1], [], []>} : vector<16x32xbf16>, vector<32x32xbf16>, vector<16x32xf32> -> vector<16x32xf32>
    %432 = vector.broadcast %262 : vector<1x32xf32> to vector<16x32xf32>
    %433 = arith.addf %431, %432 : vector<16x32xf32>
    %434 = arith.addf %433, %246 : vector<16x32xf32>
    %cst_173 = arith.constant dense<0.000000e+00> : vector<16xf32>
    %435 = vector.multi_reduction <add>, %434, %cst_173 [1] : vector<16x32xf32> to vector<16xf32>
    %436 = vector.shape_cast %435 : vector<16xf32> to vector<16x1xf32>
    %cst_174 = arith.constant 3.200000e+01 : f32
    %437 = vector.broadcast %cst_174 : f32 to vector<16x1xf32>
    %438 = arith.divf %436, %437 : vector<16x1xf32>
    %439 = vector.broadcast %438 : vector<16x1xf32> to vector<16x32xf32>
    %440 = arith.subf %434, %439 : vector<16x32xf32>
    %441 = arith.mulf %440, %440 : vector<16x32xf32>
    %cst_175 = arith.constant dense<0.000000e+00> : vector<16xf32>
    %442 = vector.multi_reduction <add>, %441, %cst_175 [1] : vector<16x32xf32> to vector<16xf32>
    %443 = vector.shape_cast %442 : vector<16xf32> to vector<16x1xf32>
    %cst_176 = arith.constant 3.200000e+01 : f32
    %444 = vector.broadcast %cst_176 : f32 to vector<16x1xf32>
    %445 = arith.divf %443, %444 : vector<16x1xf32>
    %446 = vector.broadcast %438 : vector<16x1xf32> to vector<16x32xf32>
    %447 = arith.subf %434, %446 : vector<16x32xf32>
    %cst_177 = arith.constant 9.99999996E-13 : f32
    %448 = vector.broadcast %cst_177 : f32 to vector<16x1xf32>
    %449 = arith.addf %445, %448 : vector<16x1xf32>
    %450 = math.rsqrt %449 : vector<16x1xf32>
    %451 = vector.broadcast %450 : vector<16x1xf32> to vector<16x32xf32>
    %452 = arith.mulf %447, %451 : vector<16x32xf32>
    %453 = vector.broadcast %263 : vector<1x32xf32> to vector<16x32xf32>
    %454 = arith.mulf %452, %453 : vector<16x32xf32>
    %455 = vector.broadcast %264 : vector<1x32xf32> to vector<16x32xf32>
    %456 = arith.addf %454, %455 : vector<16x32xf32>
    %457 = arith.truncf %456 : vector<16x32xf32> to vector<16x32xbf16>
    %cst_178 = arith.constant dense<0.000000e+00> : vector<16x64xf32>
    %458 = tpu.matmul %457, %256, %cst_178 {dimension_numbers = #tpu.dot_dimension_numbers<[1], [0], [0], [1], [0, 0, 1, 1], [], []>} : vector<16x32xbf16>, vector<32x64xbf16>, vector<16x64xf32> -> vector<16x64xf32>
    %459 = vector.broadcast %265 : vector<1x64xf32> to vector<16x64xf32>
    %460 = arith.addf %458, %459 : vector<16x64xf32>
    %cst_179 = arith.constant 5.000000e-01 : f32
    %461 = vector.broadcast %cst_179 : f32 to vector<16x64xf32>
    %462 = arith.mulf %460, %461 : vector<16x64xf32>
    %cst_180 = arith.constant 1.41421354 : f32
    %463 = vector.broadcast %cst_180 : f32 to vector<16x64xf32>
    %464 = arith.divf %460, %463 : vector<16x64xf32>
    %465 = math.erf %464 : vector<16x64xf32>
    %cst_181 = arith.constant 1.000000e+00 : f32
    %466 = vector.broadcast %cst_181 : f32 to vector<16x64xf32>
    %467 = arith.addf %466, %465 : vector<16x64xf32>
    %468 = arith.mulf %462, %467 : vector<16x64xf32>
    %469 = arith.truncf %468 : vector<16x64xf32> to vector<16x64xbf16>
    %cst_182 = arith.constant dense<0.000000e+00> : vector<16x32xf32>
    %470 = tpu.matmul %469, %258, %cst_182 {dimension_numbers = #tpu.dot_dimension_numbers<[1], [0], [0], [1], [0, 0, 1, 1], [], []>} : vector<16x64xbf16>, vector<64x32xbf16>, vector<16x32xf32> -> vector<16x32xf32>
    %471 = vector.broadcast %266 : vector<1x32xf32> to vector<16x32xf32>
    %472 = arith.addf %470, %471 : vector<16x32xf32>
    %473 = arith.addf %472, %456 : vector<16x32xf32>
    %cst_183 = arith.constant dense<0.000000e+00> : vector<16xf32>
    %474 = vector.multi_reduction <add>, %473, %cst_183 [1] : vector<16x32xf32> to vector<16xf32>
    %475 = vector.shape_cast %474 : vector<16xf32> to vector<16x1xf32>
    %cst_184 = arith.constant 3.200000e+01 : f32
    %476 = vector.broadcast %cst_184 : f32 to vector<16x1xf32>
    %477 = arith.divf %475, %476 : vector<16x1xf32>
    %478 = vector.broadcast %477 : vector<16x1xf32> to vector<16x32xf32>
    %479 = arith.subf %473, %478 : vector<16x32xf32>
    %480 = arith.mulf %479, %479 : vector<16x32xf32>
    %cst_185 = arith.constant dense<0.000000e+00> : vector<16xf32>
    %481 = vector.multi_reduction <add>, %480, %cst_185 [1] : vector<16x32xf32> to vector<16xf32>
    %482 = vector.shape_cast %481 : vector<16xf32> to vector<16x1xf32>
    %cst_186 = arith.constant 3.200000e+01 : f32
    %483 = vector.broadcast %cst_186 : f32 to vector<16x1xf32>
    %484 = arith.divf %482, %483 : vector<16x1xf32>
    %485 = vector.broadcast %477 : vector<16x1xf32> to vector<16x32xf32>
    %486 = arith.subf %473, %485 : vector<16x32xf32>
    %cst_187 = arith.constant 9.99999996E-13 : f32
    %487 = vector.broadcast %cst_187 : f32 to vector<16x1xf32>
    %488 = arith.addf %484, %487 : vector<16x1xf32>
    %489 = math.rsqrt %488 : vector<16x1xf32>
    %490 = vector.broadcast %489 : vector<16x1xf32> to vector<16x32xf32>
    %491 = arith.mulf %486, %490 : vector<16x32xf32>
    %492 = vector.broadcast %267 : vector<1x32xf32> to vector<16x32xf32>
    %493 = arith.mulf %491, %492 : vector<16x32xf32>
    %494 = vector.broadcast %268 : vector<1x32xf32> to vector<16x32xf32>
    %495 = arith.addf %493, %494 : vector<16x32xf32>
    %496 = vector.shape_cast %495 : vector<16x32xf32> to vector<2x8x32xf32>
    %c1_188 = arith.constant 1 : index
    %c0_189 = arith.constant 0 : index
    %c0_190 = arith.constant 0 : index
    %c0_191 = arith.constant 0 : index
    %497 = vector.load %arg12[%c1_188, %c0_189, %c0_190, %c0_191] : memref<2x2x8x32xf32, #tpu.memory_space<vmem>>, vector<1x2x8x32xf32>
    %498 = vector.shape_cast %497 : vector<1x2x8x32xf32> to vector<2x8x32xf32>
    %499 = vector.shape_cast %496 : vector<2x8x32xf32> to vector<1x2x8x32xf32>
    tpu.vector_store %arg12[%c1_188, %c0_189, %c0_190, %c0_191], %499 {strides = array<i32>} : memref<2x2x8x32xf32, #tpu.memory_space<vmem>>, vector<1x2x8x32xf32>,
    return
  }
  func.func @transform_0(%arg0: i32) -> (i32, i32, i32) {
    %c0_i32 = arith.constant 0 : i32
    %c0_i32_0 = arith.constant 0 : i32
    %c0_i32_1 = arith.constant 0 : i32
    return %arg0, %c0_i32, %c0_i32_0 : i32, i32, i32
  }
  func.func @transform_1(%arg0: i32) -> (i32, i32, i32) {
    %c0_i32 = arith.constant 0 : i32
    %c0_i32_0 = arith.constant 0 : i32
    %c0_i32_1 = arith.constant 0 : i32
    return %arg0, %c0_i32, %c0_i32_0 : i32, i32, i32
  }
  func.func @transform_2(%arg0: i32) -> (i32, i32, i32) {
    %c0_i32 = arith.constant 0 : i32
    %c0_i32_0 = arith.constant 0 : i32
    %c0_i32_1 = arith.constant 0 : i32
    return %arg0, %c0_i32, %c0_i32_0 : i32, i32, i32
  }
  func.func @transform_3(%arg0: i32) -> (i32, i32, i32) {
    %c0_i32 = arith.constant 0 : i32
    %c0_i32_0 = arith.constant 0 : i32
    %c0_i32_1 = arith.constant 0 : i32
    return %arg0, %c0_i32, %c0_i32_0 : i32, i32, i32
  }
  func.func @transform_4(%arg0: i32) -> (i32, i32, i32, i32) {
    %c0_i32 = arith.constant 0 : i32
    %c0_i32_0 = arith.constant 0 : i32
    %c0_i32_1 = arith.constant 0 : i32
    %c0_i32_2 = arith.constant 0 : i32
    return %arg0, %c0_i32, %c0_i32_0, %c0_i32_1 : i32, i32, i32, i32
  }
  func.func @transform_5(%arg0: i32) -> (i32, i32, i32, i32) {
    %c0_i32 = arith.constant 0 : i32
    %c0_i32_0 = arith.constant 0 : i32
    %c0_i32_1 = arith.constant 0 : i32
    %c0_i32_2 = arith.constant 0 : i32
    return %arg0, %c0_i32, %c0_i32_0, %c0_i32_1 : i32, i32, i32, i32
  }
  func.func @transform_6(%arg0: i32) -> (i32, i32, i32) {
    %c0_i32 = arith.constant 0 : i32
    %c0_i32_0 = arith.constant 0 : i32
    %c0_i32_1 = arith.constant 0 : i32
    %c0_i32_2 = arith.constant 0 : i32
    return %c0_i32, %c0_i32_0, %c0_i32_1 : i32, i32, i32
  }
  func.func @transform_7(%arg0: i32) -> (i32, i32, i32) {
    %c0_i32 = arith.constant 0 : i32
    %c0_i32_0 = arith.constant 0 : i32
    %c0_i32_1 = arith.constant 0 : i32
    %c0_i32_2 = arith.constant 0 : i32
    return %c0_i32, %c0_i32_0, %c0_i32_1 : i32, i32, i32
  }
  func.func @transform_8(%arg0: i32) -> (i32, i32, i32) {
    %c0_i32 = arith.constant 0 : i32
    %c0_i32_0 = arith.constant 0 : i32
    %c0_i32_1 = arith.constant 0 : i32
    %c0_i32_2 = arith.constant 0 : i32
    return %c0_i32, %c0_i32_0, %c0_i32_1 : i32, i32, i32
  }
  func.func @transform_9(%arg0: i32) -> (i32, i32, i32) {
    %c0_i32 = arith.constant 0 : i32
    %c0_i32_0 = arith.constant 0 : i32
    %c0_i32_1 = arith.constant 0 : i32
    %c0_i32_2 = arith.constant 0 : i32
    return %c0_i32, %c0_i32_0, %c0_i32_1 : i32, i32, i32
  }
  func.func @transform_10(%arg0: i32) -> (i32, i32, i32) {
    %c0_i32 = arith.constant 0 : i32
    %c0_i32_0 = arith.constant 0 : i32
    %c0_i32_1 = arith.constant 0 : i32
    %c0_i32_2 = arith.constant 0 : i32
    return %c0_i32, %c0_i32_0, %c0_i32_1 : i32, i32, i32
  }
  func.func @transform_11(%arg0: i32) -> (i32, i32, i32, i32) {
    %c0_i32 = arith.constant 0 : i32
    %c0_i32_0 = arith.constant 0 : i32
    %c0_i32_1 = arith.constant 0 : i32
    %c0_i32_2 = arith.constant 0 : i32
    return %c0_i32, %arg0, %c0_i32_0, %c0_i32_1 : i32, i32, i32, i32
  }
}

</mosaic_0001>

<llo_original>
// kernel: tpu_custom_call.1
$region0: #{tpu_custom_call.1}
  #allocation0 [shape = 'u32[]', space=smem, size = 0x4, offset = 0x4, fixed_abs, tag = 'smem constant byte address 0x4 - core index']
  #allocation1 [shape = 'u32[144,128]{1,0:T(1,128)}', space=vmem, size = 0x12000, scoped, tag = 'internal scratch']
  %s0 = inlined_call_operand.hbm [shape: f32[2,8,32], index: 0, kind: input, shape index: {}]
  %s1 = inlined_call_operand.hbm [shape: f32[2,8,8], index: 1, kind: input, shape index: {}]
  %s2 = inlined_call_operand.hbm [shape: f32[2,8,32], index: 2, kind: input, shape index: {}]
  %s3 = inlined_call_operand.hbm [shape: f32[2,8,32], index: 3, kind: input, shape index: {}]
  %s4 = inlined_call_operand.hbm [shape: f32[2,8,8,32], index: 4, kind: input, shape index: {}]
  %s5 = inlined_call_operand.hbm [shape: f32[2,8,8,32], index: 5, kind: input, shape index: {}]
  %s6 = inlined_call_operand.vmem [shape: bf16[2,32,96], index: 6, kind: input, shape index: {}]
  %s7 = inlined_call_operand.vmem [shape: bf16[2,32,32], index: 7, kind: input, shape index: {}]
  %s8 = inlined_call_operand.vmem [shape: bf16[2,32,64], index: 8, kind: input, shape index: {}]
  %s9 = inlined_call_operand.vmem [shape: bf16[2,64,32], index: 9, kind: input, shape index: {}]
  %s10 = inlined_call_operand.hbm [shape: f32[2,8,128], index: 10, kind: input, shape index: {}]
  %s11 = inlined_call_operand.hbm [shape: f32[2,2,8,32], index: 11, kind: output, shape index: {}]
  %s12 = sld [smem:[#allocation0]]
  $region82: #{tpu_custom_call.1} parent=0
    _
  %s14 = ssub.s32 1, %s12
  %s15 = scalar_select 0, %s14, %s12
  $region1: #{tpu_custom_call.1} parent=0
    #allocation2 [shape = 'u8[8192]{0}', space=vmem, size = 0x2000, scoped, tag = 'input window, operand 0, single buffered']
    #allocation3 [shape = 's32[1]{0}', space=sflag, size = 0x4, scoped, tag = 'scoped memory for tpu_custom_call.1']
    #allocation4 [shape = 's32[1]{0}', space=sflag, size = 0x4, scoped, tag = 'scoped memory for tpu_custom_call.1']
    #allocation5 [shape = 'u8[8192]{0}', space=vmem, size = 0x2000, scoped, tag = 'input window, operand 1, single buffered']
    #allocation6 [shape = 's32[1]{0}', space=sflag, size = 0x4, scoped, tag = 'scoped memory for tpu_custom_call.1']
    #allocation7 [shape = 'u8[8192]{0}', space=vmem, size = 0x2000, scoped, tag = 'input window, operand 2, single buffered']
    #allocation8 [shape = 'u8[8192]{0}', space=vmem, size = 0x2000, scoped, tag = 'input window, operand 3, single buffered']
    #allocation9 [shape = 's32[1]{0}', space=sflag, size = 0x4, scoped, tag = 'scoped memory for tpu_custom_call.1']
    #allocation10 [shape = 'u8[65536]{0}', space=vmem, size = 0x10000, scoped, tag = 'input window, operand 4, single buffered']
    #allocation11 [shape = 'u8[65536]{0}', space=vmem, size = 0x10000, scoped, tag = 'input window, operand 5, single buffered']
    #allocation12 [shape = 's32[1]{0}', space=sflag, size = 0x4, scoped, tag = 'scoped memory for tpu_custom_call.1']
    #allocation13 [shape = 'u8[8192]{0}', space=vmem, size = 0x2000, scoped, tag = 'input window, operand 10, single buffered']
    #allocation14 [shape = 'u8[16384]{0}', space=vmem, size = 0x4000, scoped, tag = 'output window, operand 0, single buffered']
    %16 = vsyncpa [#allocation3], 0
    %17 = vsyncpa [#allocation6], 0
    %18 = vsyncpa [#allocation9], 0
    %19 = vsyncpa [#allocation12], 0
    %20 = vsyncpa [#allocation4], 0
    // Predicated region
    $region2: #{tpu_custom_call.1} parent=1 // pred_check
      _
    $region3: #{tpu_custom_call.1} parent=1 // pred_check_branch
      %22 = sbr.rel (0) target = $region5
    $region4: #{tpu_custom_call.1} parent=1 // pred_region
      %s24 = ssub.s32 256, 256
      %25 = vsyncadd [#allocation3], %s24
      %s26 = sshll.u32 [#allocation2], 4
      %s27 = int_to_ptr.vmem [resolvable:$true] %s26
      %32 = dma.hbm_to_vmem [thread:$0]  %s0, 256, %s27, [#allocation3], 128, 128, 8
    $region5: #{tpu_custom_call.1} parent=1 // pred_fallthru
      _
    // Predicated region
    $region6: #{tpu_custom_call.1} parent=1 // pred_check
      _
    $region7: #{tpu_custom_call.1} parent=1 // pred_check_branch
      %34 = sbr.rel (0) target = $region9
    $region8: #{tpu_custom_call.1} parent=1 // pred_region
      %s36 = ssub.s32 256, 256
      %37 = vsyncadd [#allocation6], %s36
      %s38 = sshll.u32 [#allocation5], 4
      %s39 = int_to_ptr.vmem [resolvable:$true] %s38
      %44 = dma.hbm_to_vmem [thread:$0]  %s1, 256, %s39, [#allocation6], 128, 128, 8
    $region9: #{tpu_custom_call.1} parent=1 // pred_fallthru
      _
    // Predicated region
    $region10: #{tpu_custom_call.1} parent=1 // pred_check
      _
    $region11: #{tpu_custom_call.1} parent=1 // pred_check_branch
      %46 = sbr.rel (0) target = $region13
    $region12: #{tpu_custom_call.1} parent=1 // pred_region
      %s48 = ssub.s32 256, 256
      %49 = vsyncadd [#allocation6], %s48
      %s50 = sshll.u32 [#allocation7], 4
      %s51 = int_to_ptr.vmem [resolvable:$true] %s50
      %56 = dma.hbm_to_vmem [thread:$0]  %s2, 256, %s51, [#allocation6], 128, 128, 8
    $region13: #{tpu_custom_call.1} parent=1 // pred_fallthru
      _
    // Predicated region
    $region14: #{tpu_custom_call.1} parent=1 // pred_check
      _
    $region15: #{tpu_custom_call.1} parent=1 // pred_check_branch
      %58 = sbr.rel (0) target = $region17
    $region16: #{tpu_custom_call.1} parent=1 // pred_region
      %s60 = ssub.s32 256, 256
      %61 = vsyncadd [#allocation9], %s60
      %s62 = sshll.u32 [#allocation8], 4
      %s63 = int_to_ptr.vmem [resolvable:$true] %s62
      %68 = dma.hbm_to_vmem [thread:$0]  %s3, 256, %s63, [#allocation9], 128, 128, 8
    $region17: #{tpu_custom_call.1} parent=1 // pred_fallthru
      _
    // Predicated region
    $region18: #{tpu_custom_call.1} parent=1 // pred_check
      _
    $region19: #{tpu_custom_call.1} parent=1 // pred_check_branch
      %70 = sbr.rel (0) target = $region21
    $region20: #{tpu_custom_call.1} parent=1 // pred_region
      %s72 = ssub.s32 2048, 2048
      %73 = vsyncadd [#allocation9], %s72
      %s74 = sshll.u32 [#allocation10], 4
      %s75 = int_to_ptr.vmem [resolvable:$true] %s74
      %80 = dma.hbm_to_vmem [thread:$0]  %s4, 2048, %s75, [#allocation9], 128, 128, 8
    $region21: #{tpu_custom_call.1} parent=1 // pred_fallthru
      _
    // Predicated region
    $region22: #{tpu_custom_call.1} parent=1 // pred_check
      _
    $region23: #{tpu_custom_call.1} parent=1 // pred_check_branch
      %82 = sbr.rel (0) target = $region25
    $region24: #{tpu_custom_call.1} parent=1 // pred_region
      %s84 = ssub.s32 2048, 2048
      %85 = vsyncadd [#allocation12], %s84
      %s86 = sshll.u32 [#allocation11], 4
      %s87 = int_to_ptr.vmem [resolvable:$true] %s86
      %92 = dma.hbm_to_vmem [thread:$0]  %s5, 2048, %s87, [#allocation12], 128, 128, 8
    $region25: #{tpu_custom_call.1} parent=1 // pred_fallthru
      _
    // Predicated region
    $region26: #{tpu_custom_call.1} parent=1 // pred_check
      _
    $region27: #{tpu_custom_call.1} parent=1 // pred_check_branch
      %94 = sbr.rel (0) target = $region29
    $region28: #{tpu_custom_call.1} parent=1 // pred_region
      _
    $region29: #{tpu_custom_call.1} parent=1 // pred_fallthru
      _
    // Predicated region
    $region30: #{tpu_custom_call.1} parent=1 // pred_check
      _
    $region31: #{tpu_custom_call.1} parent=1 // pred_check_branch
      %96 = sbr.rel (0) target = $region33
    $region32: #{tpu_custom_call.1} parent=1 // pred_region
      _
    $region33: #{tpu_custom_call.1} parent=1 // pred_fallthru
      _
    // Predicated region
    $region34: #{tpu_custom_call.1} parent=1 // pred_check
      _
    $region35: #{tpu_custom_call.1} parent=1 // pred_check_branch
      %98 = sbr.rel (0) target = $region37
    $region36: #{tpu_custom_call.1} parent=1 // pred_region
      _
    $region37: #{tpu_custom_call.1} parent=1 // pred_fallthru
      _
    // Predicated region
    $region38: #{tpu_custom_call.1} parent=1 // pred_check
      _
    $region39: #{tpu_custom_call.1} parent=1 // pred_check_branch
      %100 = sbr.rel (0) target = $region41
    $region40: #{tpu_custom_call.1} parent=1 // pred_region
      _
    $region41: #{tpu_custom_call.1} parent=1 // pred_fallthru
      _
    // Predicated region
    $region42: #{tpu_custom_call.1} parent=1 // pred_check
      _
    $region43: #{tpu_custom_call.1} parent=1 // pred_check_branch
      %102 = sbr.rel (0) target = $region45
    $region44: #{tpu_custom_call.1} parent=1 // pred_region
      %s104 = ssub.s32 256, 256
      %105 = vsyncadd [#allocation12], %s104
      %s106 = sshll.u32 [#allocation13], 4
      %s107 = int_to_ptr.vmem [resolvable:$true] %s106
      %112 = dma.hbm_to_vmem [thread:$0]  %s10, 256, %s107, [#allocation12], 128, 128, 8
    $region45: #{tpu_custom_call.1} parent=1 // pred_fallthru
      _
    // Predicated region
    $region46: #{tpu_custom_call.1} parent=1 // pred_check
      _
    $region47: #{tpu_custom_call.1} parent=1 // pred_check_branch
      %114 = sbr.rel (0) target = $region49
    $region48: #{tpu_custom_call.1} parent=1 // pred_region
      %115 = dma.done [#allocation3], 256
    $region49: #{tpu_custom_call.1} parent=1 // pred_fallthru
      _
    // Predicated region
    $region50: #{tpu_custom_call.1} parent=1 // pred_check
      _
    $region51: #{tpu_custom_call.1} parent=1 // pred_check_branch
      %117 = sbr.rel (0) target = $region53
    $region52: #{tpu_custom_call.1} parent=1 // pred_region
      %118 = dma.done [#allocation6], 256
    $region53: #{tpu_custom_call.1} parent=1 // pred_fallthru
      _
    // Predicated region
    $region54: #{tpu_custom_call.1} parent=1 // pred_check
      _
    $region55: #{tpu_custom_call.1} parent=1 // pred_check_branch
      %120 = sbr.rel (0) target = $region57
    $region56: #{tpu_custom_call.1} parent=1 // pred_region
      %121 = dma.done [#allocation6], 256
    $region57: #{tpu_custom_call.1} parent=1 // pred_fallthru
      _
    // Predicated region
    $region58: #{tpu_custom_call.1} parent=1 // pred_check
      _
    $region59: #{tpu_custom_call.1} parent=1 // pred_check_branch
      %123 = sbr.rel (0) target = $region61
    $region60: #{tpu_custom_call.1} parent=1 // pred_region
      %124 = dma.done [#allocation9], 256
    $region61: #{tpu_custom_call.1} parent=1 // pred_fallthru
      _
    // Predicated region
    $region62: #{tpu_custom_call.1} parent=1 // pred_check
      _
    $region63: #{tpu_custom_call.1} parent=1 // pred_check_branch
      %126 = sbr.rel (0) target = $region65
    $region64: #{tpu_custom_call.1} parent=1 // pred_region
      %127 = dma.done [#allocation9], 2048
    $region65: #{tpu_custom_call.1} parent=1 // pred_fallthru
      _
    // Predicated region
    $region66: #{tpu_custom_call.1} parent=1 // pred_check
      _
    $region67: #{tpu_custom_call.1} parent=1 // pred_check_branch
      %129 = sbr.rel (0) target = $region69
    $region68: #{tpu_custom_call.1} parent=1 // pred_region
      %130 = dma.done [#allocation12], 2048
    $region69: #{tpu_custom_call.1} parent=1 // pred_fallthru
      _
    // Predicated region
    $region70: #{tpu_custom_call.1} parent=1 // pred_check
      _
    $region71: #{tpu_custom_call.1} parent=1 // pred_check_branch
      %132 = sbr.rel (0) target = $region73
    $region72: #{tpu_custom_call.1} parent=1 // pred_region
      %133 = dma.done [#allocation12], 256
    $region73: #{tpu_custom_call.1} parent=1 // pred_fallthru
      _
    %v135 = vld [vmem:[#allocation2] sm:$0xff]
    %v136 = vld [vmem:[#allocation2 + $0x8] sm:$0xff]
    %v137 = vld [vmem:[%s6] sm:$0xf]
    %v138 = vld [vmem:[%s6 + $0x4] sm:$0xf]
    %v139 = vld [vmem:[%s6 + $0x8] sm:$0xf]
    %v140 = vld [vmem:[%s6 + $0xc] sm:$0xf]
    %v141 = vld [vmem:[%s7] sm:$0xf]
    %v142 = vld [vmem:[%s7 + $0x4] sm:$0xf]
    %v143 = vld [vmem:[%s7 + $0x8] sm:$0xf]
    %v144 = vld [vmem:[%s7 + $0xc] sm:$0xf]
    %v145 = vld [vmem:[%s8] sm:$0xf]
    %v146 = vld [vmem:[%s8 + $0x4] sm:$0xf]
    %v147 = vld [vmem:[%s8 + $0x8] sm:$0xf]
    %v148 = vld [vmem:[%s8 + $0xc] sm:$0xf]
    %v149 = vld [vmem:[%s9] sm:$0xf]
    %v150 = vld [vmem:[%s9 + $0x4] sm:$0xf]
    %v151 = vld [vmem:[%s9 + $0x8] sm:$0xf]
    %v152 = vld [vmem:[%s9 + $0xc] sm:$0xf]
    %v153 = vld [vmem:[%s9 + $0x10] sm:$0xf]
    %v154 = vld [vmem:[%s9 + $0x14] sm:$0xf]
    %v155 = vld [vmem:[%s9 + $0x18] sm:$0xf]
    %v156 = vld [vmem:[%s9 + $0x1c] sm:$0xf]
    %v157 = vld [vmem:[#allocation13] sm:$0xff]
    %v158 = vpack.c.bf16 %v136, %v135
    %v159 = vlaneseq
    %v160 = vshrl.u32 %v159, 7
    %v161 = vsub.s32 0, %v160
    %v162 = vrot.slane %v157, %v161
    %v167 = vunpack.c.l.b16 %v137
    %v168 = vunpack.c.l.b16 %v138
    %v169 = vunpack.c.l.b16 %v139
    %v170 = vunpack.c.l.b16 %v140
    %v171 = vpack.c.b16 %v168, %v167
    %v172 = vpack.c.b16 %v170, %v169
    %vm175 = vcmask 261120
    %v177 = vsel %vm175, %v158, 0
    %179 = vmatprep.subr.bf16.mxu0 0
    %180 = vmatpush1.bf16.msra.mxu0 %v171
    %181 = vmatprep.subr.bf16.mxu0 0
    %182 = vmatpush1.bf16.msra.mxu0 %v172
    %183 = vmatprep.subr.bf16.mxu0 0
    %184 = vmatpush1.bf16.msra.mxu0 0
    %185 = vmatprep.subr.bf16.mxu0 0
    %186 = vmatpush1.bf16.msra.mxu0 0
    %187 = vmatprep.subr.bf16.mxu0 0
    %188 = vmatpush1.bf16.msra.mxu0 0
    %189 = vmatprep.subr.bf16.mxu0 0
    %190 = vmatpush1.bf16.msra.mxu0 0
    %191 = vmatprep.subr.bf16.mxu0 0
    %192 = vmatpush1.bf16.msra.mxu0 0
    %193 = vmatprep.subr.bf16.mxu0 0
    %194 = vmatpush1.bf16.msra.mxu0 0
    %195 = vmatprep.subr.bf16.mxu0 0
    %196 = vmatpush1.bf16.msra.mxu0 0
    %197 = vmatprep.subr.bf16.mxu0 0
    %198 = vmatpush1.bf16.msra.mxu0 0
    %199 = vmatprep.subr.bf16.mxu0 0
    %200 = vmatpush1.bf16.msra.mxu0 0
    %201 = vmatprep.subr.bf16.mxu0 0
    %202 = vmatpush1.bf16.msra.mxu0 0
    %203 = vmatprep.subr.bf16.mxu0 0
    %204 = vmatpush1.bf16.msra.mxu0 0
    %205 = vmatprep.subr.bf16.mxu0 0
    %206 = vmatpush1.bf16.msra.mxu0 0
    %207 = vmatprep.subr.bf16.mxu0 0
    %208 = vmatpush1.bf16.msra.mxu0 0
    %209 = vmatprep.subr.bf16.mxu0 0
    %210 = vmatpush1.bf16.msra.mxu0 0
    %211 = vmatprep.mubr.bf16.mxu0 0
    %212 = vmatmul.mubr.bf16.gmra.mrb[0].mxu0 %v177
    %v213 = vpop.f32.mrb[0].mxu0
    %v214 = vadd.f32 %v162, %v213
    %v215 = vpop.f32.mrb[0].mxu0
    %v216 = vpop.f32.mrb[0].mxu0
    %v217 = vadd.f32 %v162, %v216
    %v218 = vpop.f32.mrb[0].mxu0
    %219 = vdwg.mxu0
    %v220 = vld [vmem:[#allocation7] sm:$0xff]
    %222 = vrot.lane.b32.xlu0 %v220, 32
    %v223 = vpop.permute.xlu0 %222
    %v225 = vadd.f32 %v214, %v223
    %v226 = vld [vmem:[#allocation8] sm:$0xff]
    %228 = vrot.lane.b32.xlu0 %v226, 64
    %v229 = vpop.permute.xlu0 %228
    %v231 = vadd.f32 %v214, %v229
    %v232 = vld [vmem:[#allocation5] sm:$0xff]
    %v233 = vld [vmem:[#allocation10] sm:$0xff]
    %v234 = vld [vmem:[#allocation10 + $0x8] sm:$0xff]
    %v235 = vld [vmem:[#allocation10 + $0x10] sm:$0xff]
    %v236 = vld [vmem:[#allocation10 + $0x18] sm:$0xff]
    %v237 = vld [vmem:[#allocation10 + $0x20] sm:$0xff]
    %v238 = vld [vmem:[#allocation10 + $0x28] sm:$0xff]
    %v239 = vld [vmem:[#allocation10 + $0x30] sm:$0xff]
    %v240 = vld [vmem:[#allocation10 + $0x38] sm:$0xff]
    %v241 = vld [vmem:[#allocation11] sm:$0xff]
    %v242 = vld [vmem:[#allocation11 + $0x8] sm:$0xff]
    %v243 = vld [vmem:[#allocation11 + $0x10] sm:$0xff]
    %v244 = vld [vmem:[#allocation11 + $0x18] sm:$0xff]
    %v245 = vld [vmem:[#allocation11 + $0x20] sm:$0xff]
    %v246 = vld [vmem:[#allocation11 + $0x28] sm:$0xff]
    %v247 = vld [vmem:[#allocation11 + $0x30] sm:$0xff]
    %v248 = vld [vmem:[#allocation11 + $0x38] sm:$0xff]
    %v249 = vpack.c.bf16 %v214, %v214
    %v250 = vpack.c.bf16 %v225, %v225
    %v251 = vpack.c.bf16 %v231, %v231
    %v253 = vcombine.high %v214, %v214
    %v255 = vunpack.c.l.s4 1966171168
    %v256 = vunpack.c.0.s8 %v255
    %v257 = vlaneseq
    %v258 = vshrl.u32 %v257, 7
    %v259 = vsub.s32 %v256, %v258
    %v260 = vrot.slane %v214, %v259
    %v262 = vunpack.c.l.s4 1966171168
    %v263 = vunpack.c.0.s8 %v262
    %v264 = vlaneseq
    %v265 = vshrl.u32 %v264, 7
    %v266 = vsub.s32 %v263, %v265
    %v267 = vrot.slane %v253, %v266
    %v268 = vcombine.high %v260, %v260
    %v269 = vcombine.high %v267, %v267
    %v271 = vunpack.c.l.s4 1966171168
    %v272 = vunpack.c.0.s8 %v271
    %v273 = vlaneseq
    %v274 = vshrl.u32 %v273, 7
    %v275 = vsub.s32 %v272, %v274
    %v276 = vrot.slane %v260, %v275
    %v278 = vunpack.c.l.s4 1966171168
    %v279 = vunpack.c.0.s8 %v278
    %v280 = vlaneseq
    %v281 = vshrl.u32 %v280, 7
    %v282 = vsub.s32 %v279, %v281
    %v283 = vrot.slane %v267, %v282
    %v285 = vunpack.c.l.s4 1966171168
    %v286 = vunpack.c.0.s8 %v285
    %v287 = vlaneseq
    %v288 = vshrl.u32 %v287, 7
    %v289 = vsub.s32 %v286, %v288
    %v290 = vrot.slane %v268, %v289
    %v292 = vunpack.c.l.s4 1966171168
    %v293 = vunpack.c.0.s8 %v292
    %v294 = vlaneseq
    %v295 = vshrl.u32 %v294, 7
    %v296 = vsub.s32 %v293, %v295
    %v297 = vrot.slane %v269, %v296
    %v298 = vcombine.high %v276, %v276
    %v299 = vcombine.high %v283, %v283
    %v300 = vcombine.high %v290, %v290
    %v301 = vcombine.high %v297, %v297
    %v302 = vlaneseq
    %v303 = vshrl.u32 %v302, 7
    %v304 = vsub.s32 0, %v303
    %v305 = vrot.slane %v276, %v304
    %v306 = vlaneseq
    %v307 = vshrl.u32 %v306, 7
    %v308 = vsub.s32 0, %v307
    %v309 = vrot.slane %v290, %v308
    %v310 = vlaneseq
    %v311 = vshrl.u32 %v310, 7
    %v312 = vsub.s32 0, %v311
    %v313 = vrot.slane %v298, %v312
    %v314 = vlaneseq
    %v315 = vshrl.u32 %v314, 7
    %v316 = vsub.s32 0, %v315
    %v317 = vrot.slane %v300, %v316
    %v318 = vlaneseq
    %v319 = vshrl.u32 %v318, 7
    %v320 = vsub.s32 0, %v319
    %v321 = vrot.slane %v283, %v320
    %v322 = vlaneseq
    %v323 = vshrl.u32 %v322, 7
    %v324 = vsub.s32 0, %v323
    %v325 = vrot.slane %v297, %v324
    %v326 = vlaneseq
    %v327 = vshrl.u32 %v326, 7
    %v328 = vsub.s32 0, %v327
    %v329 = vrot.slane %v299, %v328
    %v330 = vlaneseq
    %v331 = vshrl.u32 %v330, 7
    %v332 = vsub.s32 0, %v331
    %v333 = vrot.slane %v301, %v332
    %v342 = vmul.f32 %v233, %v305
    %v343 = vmul.f32 %v234, %v309
    %v344 = vmul.f32 %v235, %v313
    %v345 = vmul.f32 %v236, %v317
    %v346 = vmul.f32 %v237, %v321
    %v347 = vmul.f32 %v238, %v325
    %v348 = vmul.f32 %v239, %v329
    %v349 = vmul.f32 %v240, %v333
    %vm350 = vcmask 130048
    %v351 = vsel %vm350, %v342, 0.0
    %352 = vadd.xlane.f32.xlu0 %v351
    %v353 = vpop.xlane.xlu0 %352
    %v354 = vsel %vm350, %v343, 0.0
    %355 = vadd.xlane.f32.xlu0 %v354
    %v356 = vpop.xlane.xlu0 %355
    %v357 = vsel %vm350, %v344, 0.0
    %358 = vadd.xlane.f32.xlu0 %v357
    %v359 = vpop.xlane.xlu0 %358
    %v360 = vsel %vm350, %v345, 0.0
    %361 = vadd.xlane.f32.xlu0 %v360
    %v362 = vpop.xlane.xlu0 %361
    %v363 = vsel %vm350, %v346, 0.0
    %364 = vadd.xlane.f32.xlu0 %v363
    %v365 = vpop.xlane.xlu0 %364
    %v366 = vsel %vm350, %v347, 0.0
    %367 = vadd.xlane.f32.xlu0 %v366
    %v368 = vpop.xlane.xlu0 %367
    %v369 = vsel %vm350, %v348, 0.0
    %370 = vadd.xlane.f32.xlu0 %v369
    %v371 = vpop.xlane.xlu0 %370
    %v372 = vsel %vm350, %v349, 0.0
    %373 = vadd.xlane.f32.xlu0 %v372
    %v374 = vpop.xlane.xlu0 %373
    %376 = vrot.lane.b32.xlu0 %v250, 96
    %v377 = vpop.permute.xlu0 %376
    %v386 = vlaneseq
    %v387 = vand.u32 %v386, 127
    %v388 = vlaneseq
    %v389 = vshrl.u32 %v388, 7
    %v390 = vsub.s32 %v387, %v389
    %v391 = vrot.slane %v353, %v390
    %v392 = vlaneseq
    %v393 = vshrl.u32 %v392, 7
    %v394 = vsub.s32 %v387, %v393
    %v395 = vrot.slane %v356, %v394
    %v396 = vlaneseq
    %v397 = vshrl.u32 %v396, 7
    %v398 = vsub.s32 %v387, %v397
    %v399 = vrot.slane %v359, %v398
    %v400 = vlaneseq
    %v401 = vshrl.u32 %v400, 7
    %v402 = vsub.s32 %v387, %v401
    %v403 = vrot.slane %v362, %v402
    %v404 = vlaneseq
    %v405 = vshrl.u32 %v404, 7
    %v406 = vsub.s32 %v387, %v405
    %v407 = vrot.slane %v365, %v406
    %v408 = vlaneseq
    %v409 = vshrl.u32 %v408, 7
    %v410 = vsub.s32 %v387, %v409
    %v411 = vrot.slane %v368, %v410
    %v412 = vlaneseq
    %v413 = vshrl.u32 %v412, 7
    %v414 = vsub.s32 %v387, %v413
    %v415 = vrot.slane %v371, %v414
    %v416 = vlaneseq
    %v417 = vshrl.u32 %v416, 7
    %v418 = vsub.s32 %v387, %v417
    %v419 = vrot.slane %v374, %v418
    %vm420 = vcmask 1041409
    %v421 = vsel %vm420, %v395, %v391
    %vm422 = vcmask 1042434
    %v423 = vsel %vm422, %v399, %v421
    %vm424 = vcmask 1043459
    %v425 = vsel %vm424, %v403, %v423
    %vm426 = vcmask 1044484
    %v427 = vsel %vm426, %v407, %v425
    %vm428 = vcmask 1045509
    %v429 = vsel %vm428, %v411, %v427
    %vm430 = vcmask 1046534
    %v431 = vsel %vm430, %v415, %v429
    %vm432 = vcmask 1047559
    %v433 = vsel %vm432, %v419, %v431
    %v436 = vsel %vm350, %v249, 0
    %v439 = vsel %vm350, %v377, 0
    %441 = vmatprep.subr.bf16.mxu0 0
    %442 = vmatpush1.bf16.xpose.msra.mxu0 %v439
    %443 = vmatprep.subr.bf16.mxu0 0
    %444 = vmatpush1.bf16.xpose.msra.mxu0 0
    %445 = vmatprep.subr.bf16.mxu0 0
    %446 = vmatpush1.bf16.xpose.msra.mxu0 0
    %447 = vmatprep.subr.bf16.mxu0 0
    %448 = vmatpush1.bf16.xpose.msra.mxu0 0
    %449 = vmatprep.subr.bf16.mxu0 0
    %450 = vmatpush1.bf16.xpose.msra.mxu0 0
    %451 = vmatprep.subr.bf16.mxu0 0
    %452 = vmatpush1.bf16.xpose.msra.mxu0 0
    %453 = vmatprep.subr.bf16.mxu0 0
    %454 = vmatpush1.bf16.xpose.msra.mxu0 0
    %455 = vmatprep.subr.bf16.mxu0 0
    %456 = vmatpush1.bf16.xpose.msra.mxu0 0
    %457 = vmatprep.subr.bf16.mxu0 0
    %458 = vmatpush1.bf16.xpose.msra.mxu0 0
    %459 = vmatprep.subr.bf16.mxu0 0
    %460 = vmatpush1.bf16.xpose.msra.mxu0 0
    %461 = vmatprep.subr.bf16.mxu0 0
    %462 = vmatpush1.bf16.xpose.msra.mxu0 0
    %463 = vmatprep.subr.bf16.mxu0 0
    %464 = vmatpush1.bf16.xpose.msra.mxu0 0
    %465 = vmatprep.subr.bf16.mxu0 0
    %466 = vmatpush1.bf16.xpose.msra.mxu0 0
    %467 = vmatprep.subr.bf16.mxu0 0
    %468 = vmatpush1.bf16.xpose.msra.mxu0 0
    %469 = vmatprep.subr.bf16.mxu0 0
    %470 = vmatpush1.bf16.xpose.msra.mxu0 0
    %471 = vmatprep.subr.bf16.mxu0 0
    %472 = vmatpush1.bf16.xpose.msra.mxu0 0
    %473 = vmatprep.mubr.bf16.mxu0 0
    %474 = vmatmul.mubr.bf16.gmra.mrb[0].mxu0 %v436
    %v475 = vpop.f32.mrb[0].mxu0
    %v476 = vadd.f32 %v433, %v475
    %v477 = vpop.f32.mrb[0].mxu0
    %v478 = vpop.f32.mrb[0].mxu0
    %v479 = vpop.f32.mrb[0].mxu0
    %480 = vdwg.mxu0
    %v481 = vmul.f32 %v476, 0.25
    %v482 = vadd.f32 %v481, %v232
    %vm483 = vcmask 64512
    %v484 = vsel %vm483, %v482, -inf
    %485 = vmax.xlane.f32.xlu0 %v484
    %v486 = vpop.xlane.xlu0 %485
    %v487 = vsub.f32 %v482, %v486
    %v488 = vmul.f32 %v487, 1.442695
    %v489 = vpow.pop %v488
    %v490 = vsel %vm483, %v489, 0.0
    %491 = vadd.xlane.f32.xlu0 %v490
    %v492 = vpop.xlane.xlu0 %491
    %v493 = vrcp.pop %v492
    %v494 = vmul.f32 %v489, %v493
    %v495 = vpack.c.bf16 %v494, %v494
    %497 = vrot.lane.b32.xlu0 %v251, 64
    %v498 = vpop.permute.xlu0 %497
    %v500 = vsel %vm483, %v495, 0
    %vm502 = vcmask 1043456
    %v504 = vsel %vm502, %v498, 0
    %506 = vmatprep.subr.bf16.mxu0 0
    %507 = vmatpush1.bf16.msra.mxu0 %v504
    %508 = vmatprep.subr.bf16.mxu0 0
    %509 = vmatpush1.bf16.msra.mxu0 0
    %510 = vmatprep.subr.bf16.mxu0 0
    %511 = vmatpush1.bf16.msra.mxu0 0
    %512 = vmatprep.subr.bf16.mxu0 0
    %513 = vmatpush1.bf16.msra.mxu0 0
    %514 = vmatprep.subr.bf16.mxu0 0
    %515 = vmatpush1.bf16.msra.mxu0 0
    %516 = vmatprep.subr.bf16.mxu0 0
    %517 = vmatpush1.bf16.msra.mxu0 0
    %518 = vmatprep.subr.bf16.mxu0 0
    %519 = vmatpush1.bf16.msra.mxu0 0
    %520 = vmatprep.subr.bf16.mxu0 0
    %521 = vmatpush1.bf16.msra.mxu0 0
    %522 = vmatprep.subr.bf16.mxu0 0
    %523 = vmatpush1.bf16.msra.mxu0 0
    %524 = vmatprep.subr.bf16.mxu0 0
    %525 = vmatpush1.bf16.msra.mxu0 0
    %526 = vmatprep.subr.bf16.mxu0 0
    %527 = vmatpush1.bf16.msra.mxu0 0
    %528 = vmatprep.subr.bf16.mxu0 0
    %529 = vmatpush1.bf16.msra.mxu0 0
    %530 = vmatprep.subr.bf16.mxu0 0
    %531 = vmatpush1.bf16.msra.mxu0 0
    %532 = vmatprep.subr.bf16.mxu0 0
    %533 = vmatpush1.bf16.msra.mxu0 0
    %534 = vmatprep.subr.bf16.mxu0 0
    %535 = vmatpush1.bf16.msra.mxu0 0
    %536 = vmatprep.subr.bf16.mxu0 0
    %537 = vmatpush1.bf16.msra.mxu0 0
    %538 = vmatprep.mubr.bf16.mxu0 0
    %539 = vmatmul.mubr.bf16.gmra.mrb[0].mxu0 %v500
    %v540 = vpop.f32.mrb[0].mxu0
    %v541 = vadd.f32 0.0, %v540
    %v542 = vpop.f32.mrb[0].mxu0
    %v543 = vpop.f32.mrb[0].mxu0
    %v544 = vpop.f32.mrb[0].mxu0
    %545 = vdwg.mxu0
    %554 = vrot.lane.b32.xlu0 %v342, 112
    %v555 = vpop.permute.xlu0 %554
    %556 = vrot.lane.b32.xlu0 %v343, 112
    %v557 = vpop.permute.xlu0 %556
    %558 = vrot.lane.b32.xlu0 %v344, 112
    %v559 = vpop.permute.xlu0 %558
    %560 = vrot.lane.b32.xlu0 %v345, 112
    %v561 = vpop.permute.xlu0 %560
    %562 = vrot.lane.b32.xlu0 %v346, 112
    %v563 = vpop.permute.xlu0 %562
    %564 = vrot.lane.b32.xlu0 %v347, 112
    %v565 = vpop.permute.xlu0 %564
    %566 = vrot.lane.b32.xlu0 %v348, 112
    %v567 = vpop.permute.xlu0 %566
    %568 = vrot.lane.b32.xlu0 %v349, 112
    %v569 = vpop.permute.xlu0 %568
    %v578 = vsel %vm350, %v555, 0.0
    %579 = vadd.xlane.f32.xlu0 %v578
    %v580 = vpop.xlane.xlu0 %579
    %v581 = vsel %vm350, %v557, 0.0
    %582 = vadd.xlane.f32.xlu0 %v581
    %v583 = vpop.xlane.xlu0 %582
    %v584 = vsel %vm350, %v559, 0.0
    %585 = vadd.xlane.f32.xlu0 %v584
    %v586 = vpop.xlane.xlu0 %585
    %v587 = vsel %vm350, %v561, 0.0
    %588 = vadd.xlane.f32.xlu0 %v587
    %v589 = vpop.xlane.xlu0 %588
    %v590 = vsel %vm350, %v563, 0.0
    %591 = vadd.xlane.f32.xlu0 %v590
    %v592 = vpop.xlane.xlu0 %591
    %v593 = vsel %vm350, %v565, 0.0
    %594 = vadd.xlane.f32.xlu0 %v593
    %v595 = vpop.xlane.xlu0 %594
    %v596 = vsel %vm350, %v567, 0.0
    %597 = vadd.xlane.f32.xlu0 %v596
    %v598 = vpop.xlane.xlu0 %597
    %v599 = vsel %vm350, %v569, 0.0
    %600 = vadd.xlane.f32.xlu0 %v599
    %v601 = vpop.xlane.xlu0 %600
    %603 = vrot.lane.b32.xlu0 %v249, 112
    %v604 = vpop.permute.xlu0 %603
    %605 = vrot.lane.b32.xlu0 %v250, 80
    %v606 = vpop.permute.xlu0 %605
    %v615 = vlaneseq
    %v616 = vshrl.u32 %v615, 7
    %v617 = vsub.s32 %v387, %v616
    %v618 = vrot.slane %v580, %v617
    %v619 = vlaneseq
    %v620 = vshrl.u32 %v619, 7
    %v621 = vsub.s32 %v387, %v620
    %v622 = vrot.slane %v583, %v621
    %v623 = vlaneseq
    %v624 = vshrl.u32 %v623, 7
    %v625 = vsub.s32 %v387, %v624
    %v626 = vrot.slane %v586, %v625
    %v627 = vlaneseq
    %v628 = vshrl.u32 %v627, 7
    %v629 = vsub.s32 %v387, %v628
    %v630 = vrot.slane %v589, %v629
    %v631 = vlaneseq
    %v632 = vshrl.u32 %v631, 7
    %v633 = vsub.s32 %v387, %v632
    %v634 = vrot.slane %v592, %v633
    %v635 = vlaneseq
    %v636 = vshrl.u32 %v635, 7
    %v637 = vsub.s32 %v387, %v636
    %v638 = vrot.slane %v595, %v637
    %v639 = vlaneseq
    %v640 = vshrl.u32 %v639, 7
    %v641 = vsub.s32 %v387, %v640
    %v642 = vrot.slane %v598, %v641
    %v643 = vlaneseq
    %v644 = vshrl.u32 %v643, 7
    %v645 = vsub.s32 %v387, %v644
    %v646 = vrot.slane %v601, %v645
    %v647 = vsel %vm420, %v622, %v618
    %v648 = vsel %vm422, %v626, %v647
    %v649 = vsel %vm424, %v630, %v648
    %v650 = vsel %vm426, %v634, %v649
    %v651 = vsel %vm428, %v638, %v650
    %v652 = vsel %vm430, %v642, %v651
    %v653 = vsel %vm432, %v646, %v652
    %v656 = vsel %vm350, %v604, 0
    %v659 = vsel %vm350, %v606, 0
    %661 = vmatprep.subr.bf16.mxu0 0
    %662 = vmatpush1.bf16.xpose.msra.mxu0 %v659
    %663 = vmatprep.subr.bf16.mxu0 0
    %664 = vmatpush1.bf16.xpose.msra.mxu0 0
    %665 = vmatprep.subr.bf16.mxu0 0
    %666 = vmatpush1.bf16.xpose.msra.mxu0 0
    %667 = vmatprep.subr.bf16.mxu0 0
    %668 = vmatpush1.bf16.xpose.msra.mxu0 0
    %669 = vmatprep.subr.bf16.mxu0 0
    %670 = vmatpush1.bf16.xpose.msra.mxu0 0
    %671 = vmatprep.subr.bf16.mxu0 0
    %672 = vmatpush1.bf16.xpose.msra.mxu0 0
    %673 = vmatprep.subr.bf16.mxu0 0
    %674 = vmatpush1.bf16.xpose.msra.mxu0 0
    %675 = vmatprep.subr.bf16.mxu0 0
    %676 = vmatpush1.bf16.xpose.msra.mxu0 0
    %677 = vmatprep.subr.bf16.mxu0 0
    %678 = vmatpush1.bf16.xpose.msra.mxu0 0
    %679 = vmatprep.subr.bf16.mxu0 0
    %680 = vmatpush1.bf16.xpose.msra.mxu0 0
    %681 = vmatprep.subr.bf16.mxu0 0
    %682 = vmatpush1.bf16.xpose.msra.mxu0 0
    %683 = vmatprep.subr.bf16.mxu0 0
    %684 = vmatpush1.bf16.xpose.msra.mxu0 0
    %685 = vmatprep.subr.bf16.mxu0 0
    %686 = vmatpush1.bf16.xpose.msra.mxu0 0
    %687 = vmatprep.subr.bf16.mxu0 0
    %688 = vmatpush1.bf16.xpose.msra.mxu0 0
    %689 = vmatprep.subr.bf16.mxu0 0
    %690 = vmatpush1.bf16.xpose.msra.mxu0 0
    %691 = vmatprep.subr.bf16.mxu0 0
    %692 = vmatpush1.bf16.xpose.msra.mxu0 0
    %693 = vmatprep.mubr.bf16.mxu0 0
    %694 = vmatmul.mubr.bf16.gmra.mrb[0].mxu0 %v656
    %v695 = vpop.f32.mrb[0].mxu0
    %v696 = vadd.f32 %v653, %v695
    %v697 = vpop.f32.mrb[0].mxu0
    %v698 = vpop.f32.mrb[0].mxu0
    %v699 = vpop.f32.mrb[0].mxu0
    %700 = vdwg.mxu0
    %v701 = vmul.f32 %v696, 0.25
    %v702 = vadd.f32 %v701, %v232
    %v703 = vsel %vm483, %v702, -inf
    %704 = vmax.xlane.f32.xlu0 %v703
    %v705 = vpop.xlane.xlu0 %704
    %v706 = vsub.f32 %v702, %v705
    %v707 = vmul.f32 %v706, 1.442695
    %v708 = vpow.pop %v707
    %v709 = vsel %vm483, %v708, 0.0
    %710 = vadd.xlane.f32.xlu0 %v709
    %v711 = vpop.xlane.xlu0 %710
    %v712 = vrcp.pop %v711
    %v713 = vmul.f32 %v708, %v712
    %v714 = vpack.c.bf16 %v713, %v713
    %715 = vrot.lane.b32.xlu0 %v251, 48
    %v716 = vpop.permute.xlu0 %715
    %v718 = vsel %vm483, %v714, 0
    %v721 = vsel %vm502, %v716, 0
    %723 = vmatprep.subr.bf16.mxu0 0
    %724 = vmatpush1.bf16.msra.mxu0 %v721
    %725 = vmatprep.subr.bf16.mxu0 0
    %726 = vmatpush1.bf16.msra.mxu0 0
    %727 = vmatprep.subr.bf16.mxu0 0
    %728 = vmatpush1.bf16.msra.mxu0 0
    %729 = vmatprep.subr.bf16.mxu0 0
    %730 = vmatpush1.bf16.msra.mxu0 0
    %731 = vmatprep.subr.bf16.mxu0 0
    %732 = vmatpush1.bf16.msra.mxu0 0
    %733 = vmatprep.subr.bf16.mxu0 0
    %734 = vmatpush1.bf16.msra.mxu0 0
    %735 = vmatprep.subr.bf16.mxu0 0
    %736 = vmatpush1.bf16.msra.mxu0 0
    %737 = vmatprep.subr.bf16.mxu0 0
    %738 = vmatpush1.bf16.msra.mxu0 0
    %739 = vmatprep.subr.bf16.mxu0 0
    %740 = vmatpush1.bf16.msra.mxu0 0
    %741 = vmatprep.subr.bf16.mxu0 0
    %742 = vmatpush1.bf16.msra.mxu0 0
    %743 = vmatprep.subr.bf16.mxu0 0
    %744 = vmatpush1.bf16.msra.mxu0 0
    %745 = vmatprep.subr.bf16.mxu0 0
    %746 = vmatpush1.bf16.msra.mxu0 0
    %747 = vmatprep.subr.bf16.mxu0 0
    %748 = vmatpush1.bf16.msra.mxu0 0
    %749 = vmatprep.subr.bf16.mxu0 0
    %750 = vmatpush1.bf16.msra.mxu0 0
    %751 = vmatprep.subr.bf16.mxu0 0
    %752 = vmatpush1.bf16.msra.mxu0 0
    %753 = vmatprep.subr.bf16.mxu0 0
    %754 = vmatpush1.bf16.msra.mxu0 0
    %755 = vmatprep.mubr.bf16.mxu0 0
    %756 = vmatmul.mubr.bf16.gmra.mrb[0].mxu0 %v718
    %v757 = vpop.f32.mrb[0].mxu0
    %v758 = vadd.f32 0.0, %v757
    %v759 = vpop.f32.mrb[0].mxu0
    %v760 = vpop.f32.mrb[0].mxu0
    %v761 = vpop.f32.mrb[0].mxu0
    %762 = vdwg.mxu0
    %764 = vrot.lane.b32.xlu0 %v758, 16
    %v765 = vpop.permute.xlu0 %764
    %v767 = vsel %vm350, %v541, %v765
    %v768 = vlaneseq
    %v769 = vshrl.u32 %v768, 7
    %v770 = vsub.s32 0, %v769
    %v771 = vrot.slane %v494, %v770
    %773 = vbcast.lane.b32.xlu0 %v771, 256
    %v774 = vpop.permute.xlu0 %773
    %v775 = vlaneseq
    %v776 = vshrl.u32 %v775, 7
    %v777 = vsub.s32 1, %v776
    %v778 = vrot.slane %v494, %v777
    %780 = vbcast.lane.b32.xlu0 %v778, 256
    %v781 = vpop.permute.xlu0 %780
    %v782 = vlaneseq
    %v783 = vshrl.u32 %v782, 7
    %v784 = vsub.s32 2, %v783
    %v785 = vrot.slane %v494, %v784
    %787 = vbcast.lane.b32.xlu0 %v785, 256
    %v788 = vpop.permute.xlu0 %787
    %v789 = vlaneseq
    %v790 = vshrl.u32 %v789, 7
    %v791 = vsub.s32 3, %v790
    %v792 = vrot.slane %v494, %v791
    %794 = vbcast.lane.b32.xlu0 %v792, 256
    %v795 = vpop.permute.xlu0 %794
    %v796 = vlaneseq
    %v797 = vshrl.u32 %v796, 7
    %v798 = vsub.s32 4, %v797
    %v799 = vrot.slane %v494, %v798
    %801 = vbcast.lane.b32.xlu0 %v799, 256
    %v802 = vpop.permute.xlu0 %801
    %v803 = vlaneseq
    %v804 = vshrl.u32 %v803, 7
    %v805 = vsub.s32 5, %v804
    %v806 = vrot.slane %v494, %v805
    %808 = vbcast.lane.b32.xlu0 %v806, 256
    %v809 = vpop.permute.xlu0 %808
    %v810 = vlaneseq
    %v811 = vshrl.u32 %v810, 7
    %v812 = vsub.s32 6, %v811
    %v813 = vrot.slane %v494, %v812
    %815 = vbcast.lane.b32.xlu0 %v813, 256
    %v816 = vpop.permute.xlu0 %815
    %v817 = vlaneseq
    %v818 = vshrl.u32 %v817, 7
    %v819 = vsub.s32 7, %v818
    %v820 = vrot.slane %v494, %v819
    %822 = vbcast.lane.b32.xlu0 %v820, 256
    %v823 = vpop.permute.xlu0 %822
    %v824 = vlaneseq
    %v825 = vshrl.u32 %v824, 7
    %v826 = vsub.s32 0, %v825
    %v827 = vrot.slane %v713, %v826
    %829 = vbcast.lane.b32.xlu0 %v827, 256
    %v830 = vpop.permute.xlu0 %829
    %v831 = vlaneseq
    %v832 = vshrl.u32 %v831, 7
    %v833 = vsub.s32 1, %v832
    %v834 = vrot.slane %v713, %v833
    %836 = vbcast.lane.b32.xlu0 %v834, 256
    %v837 = vpop.permute.xlu0 %836
    %v838 = vlaneseq
    %v839 = vshrl.u32 %v838, 7
    %v840 = vsub.s32 2, %v839
    %v841 = vrot.slane %v713, %v840
    %843 = vbcast.lane.b32.xlu0 %v841, 256
    %v844 = vpop.permute.xlu0 %843
    %v845 = vlaneseq
    %v846 = vshrl.u32 %v845, 7
    %v847 = vsub.s32 3, %v846
    %v848 = vrot.slane %v713, %v847
    %850 = vbcast.lane.b32.xlu0 %v848, 256
    %v851 = vpop.permute.xlu0 %850
    %v852 = vlaneseq
    %v853 = vshrl.u32 %v852, 7
    %v854 = vsub.s32 4, %v853
    %v855 = vrot.slane %v713, %v854
    %857 = vbcast.lane.b32.xlu0 %v855, 256
    %v858 = vpop.permute.xlu0 %857
    %v859 = vlaneseq
    %v860 = vshrl.u32 %v859, 7
    %v861 = vsub.s32 5, %v860
    %v862 = vrot.slane %v713, %v861
    %864 = vbcast.lane.b32.xlu0 %v862, 256
    %v865 = vpop.permute.xlu0 %864
    %v866 = vlaneseq
    %v867 = vshrl.u32 %v866, 7
    %v868 = vsub.s32 6, %v867
    %v869 = vrot.slane %v713, %v868
    %871 = vbcast.lane.b32.xlu0 %v869, 256
    %v872 = vpop.permute.xlu0 %871
    %v873 = vlaneseq
    %v874 = vshrl.u32 %v873, 7
    %v875 = vsub.s32 7, %v874
    %v876 = vrot.slane %v713, %v875
    %878 = vbcast.lane.b32.xlu0 %v876, 256
    %v879 = vpop.permute.xlu0 %878
    %v880 = vsel %vm350, %v774, %v830
    %v881 = vsel %vm350, %v781, %v837
    %v882 = vsel %vm350, %v788, %v844
    %v883 = vsel %vm350, %v795, %v851
    %v884 = vsel %vm350, %v802, %v858
    %v885 = vsel %vm350, %v809, %v865
    %v886 = vsel %vm350, %v816, %v872
    %v887 = vsel %vm350, %v823, %v879
    %v888 = vmul.f32 %v880, %v241
    %v889 = vmul.f32 %v881, %v242
    %v890 = vmul.f32 %v882, %v243
    %v891 = vmul.f32 %v883, %v244
    %v892 = vmul.f32 %v884, %v245
    %v893 = vmul.f32 %v885, %v246
    %v894 = vmul.f32 %v886, %v247
    %v895 = vmul.f32 %v887, %v248
    %v896 = vsel %vm175, %v888, 0.0
    %v897 = vrot.slane %v896, 4
    %v898 = vadd.f32 %v896, %v897
    %v899 = vrot.slane %v898, 2
    %v900 = vadd.f32 %v898, %v899
    %v901 = vrot.slane %v900, 1
    %v902 = vadd.f32 %v900, %v901
    %v903 = vsel %vm175, %v889, 0.0
    %v904 = vrot.slane %v903, 4
    %v905 = vadd.f32 %v903, %v904
    %v906 = vrot.slane %v905, 2
    %v907 = vadd.f32 %v905, %v906
    %v908 = vrot.slane %v907, 1
    %v909 = vadd.f32 %v907, %v908
    %v910 = vsel %vm175, %v890, 0.0
    %v911 = vrot.slane %v910, 4
    %v912 = vadd.f32 %v910, %v911
    %v913 = vrot.slane %v912, 2
    %v914 = vadd.f32 %v912, %v913
    %v915 = vrot.slane %v914, 1
    %v916 = vadd.f32 %v914, %v915
    %v917 = vsel %vm175, %v891, 0.0
    %v918 = vrot.slane %v917, 4
    %v919 = vadd.f32 %v917, %v918
    %v920 = vrot.slane %v919, 2
    %v921 = vadd.f32 %v919, %v920
    %v922 = vrot.slane %v921, 1
    %v923 = vadd.f32 %v921, %v922
    %v924 = vsel %vm175, %v892, 0.0
    %v925 = vrot.slane %v924, 4
    %v926 = vadd.f32 %v924, %v925
    %v927 = vrot.slane %v926, 2
    %v928 = vadd.f32 %v926, %v927
    %v929 = vrot.slane %v928, 1
    %v930 = vadd.f32 %v928, %v929
    %v931 = vsel %vm175, %v893, 0.0
    %v932 = vrot.slane %v931, 4
    %v933 = vadd.f32 %v931, %v932
    %v934 = vrot.slane %v933, 2
    %v935 = vadd.f32 %v933, %v934
    %v936 = vrot.slane %v935, 1
    %v937 = vadd.f32 %v935, %v936
    %v938 = vsel %vm175, %v894, 0.0
    %v939 = vrot.slane %v938, 4
    %v940 = vadd.f32 %v938, %v939
    %v941 = vrot.slane %v940, 2
    %v942 = vadd.f32 %v940, %v941
    %v943 = vrot.slane %v942, 1
    %v944 = vadd.f32 %v942, %v943
    %v945 = vsel %vm175, %v895, 0.0
    %v946 = vrot.slane %v945, 4
    %v947 = vadd.f32 %v945, %v946
    %v948 = vrot.slane %v947, 2
    %v949 = vadd.f32 %v947, %v948
    %v950 = vrot.slane %v949, 1
    %v951 = vadd.f32 %v949, %v950
    %v960 = vsel %vm420, %v909, %v902
    %v961 = vsel %vm422, %v916, %v960
    %v962 = vsel %vm424, %v923, %v961
    %v963 = vsel %vm426, %v930, %v962
    %v964 = vsel %vm428, %v937, %v963
    %v965 = vsel %vm430, %v944, %v964
    %v966 = vsel %vm432, %v951, %v965
    %v968 = vadd.f32 %v767, %v966
    %s969 = scalar_lea.vmem [#allocation7], 8
    %v970 = vld [vmem:[%s969] sm:$0xff]
    %972 = vrot.lane.b32.xlu0 %v970, 32
    %v973 = vpop.permute.xlu0 %972
    %v975 = vadd.f32 %v217, %v973
    %s976 = scalar_lea.vmem [#allocation8], 8
    %v977 = vld [vmem:[%s976] sm:$0xff]
    %979 = vrot.lane.b32.xlu0 %v977, 64
    %v980 = vpop.permute.xlu0 %979
    %v982 = vadd.f32 %v217, %v980
    %s983 = scalar_lea.vmem [#allocation5], 8
    %v984 = vld [vmem:[%s983] sm:$0xff]
    %s985 = scalar_lea.vmem [#allocation10], 64
    %v986 = vld [vmem:[%s985] sm:$0xff]
    %v987 = vld [vmem:[%s985 + $0x8] sm:$0xff]
    %v988 = vld [vmem:[%s985 + $0x10] sm:$0xff]
    %v989 = vld [vmem:[%s985 + $0x18] sm:$0xff]
    %v990 = vld [vmem:[%s985 + $0x20] sm:$0xff]
    %v991 = vld [vmem:[%s985 + $0x28] sm:$0xff]
    %v992 = vld [vmem:[%s985 + $0x30] sm:$0xff]
    %v993 = vld [vmem:[%s985 + $0x38] sm:$0xff]
    %s994 = scalar_lea.vmem [#allocation11], 64
    %v995 = vld [vmem:[%s994] sm:$0xff]
    %v996 = vld [vmem:[%s994 + $0x8] sm:$0xff]
    %v997 = vld [vmem:[%s994 + $0x10] sm:$0xff]
    %v998 = vld [vmem:[%s994 + $0x18] sm:$0xff]
    %v999 = vld [vmem:[%s994 + $0x20] sm:$0xff]
    %v1000 = vld [vmem:[%s994 + $0x28] sm:$0xff]
    %v1001 = vld [vmem:[%s994 + $0x30] sm:$0xff]
    %v1002 = vld [vmem:[%s994 + $0x38] sm:$0xff]
    %v1003 = vpack.c.bf16 %v217, %v217
    %v1004 = vpack.c.bf16 %v975, %v975
    %v1005 = vpack.c.bf16 %v982, %v982
    %v1007 = vcombine.high %v217, %v217
    %v1009 = vunpack.c.l.s4 1966171168
    %v1010 = vunpack.c.0.s8 %v1009
    %v1011 = vlaneseq
    %v1012 = vshrl.u32 %v1011, 7
    %v1013 = vsub.s32 %v1010, %v1012
    %v1014 = vrot.slane %v217, %v1013
    %v1016 = vunpack.c.l.s4 1966171168
    %v1017 = vunpack.c.0.s8 %v1016
    %v1018 = vlaneseq
    %v1019 = vshrl.u32 %v1018, 7
    %v1020 = vsub.s32 %v1017, %v1019
    %v1021 = vrot.slane %v1007, %v1020
    %v1022 = vcombine.high %v1014, %v1014
    %v1023 = vcombine.high %v1021, %v1021
    %v1025 = vunpack.c.l.s4 1966171168
    %v1026 = vunpack.c.0.s8 %v1025
    %v1027 = vlaneseq
    %v1028 = vshrl.u32 %v1027, 7
    %v1029 = vsub.s32 %v1026, %v1028
    %v1030 = vrot.slane %v1014, %v1029
    %v1032 = vunpack.c.l.s4 1966171168
    %v1033 = vunpack.c.0.s8 %v1032
    %v1034 = vlaneseq
    %v1035 = vshrl.u32 %v1034, 7
    %v1036 = vsub.s32 %v1033, %v1035
    %v1037 = vrot.slane %v1021, %v1036
    %v1039 = vunpack.c.l.s4 1966171168
    %v1040 = vunpack.c.0.s8 %v1039
    %v1041 = vlaneseq
    %v1042 = vshrl.u32 %v1041, 7
    %v1043 = vsub.s32 %v1040, %v1042
    %v1044 = vrot.slane %v1022, %v1043
    %v1046 = vunpack.c.l.s4 1966171168
    %v1047 = vunpack.c.0.s8 %v1046
    %v1048 = vlaneseq
    %v1049 = vshrl.u32 %v1048, 7
    %v1050 = vsub.s32 %v1047, %v1049
    %v1051 = vrot.slane %v1023, %v1050
    %v1052 = vcombine.high %v1030, %v1030
    %v1053 = vcombine.high %v1037, %v1037
    %v1054 = vcombine.high %v1044, %v1044
    %v1055 = vcombine.high %v1051, %v1051
    %v1056 = vlaneseq
    %v1057 = vshrl.u32 %v1056, 7
    %v1058 = vsub.s32 0, %v1057
    %v1059 = vrot.slane %v1030, %v1058
    %v1060 = vlaneseq
    %v1061 = vshrl.u32 %v1060, 7
    %v1062 = vsub.s32 0, %v1061
    %v1063 = vrot.slane %v1044, %v1062
    %v1064 = vlaneseq
    %v1065 = vshrl.u32 %v1064, 7
    %v1066 = vsub.s32 0, %v1065
    %v1067 = vrot.slane %v1052, %v1066
    %v1068 = vlaneseq
    %v1069 = vshrl.u32 %v1068, 7
    %v1070 = vsub.s32 0, %v1069
    %v1071 = vrot.slane %v1054, %v1070
    %v1072 = vlaneseq
    %v1073 = vshrl.u32 %v1072, 7
    %v1074 = vsub.s32 0, %v1073
    %v1075 = vrot.slane %v1037, %v1074
    %v1076 = vlaneseq
    %v1077 = vshrl.u32 %v1076, 7
    %v1078 = vsub.s32 0, %v1077
    %v1079 = vrot.slane %v1051, %v1078
    %v1080 = vlaneseq
    %v1081 = vshrl.u32 %v1080, 7
    %v1082 = vsub.s32 0, %v1081
    %v1083 = vrot.slane %v1053, %v1082
    %v1084 = vlaneseq
    %v1085 = vshrl.u32 %v1084, 7
    %v1086 = vsub.s32 0, %v1085
    %v1087 = vrot.slane %v1055, %v1086
    %v1096 = vmul.f32 %v986, %v1059
    %v1097 = vmul.f32 %v987, %v1063
    %v1098 = vmul.f32 %v988, %v1067
    %v1099 = vmul.f32 %v989, %v1071
    %v1100 = vmul.f32 %v990, %v1075
    %v1101 = vmul.f32 %v991, %v1079
    %v1102 = vmul.f32 %v992, %v1083
    %v1103 = vmul.f32 %v993, %v1087
    %v1104 = vsel %vm350, %v1096, 0.0
    %1105 = vadd.xlane.f32.xlu0 %v1104
    %v1106 = vpop.xlane.xlu0 %1105
    %v1107 = vsel %vm350, %v1097, 0.0
    %1108 = vadd.xlane.f32.xlu0 %v1107
    %v1109 = vpop.xlane.xlu0 %1108
    %v1110 = vsel %vm350, %v1098, 0.0
    %1111 = vadd.xlane.f32.xlu0 %v1110
    %v1112 = vpop.xlane.xlu0 %1111
    %v1113 = vsel %vm350, %v1099, 0.0
    %1114 = vadd.xlane.f32.xlu0 %v1113
    %v1115 = vpop.xlane.xlu0 %1114
    %v1116 = vsel %vm350, %v1100, 0.0
    %1117 = vadd.xlane.f32.xlu0 %v1116
    %v1118 = vpop.xlane.xlu0 %1117
    %v1119 = vsel %vm350, %v1101, 0.0
    %1120 = vadd.xlane.f32.xlu0 %v1119
    %v1121 = vpop.xlane.xlu0 %1120
    %v1122 = vsel %vm350, %v1102, 0.0
    %1123 = vadd.xlane.f32.xlu0 %v1122
    %v1124 = vpop.xlane.xlu0 %1123
    %v1125 = vsel %vm350, %v1103, 0.0
    %1126 = vadd.xlane.f32.xlu0 %v1125
    %v1127 = vpop.xlane.xlu0 %1126
    %1129 = vrot.lane.b32.xlu0 %v1004, 96
    %v1130 = vpop.permute.xlu0 %1129
    %v1139 = vlaneseq
    %v1140 = vshrl.u32 %v1139, 7
    %v1141 = vsub.s32 %v387, %v1140
    %v1142 = vrot.slane %v1106, %v1141
    %v1143 = vlaneseq
    %v1144 = vshrl.u32 %v1143, 7
    %v1145 = vsub.s32 %v387, %v1144
    %v1146 = vrot.slane %v1109, %v1145
    %v1147 = vlaneseq
    %v1148 = vshrl.u32 %v1147, 7
    %v1149 = vsub.s32 %v387, %v1148
    %v1150 = vrot.slane %v1112, %v1149
    %v1151 = vlaneseq
    %v1152 = vshrl.u32 %v1151, 7
    %v1153 = vsub.s32 %v387, %v1152
    %v1154 = vrot.slane %v1115, %v1153
    %v1155 = vlaneseq
    %v1156 = vshrl.u32 %v1155, 7
    %v1157 = vsub.s32 %v387, %v1156
    %v1158 = vrot.slane %v1118, %v1157
    %v1159 = vlaneseq
    %v1160 = vshrl.u32 %v1159, 7
    %v1161 = vsub.s32 %v387, %v1160
    %v1162 = vrot.slane %v1121, %v1161
    %v1163 = vlaneseq
    %v1164 = vshrl.u32 %v1163, 7
    %v1165 = vsub.s32 %v387, %v1164
    %v1166 = vrot.slane %v1124, %v1165
    %v1167 = vlaneseq
    %v1168 = vshrl.u32 %v1167, 7
    %v1169 = vsub.s32 %v387, %v1168
    %v1170 = vrot.slane %v1127, %v1169
    %v1171 = vsel %vm420, %v1146, %v1142
    %v1172 = vsel %vm422, %v1150, %v1171
    %v1173 = vsel %vm424, %v1154, %v1172
    %v1174 = vsel %vm426, %v1158, %v1173
    %v1175 = vsel %vm428, %v1162, %v1174
    %v1176 = vsel %vm430, %v1166, %v1175
    %v1177 = vsel %vm432, %v1170, %v1176
    %v1180 = vsel %vm350, %v1003, 0
    %v1183 = vsel %vm350, %v1130, 0
    %1185 = vmatprep.subr.bf16.mxu0 0
    %1186 = vmatpush1.bf16.xpose.msra.mxu0 %v1183
    %1187 = vmatprep.subr.bf16.mxu0 0
    %1188 = vmatpush1.bf16.xpose.msra.mxu0 0
    %1189 = vmatprep.subr.bf16.mxu0 0
    %1190 = vmatpush1.bf16.xpose.msra.mxu0 0
    %1191 = vmatprep.subr.bf16.mxu0 0
    %1192 = vmatpush1.bf16.xpose.msra.mxu0 0
    %1193 = vmatprep.subr.bf16.mxu0 0
    %1194 = vmatpush1.bf16.xpose.msra.mxu0 0
    %1195 = vmatprep.subr.bf16.mxu0 0
    %1196 = vmatpush1.bf16.xpose.msra.mxu0 0
    %1197 = vmatprep.subr.bf16.mxu0 0
    %1198 = vmatpush1.bf16.xpose.msra.mxu0 0
    %1199 = vmatprep.subr.bf16.mxu0 0
    %1200 = vmatpush1.bf16.xpose.msra.mxu0 0
    %1201 = vmatprep.subr.bf16.mxu0 0
    %1202 = vmatpush1.bf16.xpose.msra.mxu0 0
    %1203 = vmatprep.subr.bf16.mxu0 0
    %1204 = vmatpush1.bf16.xpose.msra.mxu0 0
    %1205 = vmatprep.subr.bf16.mxu0 0
    %1206 = vmatpush1.bf16.xpose.msra.mxu0 0
    %1207 = vmatprep.subr.bf16.mxu0 0
    %1208 = vmatpush1.bf16.xpose.msra.mxu0 0
    %1209 = vmatprep.subr.bf16.mxu0 0
    %1210 = vmatpush1.bf16.xpose.msra.mxu0 0
    %1211 = vmatprep.subr.bf16.mxu0 0
    %1212 = vmatpush1.bf16.xpose.msra.mxu0 0
    %1213 = vmatprep.subr.bf16.mxu0 0
    %1214 = vmatpush1.bf16.xpose.msra.mxu0 0
    %1215 = vmatprep.subr.bf16.mxu0 0
    %1216 = vmatpush1.bf16.xpose.msra.mxu0 0
    %1217 = vmatprep.mubr.bf16.mxu0 0
    %1218 = vmatmul.mubr.bf16.gmra.mrb[0].mxu0 %v1180
    %v1219 = vpop.f32.mrb[0].mxu0
    %v1220 = vadd.f32 %v1177, %v1219
    %v1221 = vpop.f32.mrb[0].mxu0
    %v1222 = vpop.f32.mrb[0].mxu0
    %v1223 = vpop.f32.mrb[0].mxu0
    %1224 = vdwg.mxu0
    %v1225 = vmul.f32 %v1220, 0.25
    %v1226 = vadd.f32 %v1225, %v984
    %v1227 = vsel %vm483, %v1226, -inf
    %1228 = vmax.xlane.f32.xlu0 %v1227
    %v1229 = vpop.xlane.xlu0 %1228
    %v1230 = vsub.f32 %v1226, %v1229
    %v1231 = vmul.f32 %v1230, 1.442695
    %v1232 = vpow.pop %v1231
    %v1233 = vsel %vm483, %v1232, 0.0
    %1234 = vadd.xlane.f32.xlu0 %v1233
    %v1235 = vpop.xlane.xlu0 %1234
    %v1236 = vrcp.pop %v1235
    %v1237 = vmul.f32 %v1232, %v1236
    %v1238 = vpack.c.bf16 %v1237, %v1237
    %1240 = vrot.lane.b32.xlu0 %v1005, 64
    %v1241 = vpop.permute.xlu0 %1240
    %v1243 = vsel %vm483, %v1238, 0
    %v1246 = vsel %vm502, %v1241, 0
    %1248 = vmatprep.subr.bf16.mxu0 0
    %1249 = vmatpush1.bf16.msra.mxu0 %v1246
    %1250 = vmatprep.subr.bf16.mxu0 0
    %1251 = vmatpush1.bf16.msra.mxu0 0
    %1252 = vmatprep.subr.bf16.mxu0 0
    %1253 = vmatpush1.bf16.msra.mxu0 0
    %1254 = vmatprep.subr.bf16.mxu0 0
    %1255 = vmatpush1.bf16.msra.mxu0 0
    %1256 = vmatprep.subr.bf16.mxu0 0
    %1257 = vmatpush1.bf16.msra.mxu0 0
    %1258 = vmatprep.subr.bf16.mxu0 0
    %1259 = vmatpush1.bf16.msra.mxu0 0
    %1260 = vmatprep.subr.bf16.mxu0 0
    %1261 = vmatpush1.bf16.msra.mxu0 0
    %1262 = vmatprep.subr.bf16.mxu0 0
    %1263 = vmatpush1.bf16.msra.mxu0 0
    %1264 = vmatprep.subr.bf16.mxu0 0
    %1265 = vmatpush1.bf16.msra.mxu0 0
    %1266 = vmatprep.subr.bf16.mxu0 0
    %1267 = vmatpush1.bf16.msra.mxu0 0
    %1268 = vmatprep.subr.bf16.mxu0 0
    %1269 = vmatpush1.bf16.msra.mxu0 0
    %1270 = vmatprep.subr.bf16.mxu0 0
    %1271 = vmatpush1.bf16.msra.mxu0 0
    %1272 = vmatprep.subr.bf16.mxu0 0
    %1273 = vmatpush1.bf16.msra.mxu0 0
    %1274 = vmatprep.subr.bf16.mxu0 0
    %1275 = vmatpush1.bf16.msra.mxu0 0
    %1276 = vmatprep.subr.bf16.mxu0 0
    %1277 = vmatpush1.bf16.msra.mxu0 0
    %1278 = vmatprep.subr.bf16.mxu0 0
    %1279 = vmatpush1.bf16.msra.mxu0 0
    %1280 = vmatprep.mubr.bf16.mxu0 0
    %1281 = vmatmul.mubr.bf16.gmra.mrb[0].mxu0 %v1243
    %v1282 = vpop.f32.mrb[0].mxu0
    %v1283 = vadd.f32 0.0, %v1282
    %v1284 = vpop.f32.mrb[0].mxu0
    %v1285 = vpop.f32.mrb[0].mxu0
    %v1286 = vpop.f32.mrb[0].mxu0
    %1287 = vdwg.mxu0
    %1296 = vrot.lane.b32.xlu0 %v1096, 112
    %v1297 = vpop.permute.xlu0 %1296
    %1298 = vrot.lane.b32.xlu0 %v1097, 112
    %v1299 = vpop.permute.xlu0 %1298
    %1300 = vrot.lane.b32.xlu0 %v1098, 112
    %v1301 = vpop.permute.xlu0 %1300
    %1302 = vrot.lane.b32.xlu0 %v1099, 112
    %v1303 = vpop.permute.xlu0 %1302
    %1304 = vrot.lane.b32.xlu0 %v1100, 112
    %v1305 = vpop.permute.xlu0 %1304
    %1306 = vrot.lane.b32.xlu0 %v1101, 112
    %v1307 = vpop.permute.xlu0 %1306
    %1308 = vrot.lane.b32.xlu0 %v1102, 112
    %v1309 = vpop.permute.xlu0 %1308
    %1310 = vrot.lane.b32.xlu0 %v1103, 112
    %v1311 = vpop.permute.xlu0 %1310
    %v1320 = vsel %vm350, %v1297, 0.0
    %1321 = vadd.xlane.f32.xlu0 %v1320
    %v1322 = vpop.xlane.xlu0 %1321
    %v1323 = vsel %vm350, %v1299, 0.0
    %1324 = vadd.xlane.f32.xlu0 %v1323
    %v1325 = vpop.xlane.xlu0 %1324
    %v1326 = vsel %vm350, %v1301, 0.0
    %1327 = vadd.xlane.f32.xlu0 %v1326
    %v1328 = vpop.xlane.xlu0 %1327
    %v1329 = vsel %vm350, %v1303, 0.0
    %1330 = vadd.xlane.f32.xlu0 %v1329
    %v1331 = vpop.xlane.xlu0 %1330
    %v1332 = vsel %vm350, %v1305, 0.0
    %1333 = vadd.xlane.f32.xlu0 %v1332
    %v1334 = vpop.xlane.xlu0 %1333
    %v1335 = vsel %vm350, %v1307, 0.0
    %1336 = vadd.xlane.f32.xlu0 %v1335
    %v1337 = vpop.xlane.xlu0 %1336
    %v1338 = vsel %vm350, %v1309, 0.0
    %1339 = vadd.xlane.f32.xlu0 %v1338
    %v1340 = vpop.xlane.xlu0 %1339
    %v1341 = vsel %vm350, %v1311, 0.0
    %1342 = vadd.xlane.f32.xlu0 %v1341
    %v1343 = vpop.xlane.xlu0 %1342
    %1345 = vrot.lane.b32.xlu0 %v1003, 112
    %v1346 = vpop.permute.xlu0 %1345
    %1347 = vrot.lane.b32.xlu0 %v1004, 80
    %v1348 = vpop.permute.xlu0 %1347
    %v1357 = vlaneseq
    %v1358 = vshrl.u32 %v1357, 7
    %v1359 = vsub.s32 %v387, %v1358
    %v1360 = vrot.slane %v1322, %v1359
    %v1361 = vlaneseq
    %v1362 = vshrl.u32 %v1361, 7
    %v1363 = vsub.s32 %v387, %v1362
    %v1364 = vrot.slane %v1325, %v1363
    %v1365 = vlaneseq
    %v1366 = vshrl.u32 %v1365, 7
    %v1367 = vsub.s32 %v387, %v1366
    %v1368 = vrot.slane %v1328, %v1367
    %v1369 = vlaneseq
    %v1370 = vshrl.u32 %v1369, 7
    %v1371 = vsub.s32 %v387, %v1370
    %v1372 = vrot.slane %v1331, %v1371
    %v1373 = vlaneseq
    %v1374 = vshrl.u32 %v1373, 7
    %v1375 = vsub.s32 %v387, %v1374
    %v1376 = vrot.slane %v1334, %v1375
    %v1377 = vlaneseq
    %v1378 = vshrl.u32 %v1377, 7
    %v1379 = vsub.s32 %v387, %v1378
    %v1380 = vrot.slane %v1337, %v1379
    %v1381 = vlaneseq
    %v1382 = vshrl.u32 %v1381, 7
    %v1383 = vsub.s32 %v387, %v1382
    %v1384 = vrot.slane %v1340, %v1383
    %v1385 = vlaneseq
    %v1386 = vshrl.u32 %v1385, 7
    %v1387 = vsub.s32 %v387, %v1386
    %v1388 = vrot.slane %v1343, %v1387
    %v1389 = vsel %vm420, %v1364, %v1360
    %v1390 = vsel %vm422, %v1368, %v1389
    %v1391 = vsel %vm424, %v1372, %v1390
    %v1392 = vsel %vm426, %v1376, %v1391
    %v1393 = vsel %vm428, %v1380, %v1392
    %v1394 = vsel %vm430, %v1384, %v1393
    %v1395 = vsel %vm432, %v1388, %v1394
    %v1398 = vsel %vm350, %v1346, 0
    %v1401 = vsel %vm350, %v1348, 0
    %1403 = vmatprep.subr.bf16.mxu0 0
    %1404 = vmatpush1.bf16.xpose.msra.mxu0 %v1401
    %1405 = vmatprep.subr.bf16.mxu0 0
    %1406 = vmatpush1.bf16.xpose.msra.mxu0 0
    %1407 = vmatprep.subr.bf16.mxu0 0
    %1408 = vmatpush1.bf16.xpose.msra.mxu0 0
    %1409 = vmatprep.subr.bf16.mxu0 0
    %1410 = vmatpush1.bf16.xpose.msra.mxu0 0
    %1411 = vmatprep.subr.bf16.mxu0 0
    %1412 = vmatpush1.bf16.xpose.msra.mxu0 0
    %1413 = vmatprep.subr.bf16.mxu0 0
    %1414 = vmatpush1.bf16.xpose.msra.mxu0 0
    %1415 = vmatprep.subr.bf16.mxu0 0
    %1416 = vmatpush1.bf16.xpose.msra.mxu0 0
    %1417 = vmatprep.subr.bf16.mxu0 0
    %1418 = vmatpush1.bf16.xpose.msra.mxu0 0
    %1419 = vmatprep.subr.bf16.mxu0 0
    %1420 = vmatpush1.bf16.xpose.msra.mxu0 0
    %1421 = vmatprep.subr.bf16.mxu0 0
    %1422 = vmatpush1.bf16.xpose.msra.mxu0 0
    %1423 = vmatprep.subr.bf16.mxu0 0
    %1424 = vmatpush1.bf16.xpose.msra.mxu0 0
    %1425 = vmatprep.subr.bf16.mxu0 0
    %1426 = vmatpush1.bf16.xpose.msra.mxu0 0
    %1427 = vmatprep.subr.bf16.mxu0 0
    %1428 = vmatpush1.bf16.xpose.msra.mxu0 0
    %1429 = vmatprep.subr.bf16.mxu0 0
    %1430 = vmatpush1.bf16.xpose.msra.mxu0 0
    %1431 = vmatprep.subr.bf16.mxu0 0
    %1432 = vmatpush1.bf16.xpose.msra.mxu0 0
    %1433 = vmatprep.subr.bf16.mxu0 0
    %1434 = vmatpush1.bf16.xpose.msra.mxu0 0
    %1435 = vmatprep.mubr.bf16.mxu0 0
    %1436 = vmatmul.mubr.bf16.gmra.mrb[0].mxu0 %v1398
    %v1437 = vpop.f32.mrb[0].mxu0
    %v1438 = vadd.f32 %v1395, %v1437
    %v1439 = vpop.f32.mrb[0].mxu0
    %v1440 = vpop.f32.mrb[0].mxu0
    %v1441 = vpop.f32.mrb[0].mxu0
    %1442 = vdwg.mxu0
    %v1443 = vmul.f32 %v1438, 0.25
    %v1444 = vadd.f32 %v1443, %v984
    %v1445 = vsel %vm483, %v1444, -inf
    %1446 = vmax.xlane.f32.xlu0 %v1445
    %v1447 = vpop.xlane.xlu0 %1446
    %v1448 = vsub.f32 %v1444, %v1447
    %v1449 = vmul.f32 %v1448, 1.442695
    %v1450 = vpow.pop %v1449
    %v1451 = vsel %vm483, %v1450, 0.0
    %1452 = vadd.xlane.f32.xlu0 %v1451
    %v1453 = vpop.xlane.xlu0 %1452
    %v1454 = vrcp.pop %v1453
    %v1455 = vmul.f32 %v1450, %v1454
    %v1456 = vpack.c.bf16 %v1455, %v1455
    %1457 = vrot.lane.b32.xlu0 %v1005, 48
    %v1458 = vpop.permute.xlu0 %1457
    %v1460 = vsel %vm483, %v1456, 0
    %v1463 = vsel %vm502, %v1458, 0
    %1465 = vmatprep.subr.bf16.mxu0 0
    %1466 = vmatpush1.bf16.msra.mxu0 %v1463
    %1467 = vmatprep.subr.bf16.mxu0 0
    %1468 = vmatpush1.bf16.msra.mxu0 0
    %1469 = vmatprep.subr.bf16.mxu0 0
    %1470 = vmatpush1.bf16.msra.mxu0 0
    %1471 = vmatprep.subr.bf16.mxu0 0
    %1472 = vmatpush1.bf16.msra.mxu0 0
    %1473 = vmatprep.subr.bf16.mxu0 0
    %1474 = vmatpush1.bf16.msra.mxu0 0
    %1475 = vmatprep.subr.bf16.mxu0 0
    %1476 = vmatpush1.bf16.msra.mxu0 0
    %1477 = vmatprep.subr.bf16.mxu0 0
    %1478 = vmatpush1.bf16.msra.mxu0 0
    %1479 = vmatprep.subr.bf16.mxu0 0
    %1480 = vmatpush1.bf16.msra.mxu0 0
    %1481 = vmatprep.subr.bf16.mxu0 0
    %1482 = vmatpush1.bf16.msra.mxu0 0
    %1483 = vmatprep.subr.bf16.mxu0 0
    %1484 = vmatpush1.bf16.msra.mxu0 0
    %1485 = vmatprep.subr.bf16.mxu0 0
    %1486 = vmatpush1.bf16.msra.mxu0 0
    %1487 = vmatprep.subr.bf16.mxu0 0
    %1488 = vmatpush1.bf16.msra.mxu0 0
    %1489 = vmatprep.subr.bf16.mxu0 0
    %1490 = vmatpush1.bf16.msra.mxu0 0
    %1491 = vmatprep.subr.bf16.mxu0 0
    %1492 = vmatpush1.bf16.msra.mxu0 0
    %1493 = vmatprep.subr.bf16.mxu0 0
    %1494 = vmatpush1.bf16.msra.mxu0 0
    %1495 = vmatprep.subr.bf16.mxu0 0
    %1496 = vmatpush1.bf16.msra.mxu0 0
    %1497 = vmatprep.mubr.bf16.mxu0 0
    %1498 = vmatmul.mubr.bf16.gmra.mrb[0].mxu0 %v1460
    %v1499 = vpop.f32.mrb[0].mxu0
    %v1500 = vadd.f32 0.0, %v1499
    %v1501 = vpop.f32.mrb[0].mxu0
    %v1502 = vpop.f32.mrb[0].mxu0
    %v1503 = vpop.f32.mrb[0].mxu0
    %1504 = vdwg.mxu0
    %1506 = vrot.lane.b32.xlu0 %v1500, 16
    %v1507 = vpop.permute.xlu0 %1506
    %v1509 = vsel %vm350, %v1283, %v1507
    %v1510 = vlaneseq
    %v1511 = vshrl.u32 %v1510, 7
    %v1512 = vsub.s32 0, %v1511
    %v1513 = vrot.slane %v1237, %v1512
    %1515 = vbcast.lane.b32.xlu0 %v1513, 256
    %v1516 = vpop.permute.xlu0 %1515
    %v1517 = vlaneseq
    %v1518 = vshrl.u32 %v1517, 7
    %v1519 = vsub.s32 1, %v1518
    %v1520 = vrot.slane %v1237, %v1519
    %1522 = vbcast.lane.b32.xlu0 %v1520, 256
    %v1523 = vpop.permute.xlu0 %1522
    %v1524 = vlaneseq
    %v1525 = vshrl.u32 %v1524, 7
    %v1526 = vsub.s32 2, %v1525
    %v1527 = vrot.slane %v1237, %v1526
    %1529 = vbcast.lane.b32.xlu0 %v1527, 256
    %v1530 = vpop.permute.xlu0 %1529
    %v1531 = vlaneseq
    %v1532 = vshrl.u32 %v1531, 7
    %v1533 = vsub.s32 3, %v1532
    %v1534 = vrot.slane %v1237, %v1533
    %1536 = vbcast.lane.b32.xlu0 %v1534, 256
    %v1537 = vpop.permute.xlu0 %1536
    %v1538 = vlaneseq
    %v1539 = vshrl.u32 %v1538, 7
    %v1540 = vsub.s32 4, %v1539
    %v1541 = vrot.slane %v1237, %v1540
    %1543 = vbcast.lane.b32.xlu0 %v1541, 256
    %v1544 = vpop.permute.xlu0 %1543
    %v1545 = vlaneseq
    %v1546 = vshrl.u32 %v1545, 7
    %v1547 = vsub.s32 5, %v1546
    %v1548 = vrot.slane %v1237, %v1547
    %1550 = vbcast.lane.b32.xlu0 %v1548, 256
    %v1551 = vpop.permute.xlu0 %1550
    %v1552 = vlaneseq
    %v1553 = vshrl.u32 %v1552, 7
    %v1554 = vsub.s32 6, %v1553
    %v1555 = vrot.slane %v1237, %v1554
    %1557 = vbcast.lane.b32.xlu0 %v1555, 256
    %v1558 = vpop.permute.xlu0 %1557
    %v1559 = vlaneseq
    %v1560 = vshrl.u32 %v1559, 7
    %v1561 = vsub.s32 7, %v1560
    %v1562 = vrot.slane %v1237, %v1561
    %1564 = vbcast.lane.b32.xlu0 %v1562, 256
    %v1565 = vpop.permute.xlu0 %1564
    %v1566 = vlaneseq
    %v1567 = vshrl.u32 %v1566, 7
    %v1568 = vsub.s32 0, %v1567
    %v1569 = vrot.slane %v1455, %v1568
    %1571 = vbcast.lane.b32.xlu0 %v1569, 256
    %v1572 = vpop.permute.xlu0 %1571
    %v1573 = vlaneseq
    %v1574 = vshrl.u32 %v1573, 7
    %v1575 = vsub.s32 1, %v1574
    %v1576 = vrot.slane %v1455, %v1575
    %1578 = vbcast.lane.b32.xlu0 %v1576, 256
    %v1579 = vpop.permute.xlu0 %1578
    %v1580 = vlaneseq
    %v1581 = vshrl.u32 %v1580, 7
    %v1582 = vsub.s32 2, %v1581
    %v1583 = vrot.slane %v1455, %v1582
    %1585 = vbcast.lane.b32.xlu0 %v1583, 256
    %v1586 = vpop.permute.xlu0 %1585
    %v1587 = vlaneseq
    %v1588 = vshrl.u32 %v1587, 7
    %v1589 = vsub.s32 3, %v1588
    %v1590 = vrot.slane %v1455, %v1589
    %1592 = vbcast.lane.b32.xlu0 %v1590, 256
    %v1593 = vpop.permute.xlu0 %1592
    %v1594 = vlaneseq
    %v1595 = vshrl.u32 %v1594, 7
    %v1596 = vsub.s32 4, %v1595
    %v1597 = vrot.slane %v1455, %v1596
    %1599 = vbcast.lane.b32.xlu0 %v1597, 256
    %v1600 = vpop.permute.xlu0 %1599
    %v1601 = vlaneseq
    %v1602 = vshrl.u32 %v1601, 7
    %v1603 = vsub.s32 5, %v1602
    %v1604 = vrot.slane %v1455, %v1603
    %1606 = vbcast.lane.b32.xlu0 %v1604, 256
    %v1607 = vpop.permute.xlu0 %1606
    %v1608 = vlaneseq
    %v1609 = vshrl.u32 %v1608, 7
    %v1610 = vsub.s32 6, %v1609
    %v1611 = vrot.slane %v1455, %v1610
    %1613 = vbcast.lane.b32.xlu0 %v1611, 256
    %v1614 = vpop.permute.xlu0 %1613
    %v1615 = vlaneseq
    %v1616 = vshrl.u32 %v1615, 7
    %v1617 = vsub.s32 7, %v1616
    %v1618 = vrot.slane %v1455, %v1617
    %1620 = vbcast.lane.b32.xlu0 %v1618, 256
    %v1621 = vpop.permute.xlu0 %1620
    %v1622 = vsel %vm350, %v1516, %v1572
    %v1623 = vsel %vm350, %v1523, %v1579
    %v1624 = vsel %vm350, %v1530, %v1586
    %v1625 = vsel %vm350, %v1537, %v1593
    %v1626 = vsel %vm350, %v1544, %v1600
    %v1627 = vsel %vm350, %v1551, %v1607
    %v1628 = vsel %vm350, %v1558, %v1614
    %v1629 = vsel %vm350, %v1565, %v1621
    %v1630 = vmul.f32 %v1622, %v995
    %v1631 = vmul.f32 %v1623, %v996
    %v1632 = vmul.f32 %v1624, %v997
    %v1633 = vmul.f32 %v1625, %v998
    %v1634 = vmul.f32 %v1626, %v999
    %v1635 = vmul.f32 %v1627, %v1000
    %v1636 = vmul.f32 %v1628, %v1001
    %v1637 = vmul.f32 %v1629, %v1002
    %v1638 = vsel %vm175, %v1630, 0.0
    %v1639 = vrot.slane %v1638, 4
    %v1640 = vadd.f32 %v1638, %v1639
    %v1641 = vrot.slane %v1640, 2
    %v1642 = vadd.f32 %v1640, %v1641
    %v1643 = vrot.slane %v1642, 1
    %v1644 = vadd.f32 %v1642, %v1643
    %v1645 = vsel %vm175, %v1631, 0.0
    %v1646 = vrot.slane %v1645, 4
    %v1647 = vadd.f32 %v1645, %v1646
    %v1648 = vrot.slane %v1647, 2
    %v1649 = vadd.f32 %v1647, %v1648
    %v1650 = vrot.slane %v1649, 1
    %v1651 = vadd.f32 %v1649, %v1650
    %v1652 = vsel %vm175, %v1632, 0.0
    %v1653 = vrot.slane %v1652, 4
    %v1654 = vadd.f32 %v1652, %v1653
    %v1655 = vrot.slane %v1654, 2
    %v1656 = vadd.f32 %v1654, %v1655
    %v1657 = vrot.slane %v1656, 1
    %v1658 = vadd.f32 %v1656, %v1657
    %v1659 = vsel %vm175, %v1633, 0.0
    %v1660 = vrot.slane %v1659, 4
    %v1661 = vadd.f32 %v1659, %v1660
    %v1662 = vrot.slane %v1661, 2
    %v1663 = vadd.f32 %v1661, %v1662
    %v1664 = vrot.slane %v1663, 1
    %v1665 = vadd.f32 %v1663, %v1664
    %v1666 = vsel %vm175, %v1634, 0.0
    %v1667 = vrot.slane %v1666, 4
    %v1668 = vadd.f32 %v1666, %v1667
    %v1669 = vrot.slane %v1668, 2
    %v1670 = vadd.f32 %v1668, %v1669
    %v1671 = vrot.slane %v1670, 1
    %v1672 = vadd.f32 %v1670, %v1671
    %v1673 = vsel %vm175, %v1635, 0.0
    %v1674 = vrot.slane %v1673, 4
    %v1675 = vadd.f32 %v1673, %v1674
    %v1676 = vrot.slane %v1675, 2
    %v1677 = vadd.f32 %v1675, %v1676
    %v1678 = vrot.slane %v1677, 1
    %v1679 = vadd.f32 %v1677, %v1678
    %v1680 = vsel %vm175, %v1636, 0.0
    %v1681 = vrot.slane %v1680, 4
    %v1682 = vadd.f32 %v1680, %v1681
    %v1683 = vrot.slane %v1682, 2
    %v1684 = vadd.f32 %v1682, %v1683
    %v1685 = vrot.slane %v1684, 1
    %v1686 = vadd.f32 %v1684, %v1685
    %v1687 = vsel %vm175, %v1637, 0.0
    %v1688 = vrot.slane %v1687, 4
    %v1689 = vadd.f32 %v1687, %v1688
    %v1690 = vrot.slane %v1689, 2
    %v1691 = vadd.f32 %v1689, %v1690
    %v1692 = vrot.slane %v1691, 1
    %v1693 = vadd.f32 %v1691, %v1692
    %v1702 = vsel %vm420, %v1651, %v1644
    %v1703 = vsel %vm422, %v1658, %v1702
    %v1704 = vsel %vm424, %v1665, %v1703
    %v1705 = vsel %vm426, %v1672, %v1704
    %v1706 = vsel %vm428, %v1679, %v1705
    %v1707 = vsel %vm430, %v1686, %v1706
    %v1708 = vsel %vm432, %v1693, %v1707
    %v1710 = vadd.f32 %v1509, %v1708
    %v1711 = vpack.c.bf16 %v1710, %v968
    %v1712 = vlaneseq
    %v1713 = vshrl.u32 %v1712, 7
    %v1714 = vsub.s32 1, %v1713
    %v1715 = vrot.slane %v157, %v1714
    %v1720 = vunpack.c.l.b16 %v141
    %v1721 = vunpack.c.l.b16 %v142
    %v1722 = vunpack.c.l.b16 %v143
    %v1723 = vunpack.c.l.b16 %v144
    %v1724 = vpack.c.b16 %v1721, %v1720
    %v1725 = vpack.c.b16 %v1723, %v1722
    %v1729 = vsel %vm175, %v1711, 0
    %1731 = vmatprep.subr.bf16.mxu0 0
    %1732 = vmatpush1.bf16.msra.mxu0 %v1724
    %1733 = vmatprep.subr.bf16.mxu0 0
    %1734 = vmatpush1.bf16.msra.mxu0 %v1725
    %1735 = vmatprep.subr.bf16.mxu0 0
    %1736 = vmatpush1.bf16.msra.mxu0 0
    %1737 = vmatprep.subr.bf16.mxu0 0
    %1738 = vmatpush1.bf16.msra.mxu0 0
    %1739 = vmatprep.subr.bf16.mxu0 0
    %1740 = vmatpush1.bf16.msra.mxu0 0
    %1741 = vmatprep.subr.bf16.mxu0 0
    %1742 = vmatpush1.bf16.msra.mxu0 0
    %1743 = vmatprep.subr.bf16.mxu0 0
    %1744 = vmatpush1.bf16.msra.mxu0 0
    %1745 = vmatprep.subr.bf16.mxu0 0
    %1746 = vmatpush1.bf16.msra.mxu0 0
    %1747 = vmatprep.subr.bf16.mxu0 0
    %1748 = vmatpush1.bf16.msra.mxu0 0
    %1749 = vmatprep.subr.bf16.mxu0 0
    %1750 = vmatpush1.bf16.msra.mxu0 0
    %1751 = vmatprep.subr.bf16.mxu0 0
    %1752 = vmatpush1.bf16.msra.mxu0 0
    %1753 = vmatprep.subr.bf16.mxu0 0
    %1754 = vmatpush1.bf16.msra.mxu0 0
    %1755 = vmatprep.subr.bf16.mxu0 0
    %1756 = vmatpush1.bf16.msra.mxu0 0
    %1757 = vmatprep.subr.bf16.mxu0 0
    %1758 = vmatpush1.bf16.msra.mxu0 0
    %1759 = vmatprep.subr.bf16.mxu0 0
    %1760 = vmatpush1.bf16.msra.mxu0 0
    %1761 = vmatprep.subr.bf16.mxu0 0
    %1762 = vmatpush1.bf16.msra.mxu0 0
    %1763 = vmatprep.mubr.bf16.mxu0 0
    %1764 = vmatmul.mubr.bf16.gmra.mrb[0].mxu0 %v1729
    %v1765 = vpop.f32.mrb[0].mxu0
    %v1766 = vadd.f32 %v1715, %v1765
    %v1767 = vpop.f32.mrb[0].mxu0
    %v1768 = vpop.f32.mrb[0].mxu0
    %v1769 = vadd.f32 %v1715, %v1768
    %v1770 = vpop.f32.mrb[0].mxu0
    %1771 = vdwg.mxu0
    %v1772 = vadd.f32 %v1766, %v135
    %v1773 = vadd.f32 %v1769, %v136
    %v1774 = vsel %vm175, %v1772, 0.0
    %1775 = vadd.xlane.f32.xlu0 %v1774
    %v1776 = vpop.xlane.xlu0 %1775
    %v1777 = vsel %vm175, %v1773, 0.0
    %1778 = vadd.xlane.f32.xlu0 %v1777
    %v1779 = vpop.xlane.xlu0 %1778
    %v1780 = vrcp.pop 32.0
    %v1781 = vmul.f32 %v1776, %v1780
    %v1782 = vmul.f32 %v1779, %v1780
    %v1783 = vsub.f32 %v1772, %v1781
    %v1784 = vsub.f32 %v1773, %v1782
    %v1785 = vmul.f32 %v1783, %v1783
    %v1786 = vmul.f32 %v1784, %v1784
    %v1787 = vsel %vm175, %v1785, 0.0
    %1788 = vadd.xlane.f32.xlu0 %v1787
    %v1789 = vpop.xlane.xlu0 %1788
    %v1790 = vsel %vm175, %v1786, 0.0
    %1791 = vadd.xlane.f32.xlu0 %v1790
    %v1792 = vpop.xlane.xlu0 %1791
    %v1793 = vmul.f32 %v1789, %v1780
    %v1794 = vmul.f32 %v1792, %v1780
    %v1795 = vadd.f32 %v1793, 1e-12
    %v1796 = vadd.f32 %v1794, 1e-12
    %v1797 = vrsqrt.pop %v1795
    %v1798 = vrsqrt.pop %v1796
    %v1799 = vmul.f32 %v1783, %v1797
    %v1800 = vmul.f32 %v1784, %v1798
    %v1801 = vlaneseq
    %v1802 = vshrl.u32 %v1801, 7
    %v1803 = vsub.s32 2, %v1802
    %v1804 = vrot.slane %v157, %v1803
    %v1805 = vmul.f32 %v1799, %v1804
    %v1806 = vmul.f32 %v1800, %v1804
    %v1807 = vlaneseq
    %v1808 = vshrl.u32 %v1807, 7
    %v1809 = vsub.s32 3, %v1808
    %v1810 = vrot.slane %v157, %v1809
    %v1811 = vadd.f32 %v1805, %v1810
    %v1812 = vadd.f32 %v1806, %v1810
    %v1813 = vpack.c.bf16 %v1812, %v1811
    %v1814 = vlaneseq
    %v1815 = vshrl.u32 %v1814, 7
    %v1816 = vsub.s32 4, %v1815
    %v1817 = vrot.slane %v157, %v1816
    %v1822 = vunpack.c.l.b16 %v145
    %v1823 = vunpack.c.l.b16 %v146
    %v1824 = vunpack.c.l.b16 %v147
    %v1825 = vunpack.c.l.b16 %v148
    %v1826 = vpack.c.b16 %v1823, %v1822
    %v1827 = vpack.c.b16 %v1825, %v1824
    %v1831 = vsel %vm175, %v1813, 0
    %1833 = vmatprep.subr.bf16.mxu0 0
    %1834 = vmatpush1.bf16.msra.mxu0 %v1826
    %1835 = vmatprep.subr.bf16.mxu0 0
    %1836 = vmatpush1.bf16.msra.mxu0 %v1827
    %1837 = vmatprep.subr.bf16.mxu0 0
    %1838 = vmatpush1.bf16.msra.mxu0 0
    %1839 = vmatprep.subr.bf16.mxu0 0
    %1840 = vmatpush1.bf16.msra.mxu0 0
    %1841 = vmatprep.subr.bf16.mxu0 0
    %1842 = vmatpush1.bf16.msra.mxu0 0
    %1843 = vmatprep.subr.bf16.mxu0 0
    %1844 = vmatpush1.bf16.msra.mxu0 0
    %1845 = vmatprep.subr.bf16.mxu0 0
    %1846 = vmatpush1.bf16.msra.mxu0 0
    %1847 = vmatprep.subr.bf16.mxu0 0
    %1848 = vmatpush1.bf16.msra.mxu0 0
    %1849 = vmatprep.subr.bf16.mxu0 0
    %1850 = vmatpush1.bf16.msra.mxu0 0
    %1851 = vmatprep.subr.bf16.mxu0 0
    %1852 = vmatpush1.bf16.msra.mxu0 0
    %1853 = vmatprep.subr.bf16.mxu0 0
    %1854 = vmatpush1.bf16.msra.mxu0 0
    %1855 = vmatprep.subr.bf16.mxu0 0
    %1856 = vmatpush1.bf16.msra.mxu0 0
    %1857 = vmatprep.subr.bf16.mxu0 0
    %1858 = vmatpush1.bf16.msra.mxu0 0
    %1859 = vmatprep.subr.bf16.mxu0 0
    %1860 = vmatpush1.bf16.msra.mxu0 0
    %1861 = vmatprep.subr.bf16.mxu0 0
    %1862 = vmatpush1.bf16.msra.mxu0 0
    %1863 = vmatprep.subr.bf16.mxu0 0
    %1864 = vmatpush1.bf16.msra.mxu0 0
    %1865 = vmatprep.mubr.bf16.mxu0 0
    %1866 = vmatmul.mubr.bf16.gmra.mrb[0].mxu0 %v1831
    %v1867 = vpop.f32.mrb[0].mxu0
    %v1868 = vadd.f32 %v1817, %v1867
    %v1869 = vpop.f32.mrb[0].mxu0
    %v1870 = vpop.f32.mrb[0].mxu0
    %v1871 = vadd.f32 %v1817, %v1870
    %v1872 = vpop.f32.mrb[0].mxu0
    %1873 = vdwg.mxu0
    %v1874 = vmul.f32 %v1868, 0.5
    %v1875 = vmul.f32 %v1871, 0.5
    %v1876 = vrcp.pop 1.4142135
    %v1877 = vmul.f32 %v1868, %v1876
    %v1878 = vmul.f32 %v1871, %v1876
    %v1879 = verf.f32.pop %v1877
    %v1880 = verf.f32.pop %v1878
    %v1881 = vadd.f32 %v1879, 1.0
    %v1882 = vadd.f32 %v1880, 1.0
    %v1883 = vmul.f32 %v1874, %v1881
    %v1884 = vmul.f32 %v1875, %v1882
    %v1885 = vpack.c.bf16 %v1884, %v1883
    %v1886 = vlaneseq
    %v1887 = vshrl.u32 %v1886, 7
    %v1888 = vsub.s32 5, %v1887
    %v1889 = vrot.slane %v157, %v1888
    %v1898 = vunpack.c.l.b16 %v149
    %v1899 = vunpack.c.l.b16 %v150
    %v1900 = vunpack.c.l.b16 %v151
    %v1901 = vunpack.c.l.b16 %v152
    %v1902 = vunpack.c.l.b16 %v153
    %v1903 = vunpack.c.l.b16 %v154
    %v1904 = vunpack.c.l.b16 %v155
    %v1905 = vunpack.c.l.b16 %v156
    %v1906 = vpack.c.b16 %v1899, %v1898
    %v1907 = vpack.c.b16 %v1901, %v1900
    %v1908 = vpack.c.b16 %v1903, %v1902
    %v1909 = vpack.c.b16 %v1905, %v1904
    %vm1914 = vcmask 523264
    %v1916 = vsel %vm1914, %v1885, 0
    %1918 = vmatprep.subr.bf16.mxu0 0
    %1919 = vmatpush1.bf16.msra.mxu0 %v1906
    %1920 = vmatprep.subr.bf16.mxu0 0
    %1921 = vmatpush1.bf16.msra.mxu0 %v1907
    %1922 = vmatprep.subr.bf16.mxu0 0
    %1923 = vmatpush1.bf16.msra.mxu0 %v1908
    %1924 = vmatprep.subr.bf16.mxu0 0
    %1925 = vmatpush1.bf16.msra.mxu0 %v1909
    %1926 = vmatprep.subr.bf16.mxu0 0
    %1927 = vmatpush1.bf16.msra.mxu0 0
    %1928 = vmatprep.subr.bf16.mxu0 0
    %1929 = vmatpush1.bf16.msra.mxu0 0
    %1930 = vmatprep.subr.bf16.mxu0 0
    %1931 = vmatpush1.bf16.msra.mxu0 0
    %1932 = vmatprep.subr.bf16.mxu0 0
    %1933 = vmatpush1.bf16.msra.mxu0 0
    %1934 = vmatprep.subr.bf16.mxu0 0
    %1935 = vmatpush1.bf16.msra.mxu0 0
    %1936 = vmatprep.subr.bf16.mxu0 0
    %1937 = vmatpush1.bf16.msra.mxu0 0
    %1938 = vmatprep.subr.bf16.mxu0 0
    %1939 = vmatpush1.bf16.msra.mxu0 0
    %1940 = vmatprep.subr.bf16.mxu0 0
    %1941 = vmatpush1.bf16.msra.mxu0 0
    %1942 = vmatprep.subr.bf16.mxu0 0
    %1943 = vmatpush1.bf16.msra.mxu0 0
    %1944 = vmatprep.subr.bf16.mxu0 0
    %1945 = vmatpush1.bf16.msra.mxu0 0
    %1946 = vmatprep.subr.bf16.mxu0 0
    %1947 = vmatpush1.bf16.msra.mxu0 0
    %1948 = vmatprep.subr.bf16.mxu0 0
    %1949 = vmatpush1.bf16.msra.mxu0 0
    %1950 = vmatprep.mubr.bf16.mxu0 0
    %1951 = vmatmul.mubr.bf16.gmra.mrb[0].mxu0 %v1916
    %v1952 = vpop.f32.mrb[0].mxu0
    %v1953 = vadd.f32 %v1889, %v1952
    %v1954 = vpop.f32.mrb[0].mxu0
    %v1955 = vpop.f32.mrb[0].mxu0
    %v1956 = vadd.f32 %v1889, %v1955
    %v1957 = vpop.f32.mrb[0].mxu0
    %1958 = vdwg.mxu0
    %v1959 = vadd.f32 %v1953, %v1811
    %v1960 = vadd.f32 %v1956, %v1812
    %v1961 = vsel %vm175, %v1959, 0.0
    %1962 = vadd.xlane.f32.xlu0 %v1961
    %v1963 = vpop.xlane.xlu0 %1962
    %v1964 = vsel %vm175, %v1960, 0.0
    %1965 = vadd.xlane.f32.xlu0 %v1964
    %v1966 = vpop.xlane.xlu0 %1965
    %v1967 = vmul.f32 %v1963, %v1780
    %v1968 = vmul.f32 %v1966, %v1780
    %v1969 = vsub.f32 %v1959, %v1967
    %v1970 = vsub.f32 %v1960, %v1968
    %v1971 = vmul.f32 %v1969, %v1969
    %v1972 = vmul.f32 %v1970, %v1970
    %v1973 = vsel %vm175, %v1971, 0.0
    %1974 = vadd.xlane.f32.xlu0 %v1973
    %v1975 = vpop.xlane.xlu0 %1974
    %v1976 = vsel %vm175, %v1972, 0.0
    %1977 = vadd.xlane.f32.xlu0 %v1976
    %v1978 = vpop.xlane.xlu0 %1977
    %v1979 = vmul.f32 %v1975, %v1780
    %v1980 = vmul.f32 %v1978, %v1780
    %v1981 = vadd.f32 %v1979, 1e-12
    %v1982 = vadd.f32 %v1980, 1e-12
    %v1983 = vrsqrt.pop %v1981
    %v1984 = vrsqrt.pop %v1982
    %v1985 = vmul.f32 %v1969, %v1983
    %v1986 = vmul.f32 %v1970, %v1984
    %v1987 = vlaneseq
    %v1988 = vshrl.u32 %v1987, 7
    %v1989 = vsub.s32 6, %v1988
    %v1990 = vrot.slane %v157, %v1989
    %v1991 = vmul.f32 %v1985, %v1990
    %v1992 = vmul.f32 %v1986, %v1990
    %v1993 = vlaneseq
    %v1994 = vshrl.u32 %v1993, 7
    %v1995 = vsub.s32 7, %v1994
    %v1996 = vrot.slane %v157, %v1995
    %v1997 = vadd.f32 %v1991, %v1996
    %v1998 = vadd.f32 %v1992, %v1996
    %1999 = vst.msk [vmem:[#allocation14] sm:$0xff] %vm175, %v1997
    %2000 = vst.msk [vmem:[#allocation14 + $0x8] sm:$0xff] %vm175, %v1998
    %s2001 = scalar_lea.vmem %s6, 16
    %v2002 = vld [vmem:[%s2001] sm:$0xf]
    %v2003 = vld [vmem:[%s2001 + $0x4] sm:$0xf]
    %v2004 = vld [vmem:[%s2001 + $0x8] sm:$0xf]
    %v2005 = vld [vmem:[%s2001 + $0xc] sm:$0xf]
    %s2006 = scalar_lea.vmem %s7, 16
    %v2007 = vld [vmem:[%s2006] sm:$0xf]
    %v2008 = vld [vmem:[%s2006 + $0x4] sm:$0xf]
    %v2009 = vld [vmem:[%s2006 + $0x8] sm:$0xf]
    %v2010 = vld [vmem:[%s2006 + $0xc] sm:$0xf]
    %s2011 = scalar_lea.vmem %s8, 16
    %v2012 = vld [vmem:[%s2011] sm:$0xf]
    %v2013 = vld [vmem:[%s2011 + $0x4] sm:$0xf]
    %v2014 = vld [vmem:[%s2011 + $0x8] sm:$0xf]
    %v2015 = vld [vmem:[%s2011 + $0xc] sm:$0xf]
    %s2016 = scalar_lea.vmem %s9, 32
    %v2017 = vld [vmem:[%s2016] sm:$0xf]
    %v2018 = vld [vmem:[%s2016 + $0x4] sm:$0xf]
    %v2019 = vld [vmem:[%s2016 + $0x8] sm:$0xf]
    %v2020 = vld [vmem:[%s2016 + $0xc] sm:$0xf]
    %v2021 = vld [vmem:[%s2016 + $0x10] sm:$0xf]
    %v2022 = vld [vmem:[%s2016 + $0x14] sm:$0xf]
    %v2023 = vld [vmem:[%s2016 + $0x18] sm:$0xf]
    %v2024 = vld [vmem:[%s2016 + $0x1c] sm:$0xf]
    %s2025 = scalar_lea.vmem [#allocation13], 8
    %v2026 = vld [vmem:[%s2025] sm:$0xff]
    %v2027 = vpack.c.bf16 %v1998, %v1997
    %v2028 = vlaneseq
    %v2029 = vshrl.u32 %v2028, 7
    %v2030 = vsub.s32 0, %v2029
    %v2031 = vrot.slane %v2026, %v2030
    %v2036 = vunpack.c.l.b16 %v2002
    %v2037 = vunpack.c.l.b16 %v2003
    %v2038 = vunpack.c.l.b16 %v2004
    %v2039 = vunpack.c.l.b16 %v2005
    %v2040 = vpack.c.b16 %v2037, %v2036
    %v2041 = vpack.c.b16 %v2039, %v2038
    %v2045 = vsel %vm175, %v2027, 0
    %2047 = vmatprep.subr.bf16.mxu0 0
    %2048 = vmatpush1.bf16.msra.mxu0 %v2040
    %2049 = vmatprep.subr.bf16.mxu0 0
    %2050 = vmatpush1.bf16.msra.mxu0 %v2041
    %2051 = vmatprep.subr.bf16.mxu0 0
    %2052 = vmatpush1.bf16.msra.mxu0 0
    %2053 = vmatprep.subr.bf16.mxu0 0
    %2054 = vmatpush1.bf16.msra.mxu0 0
    %2055 = vmatprep.subr.bf16.mxu0 0
    %2056 = vmatpush1.bf16.msra.mxu0 0
    %2057 = vmatprep.subr.bf16.mxu0 0
    %2058 = vmatpush1.bf16.msra.mxu0 0
    %2059 = vmatprep.subr.bf16.mxu0 0
    %2060 = vmatpush1.bf16.msra.mxu0 0
    %2061 = vmatprep.subr.bf16.mxu0 0
    %2062 = vmatpush1.bf16.msra.mxu0 0
    %2063 = vmatprep.subr.bf16.mxu0 0
    %2064 = vmatpush1.bf16.msra.mxu0 0
    %2065 = vmatprep.subr.bf16.mxu0 0
    %2066 = vmatpush1.bf16.msra.mxu0 0
    %2067 = vmatprep.subr.bf16.mxu0 0
    %2068 = vmatpush1.bf16.msra.mxu0 0
    %2069 = vmatprep.subr.bf16.mxu0 0
    %2070 = vmatpush1.bf16.msra.mxu0 0
    %2071 = vmatprep.subr.bf16.mxu0 0
    %2072 = vmatpush1.bf16.msra.mxu0 0
    %2073 = vmatprep.subr.bf16.mxu0 0
    %2074 = vmatpush1.bf16.msra.mxu0 0
    %2075 = vmatprep.subr.bf16.mxu0 0
    %2076 = vmatpush1.bf16.msra.mxu0 0
    %2077 = vmatprep.subr.bf16.mxu0 0
    %2078 = vmatpush1.bf16.msra.mxu0 0
    %2079 = vmatprep.mubr.bf16.mxu0 0
    %2080 = vmatmul.mubr.bf16.gmra.mrb[0].mxu0 %v2045
    %v2081 = vpop.f32.mrb[0].mxu0
    %v2082 = vadd.f32 %v2031, %v2081
    %v2083 = vpop.f32.mrb[0].mxu0
    %v2084 = vpop.f32.mrb[0].mxu0
    %v2085 = vadd.f32 %v2031, %v2084
    %v2086 = vpop.f32.mrb[0].mxu0
    %2087 = vdwg.mxu0
    %v2088 = vld [vmem:[#allocation7] sm:$0xff]
    %2090 = vrot.lane.b32.xlu0 %v2088, 32
    %v2091 = vpop.permute.xlu0 %2090
    %v2093 = vadd.f32 %v2082, %v2091
    %v2094 = vld [vmem:[#allocation8] sm:$0xff]
    %2096 = vrot.lane.b32.xlu0 %v2094, 64
    %v2097 = vpop.permute.xlu0 %2096
    %v2099 = vadd.f32 %v2082, %v2097
    %v2100 = vld [vmem:[#allocation5] sm:$0xff]
    %v2101 = vld [vmem:[#allocation10] sm:$0xff]
    %v2102 = vld [vmem:[#allocation10 + $0x8] sm:$0xff]
    %v2103 = vld [vmem:[#allocation10 + $0x10] sm:$0xff]
    %v2104 = vld [vmem:[#allocation10 + $0x18] sm:$0xff]
    %v2105 = vld [vmem:[#allocation10 + $0x20] sm:$0xff]
    %v2106 = vld [vmem:[#allocation10 + $0x28] sm:$0xff]
    %v2107 = vld [vmem:[#allocation10 + $0x30] sm:$0xff]
    %v2108 = vld [vmem:[#allocation10 + $0x38] sm:$0xff]
    %v2109 = vld [vmem:[#allocation11] sm:$0xff]
    %v2110 = vld [vmem:[#allocation11 + $0x8] sm:$0xff]
    %v2111 = vld [vmem:[#allocation11 + $0x10] sm:$0xff]
    %v2112 = vld [vmem:[#allocation11 + $0x18] sm:$0xff]
    %v2113 = vld [vmem:[#allocation11 + $0x20] sm:$0xff]
    %v2114 = vld [vmem:[#allocation11 + $0x28] sm:$0xff]
    %v2115 = vld [vmem:[#allocation11 + $0x30] sm:$0xff]
    %v2116 = vld [vmem:[#allocation11 + $0x38] sm:$0xff]
    %v2117 = vpack.c.bf16 %v2082, %v2082
    %v2118 = vpack.c.bf16 %v2093, %v2093
    %v2119 = vpack.c.bf16 %v2099, %v2099
    %v2121 = vcombine.high %v2082, %v2082
    %v2123 = vunpack.c.l.s4 1966171168
    %v2124 = vunpack.c.0.s8 %v2123
    %v2125 = vlaneseq
    %v2126 = vshrl.u32 %v2125, 7
    %v2127 = vsub.s32 %v2124, %v2126
    %v2128 = vrot.slane %v2082, %v2127
    %v2130 = vunpack.c.l.s4 1966171168
    %v2131 = vunpack.c.0.s8 %v2130
    %v2132 = vlaneseq
    %v2133 = vshrl.u32 %v2132, 7
    %v2134 = vsub.s32 %v2131, %v2133
    %v2135 = vrot.slane %v2121, %v2134
    %v2136 = vcombine.high %v2128, %v2128
    %v2137 = vcombine.high %v2135, %v2135
    %v2139 = vunpack.c.l.s4 1966171168
    %v2140 = vunpack.c.0.s8 %v2139
    %v2141 = vlaneseq
    %v2142 = vshrl.u32 %v2141, 7
    %v2143 = vsub.s32 %v2140, %v2142
    %v2144 = vrot.slane %v2128, %v2143
    %v2146 = vunpack.c.l.s4 1966171168
    %v2147 = vunpack.c.0.s8 %v2146
    %v2148 = vlaneseq
    %v2149 = vshrl.u32 %v2148, 7
    %v2150 = vsub.s32 %v2147, %v2149
    %v2151 = vrot.slane %v2135, %v2150
    %v2153 = vunpack.c.l.s4 1966171168
    %v2154 = vunpack.c.0.s8 %v2153
    %v2155 = vlaneseq
    %v2156 = vshrl.u32 %v2155, 7
    %v2157 = vsub.s32 %v2154, %v2156
    %v2158 = vrot.slane %v2136, %v2157
    %v2160 = vunpack.c.l.s4 1966171168
    %v2161 = vunpack.c.0.s8 %v2160
    %v2162 = vlaneseq
    %v2163 = vshrl.u32 %v2162, 7
    %v2164 = vsub.s32 %v2161, %v2163
    %v2165 = vrot.slane %v2137, %v2164
    %v2166 = vcombine.high %v2144, %v2144
    %v2167 = vcombine.high %v2151, %v2151
    %v2168 = vcombine.high %v2158, %v2158
    %v2169 = vcombine.high %v2165, %v2165
    %v2170 = vlaneseq
    %v2171 = vshrl.u32 %v2170, 7
    %v2172 = vsub.s32 0, %v2171
    %v2173 = vrot.slane %v2144, %v2172
    %v2174 = vlaneseq
    %v2175 = vshrl.u32 %v2174, 7
    %v2176 = vsub.s32 0, %v2175
    %v2177 = vrot.slane %v2158, %v2176
    %v2178 = vlaneseq
    %v2179 = vshrl.u32 %v2178, 7
    %v2180 = vsub.s32 0, %v2179
    %v2181 = vrot.slane %v2166, %v2180
    %v2182 = vlaneseq
    %v2183 = vshrl.u32 %v2182, 7
    %v2184 = vsub.s32 0, %v2183
    %v2185 = vrot.slane %v2168, %v2184
    %v2186 = vlaneseq
    %v2187 = vshrl.u32 %v2186, 7
    %v2188 = vsub.s32 0, %v2187
    %v2189 = vrot.slane %v2151, %v2188
    %v2190 = vlaneseq
    %v2191 = vshrl.u32 %v2190, 7
    %v2192 = vsub.s32 0, %v2191
    %v2193 = vrot.slane %v2165, %v2192
    %v2194 = vlaneseq
    %v2195 = vshrl.u32 %v2194, 7
    %v2196 = vsub.s32 0, %v2195
    %v2197 = vrot.slane %v2167, %v2196
    %v2198 = vlaneseq
    %v2199 = vshrl.u32 %v2198, 7
    %v2200 = vsub.s32 0, %v2199
    %v2201 = vrot.slane %v2169, %v2200
    %v2210 = vmul.f32 %v2101, %v2173
    %v2211 = vmul.f32 %v2102, %v2177
    %v2212 = vmul.f32 %v2103, %v2181
    %v2213 = vmul.f32 %v2104, %v2185
    %v2214 = vmul.f32 %v2105, %v2189
    %v2215 = vmul.f32 %v2106, %v2193
    %v2216 = vmul.f32 %v2107, %v2197
    %v2217 = vmul.f32 %v2108, %v2201
    %v2218 = vsel %vm350, %v2210, 0.0
    %2219 = vadd.xlane.f32.xlu0 %v2218
    %v2220 = vpop.xlane.xlu0 %2219
    %v2221 = vsel %vm350, %v2211, 0.0
    %2222 = vadd.xlane.f32.xlu0 %v2221
    %v2223 = vpop.xlane.xlu0 %2222
    %v2224 = vsel %vm350, %v2212, 0.0
    %2225 = vadd.xlane.f32.xlu0 %v2224
    %v2226 = vpop.xlane.xlu0 %2225
    %v2227 = vsel %vm350, %v2213, 0.0
    %2228 = vadd.xlane.f32.xlu0 %v2227
    %v2229 = vpop.xlane.xlu0 %2228
    %v2230 = vsel %vm350, %v2214, 0.0
    %2231 = vadd.xlane.f32.xlu0 %v2230
    %v2232 = vpop.xlane.xlu0 %2231
    %v2233 = vsel %vm350, %v2215, 0.0
    %2234 = vadd.xlane.f32.xlu0 %v2233
    %v2235 = vpop.xlane.xlu0 %2234
    %v2236 = vsel %vm350, %v2216, 0.0
    %2237 = vadd.xlane.f32.xlu0 %v2236
    %v2238 = vpop.xlane.xlu0 %2237
    %v2239 = vsel %vm350, %v2217, 0.0
    %2240 = vadd.xlane.f32.xlu0 %v2239
    %v2241 = vpop.xlane.xlu0 %2240
    %2243 = vrot.lane.b32.xlu0 %v2118, 96
    %v2244 = vpop.permute.xlu0 %2243
    %v2253 = vlaneseq
    %v2254 = vshrl.u32 %v2253, 7
    %v2255 = vsub.s32 %v387, %v2254
    %v2256 = vrot.slane %v2220, %v2255
    %v2257 = vlaneseq
    %v2258 = vshrl.u32 %v2257, 7
    %v2259 = vsub.s32 %v387, %v2258
    %v2260 = vrot.slane %v2223, %v2259
    %v2261 = vlaneseq
    %v2262 = vshrl.u32 %v2261, 7
    %v2263 = vsub.s32 %v387, %v2262
    %v2264 = vrot.slane %v2226, %v2263
    %v2265 = vlaneseq
    %v2266 = vshrl.u32 %v2265, 7
    %v2267 = vsub.s32 %v387, %v2266
    %v2268 = vrot.slane %v2229, %v2267
    %v2269 = vlaneseq
    %v2270 = vshrl.u32 %v2269, 7
    %v2271 = vsub.s32 %v387, %v2270
    %v2272 = vrot.slane %v2232, %v2271
    %v2273 = vlaneseq
    %v2274 = vshrl.u32 %v2273, 7
    %v2275 = vsub.s32 %v387, %v2274
    %v2276 = vrot.slane %v2235, %v2275
    %v2277 = vlaneseq
    %v2278 = vshrl.u32 %v2277, 7
    %v2279 = vsub.s32 %v387, %v2278
    %v2280 = vrot.slane %v2238, %v2279
    %v2281 = vlaneseq
    %v2282 = vshrl.u32 %v2281, 7
    %v2283 = vsub.s32 %v387, %v2282
    %v2284 = vrot.slane %v2241, %v2283
    %v2285 = vsel %vm420, %v2260, %v2256
    %v2286 = vsel %vm422, %v2264, %v2285
    %v2287 = vsel %vm424, %v2268, %v2286
    %v2288 = vsel %vm426, %v2272, %v2287
    %v2289 = vsel %vm428, %v2276, %v2288
    %v2290 = vsel %vm430, %v2280, %v2289
    %v2291 = vsel %vm432, %v2284, %v2290
    %v2294 = vsel %vm350, %v2117, 0
    %v2297 = vsel %vm350, %v2244, 0
    %2299 = vmatprep.subr.bf16.mxu0 0
    %2300 = vmatpush1.bf16.xpose.msra.mxu0 %v2297
    %2301 = vmatprep.subr.bf16.mxu0 0
    %2302 = vmatpush1.bf16.xpose.msra.mxu0 0
    %2303 = vmatprep.subr.bf16.mxu0 0
    %2304 = vmatpush1.bf16.xpose.msra.mxu0 0
    %2305 = vmatprep.subr.bf16.mxu0 0
    %2306 = vmatpush1.bf16.xpose.msra.mxu0 0
    %2307 = vmatprep.subr.bf16.mxu0 0
    %2308 = vmatpush1.bf16.xpose.msra.mxu0 0
    %2309 = vmatprep.subr.bf16.mxu0 0
    %2310 = vmatpush1.bf16.xpose.msra.mxu0 0
    %2311 = vmatprep.subr.bf16.mxu0 0
    %2312 = vmatpush1.bf16.xpose.msra.mxu0 0
    %2313 = vmatprep.subr.bf16.mxu0 0
    %2314 = vmatpush1.bf16.xpose.msra.mxu0 0
    %2315 = vmatprep.subr.bf16.mxu0 0
    %2316 = vmatpush1.bf16.xpose.msra.mxu0 0
    %2317 = vmatprep.subr.bf16.mxu0 0
    %2318 = vmatpush1.bf16.xpose.msra.mxu0 0
    %2319 = vmatprep.subr.bf16.mxu0 0
    %2320 = vmatpush1.bf16.xpose.msra.mxu0 0
    %2321 = vmatprep.subr.bf16.mxu0 0
    %2322 = vmatpush1.bf16.xpose.msra.mxu0 0
    %2323 = vmatprep.subr.bf16.mxu0 0
    %2324 = vmatpush1.bf16.xpose.msra.mxu0 0
    %2325 = vmatprep.subr.bf16.mxu0 0
    %2326 = vmatpush1.bf16.xpose.msra.mxu0 0
    %2327 = vmatprep.subr.bf16.mxu0 0
    %2328 = vmatpush1.bf16.xpose.msra.mxu0 0
    %2329 = vmatprep.subr.bf16.mxu0 0
    %2330 = vmatpush1.bf16.xpose.msra.mxu0 0
    %2331 = vmatprep.mubr.bf16.mxu0 0
    %2332 = vmatmul.mubr.bf16.gmra.mrb[0].mxu0 %v2294
    %v2333 = vpop.f32.mrb[0].mxu0
    %v2334 = vadd.f32 %v2291, %v2333
    %v2335 = vpop.f32.mrb[0].mxu0
    %v2336 = vpop.f32.mrb[0].mxu0
    %v2337 = vpop.f32.mrb[0].mxu0
    %2338 = vdwg.mxu0
    %v2339 = vmul.f32 %v2334, 0.25
    %v2340 = vadd.f32 %v2339, %v2100
    %v2341 = vsel %vm483, %v2340, -inf
    %2342 = vmax.xlane.f32.xlu0 %v2341
    %v2343 = vpop.xlane.xlu0 %2342
    %v2344 = vsub.f32 %v2340, %v2343
    %v2345 = vmul.f32 %v2344, 1.442695
    %v2346 = vpow.pop %v2345
    %v2347 = vsel %vm483, %v2346, 0.0
    %2348 = vadd.xlane.f32.xlu0 %v2347
    %v2349 = vpop.xlane.xlu0 %2348
    %v2350 = vrcp.pop %v2349
    %v2351 = vmul.f32 %v2346, %v2350
    %v2352 = vpack.c.bf16 %v2351, %v2351
    %2354 = vrot.lane.b32.xlu0 %v2119, 64
    %v2355 = vpop.permute.xlu0 %2354
    %v2357 = vsel %vm483, %v2352, 0
    %v2360 = vsel %vm502, %v2355, 0
    %2362 = vmatprep.subr.bf16.mxu0 0
    %2363 = vmatpush1.bf16.msra.mxu0 %v2360
    %2364 = vmatprep.subr.bf16.mxu0 0
    %2365 = vmatpush1.bf16.msra.mxu0 0
    %2366 = vmatprep.subr.bf16.mxu0 0
    %2367 = vmatpush1.bf16.msra.mxu0 0
    %2368 = vmatprep.subr.bf16.mxu0 0
    %2369 = vmatpush1.bf16.msra.mxu0 0
    %2370 = vmatprep.subr.bf16.mxu0 0
    %2371 = vmatpush1.bf16.msra.mxu0 0
    %2372 = vmatprep.subr.bf16.mxu0 0
    %2373 = vmatpush1.bf16.msra.mxu0 0
    %2374 = vmatprep.subr.bf16.mxu0 0
    %2375 = vmatpush1.bf16.msra.mxu0 0
    %2376 = vmatprep.subr.bf16.mxu0 0
    %2377 = vmatpush1.bf16.msra.mxu0 0
    %2378 = vmatprep.subr.bf16.mxu0 0
    %2379 = vmatpush1.bf16.msra.mxu0 0
    %2380 = vmatprep.subr.bf16.mxu0 0
    %2381 = vmatpush1.bf16.msra.mxu0 0
    %2382 = vmatprep.subr.bf16.mxu0 0
    %2383 = vmatpush1.bf16.msra.mxu0 0
    %2384 = vmatprep.subr.bf16.mxu0 0
    %2385 = vmatpush1.bf16.msra.mxu0 0
    %2386 = vmatprep.subr.bf16.mxu0 0
    %2387 = vmatpush1.bf16.msra.mxu0 0
    %2388 = vmatprep.subr.bf16.mxu0 0
    %2389 = vmatpush1.bf16.msra.mxu0 0
    %2390 = vmatprep.subr.bf16.mxu0 0
    %2391 = vmatpush1.bf16.msra.mxu0 0
    %2392 = vmatprep.subr.bf16.mxu0 0
    %2393 = vmatpush1.bf16.msra.mxu0 0
    %2394 = vmatprep.mubr.bf16.mxu0 0
    %2395 = vmatmul.mubr.bf16.gmra.mrb[0].mxu0 %v2357
    %v2396 = vpop.f32.mrb[0].mxu0
    %v2397 = vadd.f32 0.0, %v2396
    %v2398 = vpop.f32.mrb[0].mxu0
    %v2399 = vpop.f32.mrb[0].mxu0
    %v2400 = vpop.f32.mrb[0].mxu0
    %2401 = vdwg.mxu0
    %2410 = vrot.lane.b32.xlu0 %v2210, 112
    %v2411 = vpop.permute.xlu0 %2410
    %2412 = vrot.lane.b32.xlu0 %v2211, 112
    %v2413 = vpop.permute.xlu0 %2412
    %2414 = vrot.lane.b32.xlu0 %v2212, 112
    %v2415 = vpop.permute.xlu0 %2414
    %2416 = vrot.lane.b32.xlu0 %v2213, 112
    %v2417 = vpop.permute.xlu0 %2416
    %2418 = vrot.lane.b32.xlu0 %v2214, 112
    %v2419 = vpop.permute.xlu0 %2418
    %2420 = vrot.lane.b32.xlu0 %v2215, 112
    %v2421 = vpop.permute.xlu0 %2420
    %2422 = vrot.lane.b32.xlu0 %v2216, 112
    %v2423 = vpop.permute.xlu0 %2422
    %2424 = vrot.lane.b32.xlu0 %v2217, 112
    %v2425 = vpop.permute.xlu0 %2424
    %v2434 = vsel %vm350, %v2411, 0.0
    %2435 = vadd.xlane.f32.xlu0 %v2434
    %v2436 = vpop.xlane.xlu0 %2435
    %v2437 = vsel %vm350, %v2413, 0.0
    %2438 = vadd.xlane.f32.xlu0 %v2437
    %v2439 = vpop.xlane.xlu0 %2438
    %v2440 = vsel %vm350, %v2415, 0.0
    %2441 = vadd.xlane.f32.xlu0 %v2440
    %v2442 = vpop.xlane.xlu0 %2441
    %v2443 = vsel %vm350, %v2417, 0.0
    %2444 = vadd.xlane.f32.xlu0 %v2443
    %v2445 = vpop.xlane.xlu0 %2444
    %v2446 = vsel %vm350, %v2419, 0.0
    %2447 = vadd.xlane.f32.xlu0 %v2446
    %v2448 = vpop.xlane.xlu0 %2447
    %v2449 = vsel %vm350, %v2421, 0.0
    %2450 = vadd.xlane.f32.xlu0 %v2449
    %v2451 = vpop.xlane.xlu0 %2450
    %v2452 = vsel %vm350, %v2423, 0.0
    %2453 = vadd.xlane.f32.xlu0 %v2452
    %v2454 = vpop.xlane.xlu0 %2453
    %v2455 = vsel %vm350, %v2425, 0.0
    %2456 = vadd.xlane.f32.xlu0 %v2455
    %v2457 = vpop.xlane.xlu0 %2456
    %2459 = vrot.lane.b32.xlu0 %v2117, 112
    %v2460 = vpop.permute.xlu0 %2459
    %2461 = vrot.lane.b32.xlu0 %v2118, 80
    %v2462 = vpop.permute.xlu0 %2461
    %v2471 = vlaneseq
    %v2472 = vshrl.u32 %v2471, 7
    %v2473 = vsub.s32 %v387, %v2472
    %v2474 = vrot.slane %v2436, %v2473
    %v2475 = vlaneseq
    %v2476 = vshrl.u32 %v2475, 7
    %v2477 = vsub.s32 %v387, %v2476
    %v2478 = vrot.slane %v2439, %v2477
    %v2479 = vlaneseq
    %v2480 = vshrl.u32 %v2479, 7
    %v2481 = vsub.s32 %v387, %v2480
    %v2482 = vrot.slane %v2442, %v2481
    %v2483 = vlaneseq
    %v2484 = vshrl.u32 %v2483, 7
    %v2485 = vsub.s32 %v387, %v2484
    %v2486 = vrot.slane %v2445, %v2485
    %v2487 = vlaneseq
    %v2488 = vshrl.u32 %v2487, 7
    %v2489 = vsub.s32 %v387, %v2488
    %v2490 = vrot.slane %v2448, %v2489
    %v2491 = vlaneseq
    %v2492 = vshrl.u32 %v2491, 7
    %v2493 = vsub.s32 %v387, %v2492
    %v2494 = vrot.slane %v2451, %v2493
    %v2495 = vlaneseq
    %v2496 = vshrl.u32 %v2495, 7
    %v2497 = vsub.s32 %v387, %v2496
    %v2498 = vrot.slane %v2454, %v2497
    %v2499 = vlaneseq
    %v2500 = vshrl.u32 %v2499, 7
    %v2501 = vsub.s32 %v387, %v2500
    %v2502 = vrot.slane %v2457, %v2501
    %v2503 = vsel %vm420, %v2478, %v2474
    %v2504 = vsel %vm422, %v2482, %v2503
    %v2505 = vsel %vm424, %v2486, %v2504
    %v2506 = vsel %vm426, %v2490, %v2505
    %v2507 = vsel %vm428, %v2494, %v2506
    %v2508 = vsel %vm430, %v2498, %v2507
    %v2509 = vsel %vm432, %v2502, %v2508
    %v2512 = vsel %vm350, %v2460, 0
    %v2515 = vsel %vm350, %v2462, 0
    %2517 = vmatprep.subr.bf16.mxu0 0
    %2518 = vmatpush1.bf16.xpose.msra.mxu0 %v2515
    %2519 = vmatprep.subr.bf16.mxu0 0
    %2520 = vmatpush1.bf16.xpose.msra.mxu0 0
    %2521 = vmatprep.subr.bf16.mxu0 0
    %2522 = vmatpush1.bf16.xpose.msra.mxu0 0
    %2523 = vmatprep.subr.bf16.mxu0 0
    %2524 = vmatpush1.bf16.xpose.msra.mxu0 0
    %2525 = vmatprep.subr.bf16.mxu0 0
    %2526 = vmatpush1.bf16.xpose.msra.mxu0 0
    %2527 = vmatprep.subr.bf16.mxu0 0
    %2528 = vmatpush1.bf16.xpose.msra.mxu0 0
    %2529 = vmatprep.subr.bf16.mxu0 0
    %2530 = vmatpush1.bf16.xpose.msra.mxu0 0
    %2531 = vmatprep.subr.bf16.mxu0 0
    %2532 = vmatpush1.bf16.xpose.msra.mxu0 0
    %2533 = vmatprep.subr.bf16.mxu0 0
    %2534 = vmatpush1.bf16.xpose.msra.mxu0 0
    %2535 = vmatprep.subr.bf16.mxu0 0
    %2536 = vmatpush1.bf16.xpose.msra.mxu0 0
    %2537 = vmatprep.subr.bf16.mxu0 0
    %2538 = vmatpush1.bf16.xpose.msra.mxu0 0
    %2539 = vmatprep.subr.bf16.mxu0 0
    %2540 = vmatpush1.bf16.xpose.msra.mxu0 0
    %2541 = vmatprep.subr.bf16.mxu0 0
    %2542 = vmatpush1.bf16.xpose.msra.mxu0 0
    %2543 = vmatprep.subr.bf16.mxu0 0
    %2544 = vmatpush1.bf16.xpose.msra.mxu0 0
    %2545 = vmatprep.subr.bf16.mxu0 0
    %2546 = vmatpush1.bf16.xpose.msra.mxu0 0
    %2547 = vmatprep.subr.bf16.mxu0 0
    %2548 = vmatpush1.bf16.xpose.msra.mxu0 0
    %2549 = vmatprep.mubr.bf16.mxu0 0
    %2550 = vmatmul.mubr.bf16.gmra.mrb[0].mxu0 %v2512
    %v2551 = vpop.f32.mrb[0].mxu0
    %v2552 = vadd.f32 %v2509, %v2551
    %v2553 = vpop.f32.mrb[0].mxu0
    %v2554 = vpop.f32.mrb[0].mxu0
    %v2555 = vpop.f32.mrb[0].mxu0
    %2556 = vdwg.mxu0
    %v2557 = vmul.f32 %v2552, 0.25
    %v2558 = vadd.f32 %v2557, %v2100
    %v2559 = vsel %vm483, %v2558, -inf
    %2560 = vmax.xlane.f32.xlu0 %v2559
    %v2561 = vpop.xlane.xlu0 %2560
    %v2562 = vsub.f32 %v2558, %v2561
    %v2563 = vmul.f32 %v2562, 1.442695
    %v2564 = vpow.pop %v2563
    %v2565 = vsel %vm483, %v2564, 0.0
    %2566 = vadd.xlane.f32.xlu0 %v2565
    %v2567 = vpop.xlane.xlu0 %2566
    %v2568 = vrcp.pop %v2567
    %v2569 = vmul.f32 %v2564, %v2568
    %v2570 = vpack.c.bf16 %v2569, %v2569
    %2571 = vrot.lane.b32.xlu0 %v2119, 48
    %v2572 = vpop.permute.xlu0 %2571
    %v2574 = vsel %vm483, %v2570, 0
    %v2577 = vsel %vm502, %v2572, 0
    %2579 = vmatprep.subr.bf16.mxu0 0
    %2580 = vmatpush1.bf16.msra.mxu0 %v2577
    %2581 = vmatprep.subr.bf16.mxu0 0
    %2582 = vmatpush1.bf16.msra.mxu0 0
    %2583 = vmatprep.subr.bf16.mxu0 0
    %2584 = vmatpush1.bf16.msra.mxu0 0
    %2585 = vmatprep.subr.bf16.mxu0 0
    %2586 = vmatpush1.bf16.msra.mxu0 0
    %2587 = vmatprep.subr.bf16.mxu0 0
    %2588 = vmatpush1.bf16.msra.mxu0 0
    %2589 = vmatprep.subr.bf16.mxu0 0
    %2590 = vmatpush1.bf16.msra.mxu0 0
    %2591 = vmatprep.subr.bf16.mxu0 0
    %2592 = vmatpush1.bf16.msra.mxu0 0
    %2593 = vmatprep.subr.bf16.mxu0 0
    %2594 = vmatpush1.bf16.msra.mxu0 0
    %2595 = vmatprep.subr.bf16.mxu0 0
    %2596 = vmatpush1.bf16.msra.mxu0 0
    %2597 = vmatprep.subr.bf16.mxu0 0
    %2598 = vmatpush1.bf16.msra.mxu0 0
    %2599 = vmatprep.subr.bf16.mxu0 0
    %2600 = vmatpush1.bf16.msra.mxu0 0
    %2601 = vmatprep.subr.bf16.mxu0 0
    %2602 = vmatpush1.bf16.msra.mxu0 0
    %2603 = vmatprep.subr.bf16.mxu0 0
    %2604 = vmatpush1.bf16.msra.mxu0 0
    %2605 = vmatprep.subr.bf16.mxu0 0
    %2606 = vmatpush1.bf16.msra.mxu0 0
    %2607 = vmatprep.subr.bf16.mxu0 0
    %2608 = vmatpush1.bf16.msra.mxu0 0
    %2609 = vmatprep.subr.bf16.mxu0 0
    %2610 = vmatpush1.bf16.msra.mxu0 0
    %2611 = vmatprep.mubr.bf16.mxu0 0
    %2612 = vmatmul.mubr.bf16.gmra.mrb[0].mxu0 %v2574
    %v2613 = vpop.f32.mrb[0].mxu0
    %v2614 = vadd.f32 0.0, %v2613
    %v2615 = vpop.f32.mrb[0].mxu0
    %v2616 = vpop.f32.mrb[0].mxu0
    %v2617 = vpop.f32.mrb[0].mxu0
    %2618 = vdwg.mxu0
    %2620 = vrot.lane.b32.xlu0 %v2614, 16
    %v2621 = vpop.permute.xlu0 %2620
    %v2623 = vsel %vm350, %v2397, %v2621
    %v2624 = vlaneseq
    %v2625 = vshrl.u32 %v2624, 7
    %v2626 = vsub.s32 0, %v2625
    %v2627 = vrot.slane %v2351, %v2626
    %2629 = vbcast.lane.b32.xlu0 %v2627, 256
    %v2630 = vpop.permute.xlu0 %2629
    %v2631 = vlaneseq
    %v2632 = vshrl.u32 %v2631, 7
    %v2633 = vsub.s32 1, %v2632
    %v2634 = vrot.slane %v2351, %v2633
    %2636 = vbcast.lane.b32.xlu0 %v2634, 256
    %v2637 = vpop.permute.xlu0 %2636
    %v2638 = vlaneseq
    %v2639 = vshrl.u32 %v2638, 7
    %v2640 = vsub.s32 2, %v2639
    %v2641 = vrot.slane %v2351, %v2640
    %2643 = vbcast.lane.b32.xlu0 %v2641, 256
    %v2644 = vpop.permute.xlu0 %2643
    %v2645 = vlaneseq
    %v2646 = vshrl.u32 %v2645, 7
    %v2647 = vsub.s32 3, %v2646
    %v2648 = vrot.slane %v2351, %v2647
    %2650 = vbcast.lane.b32.xlu0 %v2648, 256
    %v2651 = vpop.permute.xlu0 %2650
    %v2652 = vlaneseq
    %v2653 = vshrl.u32 %v2652, 7
    %v2654 = vsub.s32 4, %v2653
    %v2655 = vrot.slane %v2351, %v2654
    %2657 = vbcast.lane.b32.xlu0 %v2655, 256
    %v2658 = vpop.permute.xlu0 %2657
    %v2659 = vlaneseq
    %v2660 = vshrl.u32 %v2659, 7
    %v2661 = vsub.s32 5, %v2660
    %v2662 = vrot.slane %v2351, %v2661
    %2664 = vbcast.lane.b32.xlu0 %v2662, 256
    %v2665 = vpop.permute.xlu0 %2664
    %v2666 = vlaneseq
    %v2667 = vshrl.u32 %v2666, 7
    %v2668 = vsub.s32 6, %v2667
    %v2669 = vrot.slane %v2351, %v2668
    %2671 = vbcast.lane.b32.xlu0 %v2669, 256
    %v2672 = vpop.permute.xlu0 %2671
    %v2673 = vlaneseq
    %v2674 = vshrl.u32 %v2673, 7
    %v2675 = vsub.s32 7, %v2674
    %v2676 = vrot.slane %v2351, %v2675
    %2678 = vbcast.lane.b32.xlu0 %v2676, 256
    %v2679 = vpop.permute.xlu0 %2678
    %v2680 = vlaneseq
    %v2681 = vshrl.u32 %v2680, 7
    %v2682 = vsub.s32 0, %v2681
    %v2683 = vrot.slane %v2569, %v2682
    %2685 = vbcast.lane.b32.xlu0 %v2683, 256
    %v2686 = vpop.permute.xlu0 %2685
    %v2687 = vlaneseq
    %v2688 = vshrl.u32 %v2687, 7
    %v2689 = vsub.s32 1, %v2688
    %v2690 = vrot.slane %v2569, %v2689
    %2692 = vbcast.lane.b32.xlu0 %v2690, 256
    %v2693 = vpop.permute.xlu0 %2692
    %v2694 = vlaneseq
    %v2695 = vshrl.u32 %v2694, 7
    %v2696 = vsub.s32 2, %v2695
    %v2697 = vrot.slane %v2569, %v2696
    %2699 = vbcast.lane.b32.xlu0 %v2697, 256
    %v2700 = vpop.permute.xlu0 %2699
    %v2701 = vlaneseq
    %v2702 = vshrl.u32 %v2701, 7
    %v2703 = vsub.s32 3, %v2702
    %v2704 = vrot.slane %v2569, %v2703
    %2706 = vbcast.lane.b32.xlu0 %v2704, 256
    %v2707 = vpop.permute.xlu0 %2706
    %v2708 = vlaneseq
    %v2709 = vshrl.u32 %v2708, 7
    %v2710 = vsub.s32 4, %v2709
    %v2711 = vrot.slane %v2569, %v2710
    %2713 = vbcast.lane.b32.xlu0 %v2711, 256
    %v2714 = vpop.permute.xlu0 %2713
    %v2715 = vlaneseq
    %v2716 = vshrl.u32 %v2715, 7
    %v2717 = vsub.s32 5, %v2716
    %v2718 = vrot.slane %v2569, %v2717
    %2720 = vbcast.lane.b32.xlu0 %v2718, 256
    %v2721 = vpop.permute.xlu0 %2720
    %v2722 = vlaneseq
    %v2723 = vshrl.u32 %v2722, 7
    %v2724 = vsub.s32 6, %v2723
    %v2725 = vrot.slane %v2569, %v2724
    %2727 = vbcast.lane.b32.xlu0 %v2725, 256
    %v2728 = vpop.permute.xlu0 %2727
    %v2729 = vlaneseq
    %v2730 = vshrl.u32 %v2729, 7
    %v2731 = vsub.s32 7, %v2730
    %v2732 = vrot.slane %v2569, %v2731
    %2734 = vbcast.lane.b32.xlu0 %v2732, 256
    %v2735 = vpop.permute.xlu0 %2734
    %v2736 = vsel %vm350, %v2630, %v2686
    %v2737 = vsel %vm350, %v2637, %v2693
    %v2738 = vsel %vm350, %v2644, %v2700
    %v2739 = vsel %vm350, %v2651, %v2707
    %v2740 = vsel %vm350, %v2658, %v2714
    %v2741 = vsel %vm350, %v2665, %v2721
    %v2742 = vsel %vm350, %v2672, %v2728
    %v2743 = vsel %vm350, %v2679, %v2735
    %v2744 = vmul.f32 %v2736, %v2109
    %v2745 = vmul.f32 %v2737, %v2110
    %v2746 = vmul.f32 %v2738, %v2111
    %v2747 = vmul.f32 %v2739, %v2112
    %v2748 = vmul.f32 %v2740, %v2113
    %v2749 = vmul.f32 %v2741, %v2114
    %v2750 = vmul.f32 %v2742, %v2115
    %v2751 = vmul.f32 %v2743, %v2116
    %v2752 = vsel %vm175, %v2744, 0.0
    %v2753 = vrot.slane %v2752, 4
    %v2754 = vadd.f32 %v2752, %v2753
    %v2755 = vrot.slane %v2754, 2
    %v2756 = vadd.f32 %v2754, %v2755
    %v2757 = vrot.slane %v2756, 1
    %v2758 = vadd.f32 %v2756, %v2757
    %v2759 = vsel %vm175, %v2745, 0.0
    %v2760 = vrot.slane %v2759, 4
    %v2761 = vadd.f32 %v2759, %v2760
    %v2762 = vrot.slane %v2761, 2
    %v2763 = vadd.f32 %v2761, %v2762
    %v2764 = vrot.slane %v2763, 1
    %v2765 = vadd.f32 %v2763, %v2764
    %v2766 = vsel %vm175, %v2746, 0.0
    %v2767 = vrot.slane %v2766, 4
    %v2768 = vadd.f32 %v2766, %v2767
    %v2769 = vrot.slane %v2768, 2
    %v2770 = vadd.f32 %v2768, %v2769
    %v2771 = vrot.slane %v2770, 1
    %v2772 = vadd.f32 %v2770, %v2771
    %v2773 = vsel %vm175, %v2747, 0.0
    %v2774 = vrot.slane %v2773, 4
    %v2775 = vadd.f32 %v2773, %v2774
    %v2776 = vrot.slane %v2775, 2
    %v2777 = vadd.f32 %v2775, %v2776
    %v2778 = vrot.slane %v2777, 1
    %v2779 = vadd.f32 %v2777, %v2778
    %v2780 = vsel %vm175, %v2748, 0.0
    %v2781 = vrot.slane %v2780, 4
    %v2782 = vadd.f32 %v2780, %v2781
    %v2783 = vrot.slane %v2782, 2
    %v2784 = vadd.f32 %v2782, %v2783
    %v2785 = vrot.slane %v2784, 1
    %v2786 = vadd.f32 %v2784, %v2785
    %v2787 = vsel %vm175, %v2749, 0.0
    %v2788 = vrot.slane %v2787, 4
    %v2789 = vadd.f32 %v2787, %v2788
    %v2790 = vrot.slane %v2789, 2
    %v2791 = vadd.f32 %v2789, %v2790
    %v2792 = vrot.slane %v2791, 1
    %v2793 = vadd.f32 %v2791, %v2792
    %v2794 = vsel %vm175, %v2750, 0.0
    %v2795 = vrot.slane %v2794, 4
    %v2796 = vadd.f32 %v2794, %v2795
    %v2797 = vrot.slane %v2796, 2
    %v2798 = vadd.f32 %v2796, %v2797
    %v2799 = vrot.slane %v2798, 1
    %v2800 = vadd.f32 %v2798, %v2799
    %v2801 = vsel %vm175, %v2751, 0.0
    %v2802 = vrot.slane %v2801, 4
    %v2803 = vadd.f32 %v2801, %v2802
    %v2804 = vrot.slane %v2803, 2
    %v2805 = vadd.f32 %v2803, %v2804
    %v2806 = vrot.slane %v2805, 1
    %v2807 = vadd.f32 %v2805, %v2806
    %v2816 = vsel %vm420, %v2765, %v2758
    %v2817 = vsel %vm422, %v2772, %v2816
    %v2818 = vsel %vm424, %v2779, %v2817
    %v2819 = vsel %vm426, %v2786, %v2818
    %v2820 = vsel %vm428, %v2793, %v2819
    %v2821 = vsel %vm430, %v2800, %v2820
    %v2822 = vsel %vm432, %v2807, %v2821
    %v2824 = vadd.f32 %v2623, %v2822
    %v2825 = vld [vmem:[%s969] sm:$0xff]
    %2827 = vrot.lane.b32.xlu0 %v2825, 32
    %v2828 = vpop.permute.xlu0 %2827
    %v2830 = vadd.f32 %v2085, %v2828
    %v2831 = vld [vmem:[%s976] sm:$0xff]
    %2833 = vrot.lane.b32.xlu0 %v2831, 64
    %v2834 = vpop.permute.xlu0 %2833
    %v2836 = vadd.f32 %v2085, %v2834
    %v2837 = vld [vmem:[%s983] sm:$0xff]
    %v2838 = vld [vmem:[%s985] sm:$0xff]
    %v2839 = vld [vmem:[%s985 + $0x8] sm:$0xff]
    %v2840 = vld [vmem:[%s985 + $0x10] sm:$0xff]
    %v2841 = vld [vmem:[%s985 + $0x18] sm:$0xff]
    %v2842 = vld [vmem:[%s985 + $0x20] sm:$0xff]
    %v2843 = vld [vmem:[%s985 + $0x28] sm:$0xff]
    %v2844 = vld [vmem:[%s985 + $0x30] sm:$0xff]
    %v2845 = vld [vmem:[%s985 + $0x38] sm:$0xff]
    %v2846 = vld [vmem:[%s994] sm:$0xff]
    %v2847 = vld [vmem:[%s994 + $0x8] sm:$0xff]
    %v2848 = vld [vmem:[%s994 + $0x10] sm:$0xff]
    %v2849 = vld [vmem:[%s994 + $0x18] sm:$0xff]
    %v2850 = vld [vmem:[%s994 + $0x20] sm:$0xff]
    %v2851 = vld [vmem:[%s994 + $0x28] sm:$0xff]
    %v2852 = vld [vmem:[%s994 + $0x30] sm:$0xff]
    %v2853 = vld [vmem:[%s994 + $0x38] sm:$0xff]
    %v2854 = vpack.c.bf16 %v2085, %v2085
    %v2855 = vpack.c.bf16 %v2830, %v2830
    %v2856 = vpack.c.bf16 %v2836, %v2836
    %v2858 = vcombine.high %v2085, %v2085
    %v2860 = vunpack.c.l.s4 1966171168
    %v2861 = vunpack.c.0.s8 %v2860
    %v2862 = vlaneseq
    %v2863 = vshrl.u32 %v2862, 7
    %v2864 = vsub.s32 %v2861, %v2863
    %v2865 = vrot.slane %v2085, %v2864
    %v2867 = vunpack.c.l.s4 1966171168
    %v2868 = vunpack.c.0.s8 %v2867
    %v2869 = vlaneseq
    %v2870 = vshrl.u32 %v2869, 7
    %v2871 = vsub.s32 %v2868, %v2870
    %v2872 = vrot.slane %v2858, %v2871
    %v2873 = vcombine.high %v2865, %v2865
    %v2874 = vcombine.high %v2872, %v2872
    %v2876 = vunpack.c.l.s4 1966171168
    %v2877 = vunpack.c.0.s8 %v2876
    %v2878 = vlaneseq
    %v2879 = vshrl.u32 %v2878, 7
    %v2880 = vsub.s32 %v2877, %v2879
    %v2881 = vrot.slane %v2865, %v2880
    %v2883 = vunpack.c.l.s4 1966171168
    %v2884 = vunpack.c.0.s8 %v2883
    %v2885 = vlaneseq
    %v2886 = vshrl.u32 %v2885, 7
    %v2887 = vsub.s32 %v2884, %v2886
    %v2888 = vrot.slane %v2872, %v2887
    %v2890 = vunpack.c.l.s4 1966171168
    %v2891 = vunpack.c.0.s8 %v2890
    %v2892 = vlaneseq
    %v2893 = vshrl.u32 %v2892, 7
    %v2894 = vsub.s32 %v2891, %v2893
    %v2895 = vrot.slane %v2873, %v2894
    %v2897 = vunpack.c.l.s4 1966171168
    %v2898 = vunpack.c.0.s8 %v2897
    %v2899 = vlaneseq
    %v2900 = vshrl.u32 %v2899, 7
    %v2901 = vsub.s32 %v2898, %v2900
    %v2902 = vrot.slane %v2874, %v2901
    %v2903 = vcombine.high %v2881, %v2881
    %v2904 = vcombine.high %v2888, %v2888
    %v2905 = vcombine.high %v2895, %v2895
    %v2906 = vcombine.high %v2902, %v2902
    %v2907 = vlaneseq
    %v2908 = vshrl.u32 %v2907, 7
    %v2909 = vsub.s32 0, %v2908
    %v2910 = vrot.slane %v2881, %v2909
    %v2911 = vlaneseq
    %v2912 = vshrl.u32 %v2911, 7
    %v2913 = vsub.s32 0, %v2912
    %v2914 = vrot.slane %v2895, %v2913
    %v2915 = vlaneseq
    %v2916 = vshrl.u32 %v2915, 7
    %v2917 = vsub.s32 0, %v2916
    %v2918 = vrot.slane %v2903, %v2917
    %v2919 = vlaneseq
    %v2920 = vshrl.u32 %v2919, 7
    %v2921 = vsub.s32 0, %v2920
    %v2922 = vrot.slane %v2905, %v2921
    %v2923 = vlaneseq
    %v2924 = vshrl.u32 %v2923, 7
    %v2925 = vsub.s32 0, %v2924
    %v2926 = vrot.slane %v2888, %v2925
    %v2927 = vlaneseq
    %v2928 = vshrl.u32 %v2927, 7
    %v2929 = vsub.s32 0, %v2928
    %v2930 = vrot.slane %v2902, %v2929
    %v2931 = vlaneseq
    %v2932 = vshrl.u32 %v2931, 7
    %v2933 = vsub.s32 0, %v2932
    %v2934 = vrot.slane %v2904, %v2933
    %v2935 = vlaneseq
    %v2936 = vshrl.u32 %v2935, 7
    %v2937 = vsub.s32 0, %v2936
    %v2938 = vrot.slane %v2906, %v2937
    %v2947 = vmul.f32 %v2838, %v2910
    %v2948 = vmul.f32 %v2839, %v2914
    %v2949 = vmul.f32 %v2840, %v2918
    %v2950 = vmul.f32 %v2841, %v2922
    %v2951 = vmul.f32 %v2842, %v2926
    %v2952 = vmul.f32 %v2843, %v2930
    %v2953 = vmul.f32 %v2844, %v2934
    %v2954 = vmul.f32 %v2845, %v2938
    %v2955 = vsel %vm350, %v2947, 0.0
    %2956 = vadd.xlane.f32.xlu0 %v2955
    %v2957 = vpop.xlane.xlu0 %2956
    %v2958 = vsel %vm350, %v2948, 0.0
    %2959 = vadd.xlane.f32.xlu0 %v2958
    %v2960 = vpop.xlane.xlu0 %2959
    %v2961 = vsel %vm350, %v2949, 0.0
    %2962 = vadd.xlane.f32.xlu0 %v2961
    %v2963 = vpop.xlane.xlu0 %2962
    %v2964 = vsel %vm350, %v2950, 0.0
    %2965 = vadd.xlane.f32.xlu0 %v2964
    %v2966 = vpop.xlane.xlu0 %2965
    %v2967 = vsel %vm350, %v2951, 0.0
    %2968 = vadd.xlane.f32.xlu0 %v2967
    %v2969 = vpop.xlane.xlu0 %2968
    %v2970 = vsel %vm350, %v2952, 0.0
    %2971 = vadd.xlane.f32.xlu0 %v2970
    %v2972 = vpop.xlane.xlu0 %2971
    %v2973 = vsel %vm350, %v2953, 0.0
    %2974 = vadd.xlane.f32.xlu0 %v2973
    %v2975 = vpop.xlane.xlu0 %2974
    %v2976 = vsel %vm350, %v2954, 0.0
    %2977 = vadd.xlane.f32.xlu0 %v2976
    %v2978 = vpop.xlane.xlu0 %2977
    %2980 = vrot.lane.b32.xlu0 %v2855, 96
    %v2981 = vpop.permute.xlu0 %2980
    %v2990 = vlaneseq
    %v2991 = vshrl.u32 %v2990, 7
    %v2992 = vsub.s32 %v387, %v2991
    %v2993 = vrot.slane %v2957, %v2992
    %v2994 = vlaneseq
    %v2995 = vshrl.u32 %v2994, 7
    %v2996 = vsub.s32 %v387, %v2995
    %v2997 = vrot.slane %v2960, %v2996
    %v2998 = vlaneseq
    %v2999 = vshrl.u32 %v2998, 7
    %v3000 = vsub.s32 %v387, %v2999
    %v3001 = vrot.slane %v2963, %v3000
    %v3002 = vlaneseq
    %v3003 = vshrl.u32 %v3002, 7
    %v3004 = vsub.s32 %v387, %v3003
    %v3005 = vrot.slane %v2966, %v3004
    %v3006 = vlaneseq
    %v3007 = vshrl.u32 %v3006, 7
    %v3008 = vsub.s32 %v387, %v3007
    %v3009 = vrot.slane %v2969, %v3008
    %v3010 = vlaneseq
    %v3011 = vshrl.u32 %v3010, 7
    %v3012 = vsub.s32 %v387, %v3011
    %v3013 = vrot.slane %v2972, %v3012
    %v3014 = vlaneseq
    %v3015 = vshrl.u32 %v3014, 7
    %v3016 = vsub.s32 %v387, %v3015
    %v3017 = vrot.slane %v2975, %v3016
    %v3018 = vlaneseq
    %v3019 = vshrl.u32 %v3018, 7
    %v3020 = vsub.s32 %v387, %v3019
    %v3021 = vrot.slane %v2978, %v3020
    %v3022 = vsel %vm420, %v2997, %v2993
    %v3023 = vsel %vm422, %v3001, %v3022
    %v3024 = vsel %vm424, %v3005, %v3023
    %v3025 = vsel %vm426, %v3009, %v3024
    %v3026 = vsel %vm428, %v3013, %v3025
    %v3027 = vsel %vm430, %v3017, %v3026
    %v3028 = vsel %vm432, %v3021, %v3027
    %v3031 = vsel %vm350, %v2854, 0
    %v3034 = vsel %vm350, %v2981, 0
    %3036 = vmatprep.subr.bf16.mxu0 0
    %3037 = vmatpush1.bf16.xpose.msra.mxu0 %v3034
    %3038 = vmatprep.subr.bf16.mxu0 0
    %3039 = vmatpush1.bf16.xpose.msra.mxu0 0
    %3040 = vmatprep.subr.bf16.mxu0 0
    %3041 = vmatpush1.bf16.xpose.msra.mxu0 0
    %3042 = vmatprep.subr.bf16.mxu0 0
    %3043 = vmatpush1.bf16.xpose.msra.mxu0 0
    %3044 = vmatprep.subr.bf16.mxu0 0
    %3045 = vmatpush1.bf16.xpose.msra.mxu0 0
    %3046 = vmatprep.subr.bf16.mxu0 0
    %3047 = vmatpush1.bf16.xpose.msra.mxu0 0
    %3048 = vmatprep.subr.bf16.mxu0 0
    %3049 = vmatpush1.bf16.xpose.msra.mxu0 0
    %3050 = vmatprep.subr.bf16.mxu0 0
    %3051 = vmatpush1.bf16.xpose.msra.mxu0 0
    %3052 = vmatprep.subr.bf16.mxu0 0
    %3053 = vmatpush1.bf16.xpose.msra.mxu0 0
    %3054 = vmatprep.subr.bf16.mxu0 0
    %3055 = vmatpush1.bf16.xpose.msra.mxu0 0
    %3056 = vmatprep.subr.bf16.mxu0 0
    %3057 = vmatpush1.bf16.xpose.msra.mxu0 0
    %3058 = vmatprep.subr.bf16.mxu0 0
    %3059 = vmatpush1.bf16.xpose.msra.mxu0 0
    %3060 = vmatprep.subr.bf16.mxu0 0
    %3061 = vmatpush1.bf16.xpose.msra.mxu0 0
    %3062 = vmatprep.subr.bf16.mxu0 0
    %3063 = vmatpush1.bf16.xpose.msra.mxu0 0
    %3064 = vmatprep.subr.bf16.mxu0 0
    %3065 = vmatpush1.bf16.xpose.msra.mxu0 0
    %3066 = vmatprep.subr.bf16.mxu0 0
    %3067 = vmatpush1.bf16.xpose.msra.mxu0 0
    %3068 = vmatprep.mubr.bf16.mxu0 0
    %3069 = vmatmul.mubr.bf16.gmra.mrb[0].mxu0 %v3031
    %v3070 = vpop.f32.mrb[0].mxu0
    %v3071 = vadd.f32 %v3028, %v3070
    %v3072 = vpop.f32.mrb[0].mxu0
    %v3073 = vpop.f32.mrb[0].mxu0
    %v3074 = vpop.f32.mrb[0].mxu0
    %3075 = vdwg.mxu0
    %v3076 = vmul.f32 %v3071, 0.25
    %v3077 = vadd.f32 %v3076, %v2837
    %v3078 = vsel %vm483, %v3077, -inf
    %3079 = vmax.xlane.f32.xlu0 %v3078
    %v3080 = vpop.xlane.xlu0 %3079
    %v3081 = vsub.f32 %v3077, %v3080
    %v3082 = vmul.f32 %v3081, 1.442695
    %v3083 = vpow.pop %v3082
    %v3084 = vsel %vm483, %v3083, 0.0
    %3085 = vadd.xlane.f32.xlu0 %v3084
    %v3086 = vpop.xlane.xlu0 %3085
    %v3087 = vrcp.pop %v3086
    %v3088 = vmul.f32 %v3083, %v3087
    %v3089 = vpack.c.bf16 %v3088, %v3088
    %3091 = vrot.lane.b32.xlu0 %v2856, 64
    %v3092 = vpop.permute.xlu0 %3091
    %v3094 = vsel %vm483, %v3089, 0
    %v3097 = vsel %vm502, %v3092, 0
    %3099 = vmatprep.subr.bf16.mxu0 0
    %3100 = vmatpush1.bf16.msra.mxu0 %v3097
    %3101 = vmatprep.subr.bf16.mxu0 0
    %3102 = vmatpush1.bf16.msra.mxu0 0
    %3103 = vmatprep.subr.bf16.mxu0 0
    %3104 = vmatpush1.bf16.msra.mxu0 0
    %3105 = vmatprep.subr.bf16.mxu0 0
    %3106 = vmatpush1.bf16.msra.mxu0 0
    %3107 = vmatprep.subr.bf16.mxu0 0
    %3108 = vmatpush1.bf16.msra.mxu0 0
    %3109 = vmatprep.subr.bf16.mxu0 0
    %3110 = vmatpush1.bf16.msra.mxu0 0
    %3111 = vmatprep.subr.bf16.mxu0 0
    %3112 = vmatpush1.bf16.msra.mxu0 0
    %3113 = vmatprep.subr.bf16.mxu0 0
    %3114 = vmatpush1.bf16.msra.mxu0 0
    %3115 = vmatprep.subr.bf16.mxu0 0
    %3116 = vmatpush1.bf16.msra.mxu0 0
    %3117 = vmatprep.subr.bf16.mxu0 0
    %3118 = vmatpush1.bf16.msra.mxu0 0
    %3119 = vmatprep.subr.bf16.mxu0 0
    %3120 = vmatpush1.bf16.msra.mxu0 0
    %3121 = vmatprep.subr.bf16.mxu0 0
    %3122 = vmatpush1.bf16.msra.mxu0 0
    %3123 = vmatprep.subr.bf16.mxu0 0
    %3124 = vmatpush1.bf16.msra.mxu0 0
    %3125 = vmatprep.subr.bf16.mxu0 0
    %3126 = vmatpush1.bf16.msra.mxu0 0
    %3127 = vmatprep.subr.bf16.mxu0 0
    %3128 = vmatpush1.bf16.msra.mxu0 0
    %3129 = vmatprep.subr.bf16.mxu0 0
    %3130 = vmatpush1.bf16.msra.mxu0 0
    %3131 = vmatprep.mubr.bf16.mxu0 0
    %3132 = vmatmul.mubr.bf16.gmra.mrb[0].mxu0 %v3094
    %v3133 = vpop.f32.mrb[0].mxu0
    %v3134 = vadd.f32 0.0, %v3133
    %v3135 = vpop.f32.mrb[0].mxu0
    %v3136 = vpop.f32.mrb[0].mxu0
    %v3137 = vpop.f32.mrb[0].mxu0
    %3138 = vdwg.mxu0
    %3147 = vrot.lane.b32.xlu0 %v2947, 112
    %v3148 = vpop.permute.xlu0 %3147
    %3149 = vrot.lane.b32.xlu0 %v2948, 112
    %v3150 = vpop.permute.xlu0 %3149
    %3151 = vrot.lane.b32.xlu0 %v2949, 112
    %v3152 = vpop.permute.xlu0 %3151
    %3153 = vrot.lane.b32.xlu0 %v2950, 112
    %v3154 = vpop.permute.xlu0 %3153
    %3155 = vrot.lane.b32.xlu0 %v2951, 112
    %v3156 = vpop.permute.xlu0 %3155
    %3157 = vrot.lane.b32.xlu0 %v2952, 112
    %v3158 = vpop.permute.xlu0 %3157
    %3159 = vrot.lane.b32.xlu0 %v2953, 112
    %v3160 = vpop.permute.xlu0 %3159
    %3161 = vrot.lane.b32.xlu0 %v2954, 112
    %v3162 = vpop.permute.xlu0 %3161
    %v3171 = vsel %vm350, %v3148, 0.0
    %3172 = vadd.xlane.f32.xlu0 %v3171
    %v3173 = vpop.xlane.xlu0 %3172
    %v3174 = vsel %vm350, %v3150, 0.0
    %3175 = vadd.xlane.f32.xlu0 %v3174
    %v3176 = vpop.xlane.xlu0 %3175
    %v3177 = vsel %vm350, %v3152, 0.0
    %3178 = vadd.xlane.f32.xlu0 %v3177
    %v3179 = vpop.xlane.xlu0 %3178
    %v3180 = vsel %vm350, %v3154, 0.0
    %3181 = vadd.xlane.f32.xlu0 %v3180
    %v3182 = vpop.xlane.xlu0 %3181
    %v3183 = vsel %vm350, %v3156, 0.0
    %3184 = vadd.xlane.f32.xlu0 %v3183
    %v3185 = vpop.xlane.xlu0 %3184
    %v3186 = vsel %vm350, %v3158, 0.0
    %3187 = vadd.xlane.f32.xlu0 %v3186
    %v3188 = vpop.xlane.xlu0 %3187
    %v3189 = vsel %vm350, %v3160, 0.0
    %3190 = vadd.xlane.f32.xlu0 %v3189
    %v3191 = vpop.xlane.xlu0 %3190
    %v3192 = vsel %vm350, %v3162, 0.0
    %3193 = vadd.xlane.f32.xlu0 %v3192
    %v3194 = vpop.xlane.xlu0 %3193
    %3196 = vrot.lane.b32.xlu0 %v2854, 112
    %v3197 = vpop.permute.xlu0 %3196
    %3198 = vrot.lane.b32.xlu0 %v2855, 80
    %v3199 = vpop.permute.xlu0 %3198
    %v3208 = vlaneseq
    %v3209 = vshrl.u32 %v3208, 7
    %v3210 = vsub.s32 %v387, %v3209
    %v3211 = vrot.slane %v3173, %v3210
    %v3212 = vlaneseq
    %v3213 = vshrl.u32 %v3212, 7
    %v3214 = vsub.s32 %v387, %v3213
    %v3215 = vrot.slane %v3176, %v3214
    %v3216 = vlaneseq
    %v3217 = vshrl.u32 %v3216, 7
    %v3218 = vsub.s32 %v387, %v3217
    %v3219 = vrot.slane %v3179, %v3218
    %v3220 = vlaneseq
    %v3221 = vshrl.u32 %v3220, 7
    %v3222 = vsub.s32 %v387, %v3221
    %v3223 = vrot.slane %v3182, %v3222
    %v3224 = vlaneseq
    %v3225 = vshrl.u32 %v3224, 7
    %v3226 = vsub.s32 %v387, %v3225
    %v3227 = vrot.slane %v3185, %v3226
    %v3228 = vlaneseq
    %v3229 = vshrl.u32 %v3228, 7
    %v3230 = vsub.s32 %v387, %v3229
    %v3231 = vrot.slane %v3188, %v3230
    %v3232 = vlaneseq
    %v3233 = vshrl.u32 %v3232, 7
    %v3234 = vsub.s32 %v387, %v3233
    %v3235 = vrot.slane %v3191, %v3234
    %v3236 = vlaneseq
    %v3237 = vshrl.u32 %v3236, 7
    %v3238 = vsub.s32 %v387, %v3237
    %v3239 = vrot.slane %v3194, %v3238
    %v3240 = vsel %vm420, %v3215, %v3211
    %v3241 = vsel %vm422, %v3219, %v3240
    %v3242 = vsel %vm424, %v3223, %v3241
    %v3243 = vsel %vm426, %v3227, %v3242
    %v3244 = vsel %vm428, %v3231, %v3243
    %v3245 = vsel %vm430, %v3235, %v3244
    %v3246 = vsel %vm432, %v3239, %v3245
    %v3249 = vsel %vm350, %v3197, 0
    %v3252 = vsel %vm350, %v3199, 0
    %3254 = vmatprep.subr.bf16.mxu0 0
    %3255 = vmatpush1.bf16.xpose.msra.mxu0 %v3252
    %3256 = vmatprep.subr.bf16.mxu0 0
    %3257 = vmatpush1.bf16.xpose.msra.mxu0 0
    %3258 = vmatprep.subr.bf16.mxu0 0
    %3259 = vmatpush1.bf16.xpose.msra.mxu0 0
    %3260 = vmatprep.subr.bf16.mxu0 0
    %3261 = vmatpush1.bf16.xpose.msra.mxu0 0
    %3262 = vmatprep.subr.bf16.mxu0 0
    %3263 = vmatpush1.bf16.xpose.msra.mxu0 0
    %3264 = vmatprep.subr.bf16.mxu0 0
    %3265 = vmatpush1.bf16.xpose.msra.mxu0 0
    %3266 = vmatprep.subr.bf16.mxu0 0
    %3267 = vmatpush1.bf16.xpose.msra.mxu0 0
    %3268 = vmatprep.subr.bf16.mxu0 0
    %3269 = vmatpush1.bf16.xpose.msra.mxu0 0
    %3270 = vmatprep.subr.bf16.mxu0 0
    %3271 = vmatpush1.bf16.xpose.msra.mxu0 0
    %3272 = vmatprep.subr.bf16.mxu0 0
    %3273 = vmatpush1.bf16.xpose.msra.mxu0 0
    %3274 = vmatprep.subr.bf16.mxu0 0
    %3275 = vmatpush1.bf16.xpose.msra.mxu0 0
    %3276 = vmatprep.subr.bf16.mxu0 0
    %3277 = vmatpush1.bf16.xpose.msra.mxu0 0
    %3278 = vmatprep.subr.bf16.mxu0 0
    %3279 = vmatpush1.bf16.xpose.msra.mxu0 0
    %3280 = vmatprep.subr.bf16.mxu0 0
    %3281 = vmatpush1.bf16.xpose.msra.mxu0 0
    %3282 = vmatprep.subr.bf16.mxu0 0
    %3283 = vmatpush1.bf16.xpose.msra.mxu0 0
    %3284 = vmatprep.subr.bf16.mxu0 0
    %3285 = vmatpush1.bf16.xpose.msra.mxu0 0
    %3286 = vmatprep.mubr.bf16.mxu0 0
    %3287 = vmatmul.mubr.bf16.gmra.mrb[0].mxu0 %v3249
    %v3288 = vpop.f32.mrb[0].mxu0
    %v3289 = vadd.f32 %v3246, %v3288
    %v3290 = vpop.f32.mrb[0].mxu0
    %v3291 = vpop.f32.mrb[0].mxu0
    %v3292 = vpop.f32.mrb[0].mxu0
    %3293 = vdwg.mxu0
    %v3294 = vmul.f32 %v3289, 0.25
    %v3295 = vadd.f32 %v3294, %v2837
    %v3296 = vsel %vm483, %v3295, -inf
    %3297 = vmax.xlane.f32.xlu0 %v3296
    %v3298 = vpop.xlane.xlu0 %3297
    %v3299 = vsub.f32 %v3295, %v3298
    %v3300 = vmul.f32 %v3299, 1.442695
    %v3301 = vpow.pop %v3300
    %v3302 = vsel %vm483, %v3301, 0.0
    %3303 = vadd.xlane.f32.xlu0 %v3302
    %v3304 = vpop.xlane.xlu0 %3303
    %v3305 = vrcp.pop %v3304
    %v3306 = vmul.f32 %v3301, %v3305
    %v3307 = vpack.c.bf16 %v3306, %v3306
    %3308 = vrot.lane.b32.xlu0 %v2856, 48
    %v3309 = vpop.permute.xlu0 %3308
    %v3311 = vsel %vm483, %v3307, 0
    %v3314 = vsel %vm502, %v3309, 0
    %3316 = vmatprep.subr.bf16.mxu0 0
    %3317 = vmatpush1.bf16.msra.mxu0 %v3314
    %3318 = vmatprep.subr.bf16.mxu0 0
    %3319 = vmatpush1.bf16.msra.mxu0 0
    %3320 = vmatprep.subr.bf16.mxu0 0
    %3321 = vmatpush1.bf16.msra.mxu0 0
    %3322 = vmatprep.subr.bf16.mxu0 0
    %3323 = vmatpush1.bf16.msra.mxu0 0
    %3324 = vmatprep.subr.bf16.mxu0 0
    %3325 = vmatpush1.bf16.msra.mxu0 0
    %3326 = vmatprep.subr.bf16.mxu0 0
    %3327 = vmatpush1.bf16.msra.mxu0 0
    %3328 = vmatprep.subr.bf16.mxu0 0
    %3329 = vmatpush1.bf16.msra.mxu0 0
    %3330 = vmatprep.subr.bf16.mxu0 0
    %3331 = vmatpush1.bf16.msra.mxu0 0
    %3332 = vmatprep.subr.bf16.mxu0 0
    %3333 = vmatpush1.bf16.msra.mxu0 0
    %3334 = vmatprep.subr.bf16.mxu0 0
    %3335 = vmatpush1.bf16.msra.mxu0 0
    %3336 = vmatprep.subr.bf16.mxu0 0
    %3337 = vmatpush1.bf16.msra.mxu0 0
    %3338 = vmatprep.subr.bf16.mxu0 0
    %3339 = vmatpush1.bf16.msra.mxu0 0
    %3340 = vmatprep.subr.bf16.mxu0 0
    %3341 = vmatpush1.bf16.msra.mxu0 0
    %3342 = vmatprep.subr.bf16.mxu0 0
    %3343 = vmatpush1.bf16.msra.mxu0 0
    %3344 = vmatprep.subr.bf16.mxu0 0
    %3345 = vmatpush1.bf16.msra.mxu0 0
    %3346 = vmatprep.subr.bf16.mxu0 0
    %3347 = vmatpush1.bf16.msra.mxu0 0
    %3348 = vmatprep.mubr.bf16.mxu0 0
    %3349 = vmatmul.mubr.bf16.gmra.mrb[0].mxu0 %v3311
    %v3350 = vpop.f32.mrb[0].mxu0
    %v3351 = vadd.f32 0.0, %v3350
    %v3352 = vpop.f32.mrb[0].mxu0
    %v3353 = vpop.f32.mrb[0].mxu0
    %v3354 = vpop.f32.mrb[0].mxu0
    %3355 = vdwg.mxu0
    %3357 = vrot.lane.b32.xlu0 %v3351, 16
    %v3358 = vpop.permute.xlu0 %3357
    %v3360 = vsel %vm350, %v3134, %v3358
    %v3361 = vlaneseq
    %v3362 = vshrl.u32 %v3361, 7
    %v3363 = vsub.s32 0, %v3362
    %v3364 = vrot.slane %v3088, %v3363
    %3366 = vbcast.lane.b32.xlu0 %v3364, 256
    %v3367 = vpop.permute.xlu0 %3366
    %v3368 = vlaneseq
    %v3369 = vshrl.u32 %v3368, 7
    %v3370 = vsub.s32 1, %v3369
    %v3371 = vrot.slane %v3088, %v3370
    %3373 = vbcast.lane.b32.xlu0 %v3371, 256
    %v3374 = vpop.permute.xlu0 %3373
    %v3375 = vlaneseq
    %v3376 = vshrl.u32 %v3375, 7
    %v3377 = vsub.s32 2, %v3376
    %v3378 = vrot.slane %v3088, %v3377
    %3380 = vbcast.lane.b32.xlu0 %v3378, 256
    %v3381 = vpop.permute.xlu0 %3380
    %v3382 = vlaneseq
    %v3383 = vshrl.u32 %v3382, 7
    %v3384 = vsub.s32 3, %v3383
    %v3385 = vrot.slane %v3088, %v3384
    %3387 = vbcast.lane.b32.xlu0 %v3385, 256
    %v3388 = vpop.permute.xlu0 %3387
    %v3389 = vlaneseq
    %v3390 = vshrl.u32 %v3389, 7
    %v3391 = vsub.s32 4, %v3390
    %v3392 = vrot.slane %v3088, %v3391
    %3394 = vbcast.lane.b32.xlu0 %v3392, 256
    %v3395 = vpop.permute.xlu0 %3394
    %v3396 = vlaneseq
    %v3397 = vshrl.u32 %v3396, 7
    %v3398 = vsub.s32 5, %v3397
    %v3399 = vrot.slane %v3088, %v3398
    %3401 = vbcast.lane.b32.xlu0 %v3399, 256
    %v3402 = vpop.permute.xlu0 %3401
    %v3403 = vlaneseq
    %v3404 = vshrl.u32 %v3403, 7
    %v3405 = vsub.s32 6, %v3404
    %v3406 = vrot.slane %v3088, %v3405
    %3408 = vbcast.lane.b32.xlu0 %v3406, 256
    %v3409 = vpop.permute.xlu0 %3408
    %v3410 = vlaneseq
    %v3411 = vshrl.u32 %v3410, 7
    %v3412 = vsub.s32 7, %v3411
    %v3413 = vrot.slane %v3088, %v3412
    %3415 = vbcast.lane.b32.xlu0 %v3413, 256
    %v3416 = vpop.permute.xlu0 %3415
    %v3417 = vlaneseq
    %v3418 = vshrl.u32 %v3417, 7
    %v3419 = vsub.s32 0, %v3418
    %v3420 = vrot.slane %v3306, %v3419
    %3422 = vbcast.lane.b32.xlu0 %v3420, 256
    %v3423 = vpop.permute.xlu0 %3422
    %v3424 = vlaneseq
    %v3425 = vshrl.u32 %v3424, 7
    %v3426 = vsub.s32 1, %v3425
    %v3427 = vrot.slane %v3306, %v3426
    %3429 = vbcast.lane.b32.xlu0 %v3427, 256
    %v3430 = vpop.permute.xlu0 %3429
    %v3431 = vlaneseq
    %v3432 = vshrl.u32 %v3431, 7
    %v3433 = vsub.s32 2, %v3432
    %v3434 = vrot.slane %v3306, %v3433
    %3436 = vbcast.lane.b32.xlu0 %v3434, 256
    %v3437 = vpop.permute.xlu0 %3436
    %v3438 = vlaneseq
    %v3439 = vshrl.u32 %v3438, 7
    %v3440 = vsub.s32 3, %v3439
    %v3441 = vrot.slane %v3306, %v3440
    %3443 = vbcast.lane.b32.xlu0 %v3441, 256
    %v3444 = vpop.permute.xlu0 %3443
    %v3445 = vlaneseq
    %v3446 = vshrl.u32 %v3445, 7
    %v3447 = vsub.s32 4, %v3446
    %v3448 = vrot.slane %v3306, %v3447
    %3450 = vbcast.lane.b32.xlu0 %v3448, 256
    %v3451 = vpop.permute.xlu0 %3450
    %v3452 = vlaneseq
    %v3453 = vshrl.u32 %v3452, 7
    %v3454 = vsub.s32 5, %v3453
    %v3455 = vrot.slane %v3306, %v3454
    %3457 = vbcast.lane.b32.xlu0 %v3455, 256
    %v3458 = vpop.permute.xlu0 %3457
    %v3459 = vlaneseq
    %v3460 = vshrl.u32 %v3459, 7
    %v3461 = vsub.s32 6, %v3460
    %v3462 = vrot.slane %v3306, %v3461
    %3464 = vbcast.lane.b32.xlu0 %v3462, 256
    %v3465 = vpop.permute.xlu0 %3464
    %v3466 = vlaneseq
    %v3467 = vshrl.u32 %v3466, 7
    %v3468 = vsub.s32 7, %v3467
    %v3469 = vrot.slane %v3306, %v3468
    %3471 = vbcast.lane.b32.xlu0 %v3469, 256
    %v3472 = vpop.permute.xlu0 %3471
    %v3473 = vsel %vm350, %v3367, %v3423
    %v3474 = vsel %vm350, %v3374, %v3430
    %v3475 = vsel %vm350, %v3381, %v3437
    %v3476 = vsel %vm350, %v3388, %v3444
    %v3477 = vsel %vm350, %v3395, %v3451
    %v3478 = vsel %vm350, %v3402, %v3458
    %v3479 = vsel %vm350, %v3409, %v3465
    %v3480 = vsel %vm350, %v3416, %v3472
    %v3481 = vmul.f32 %v3473, %v2846
    %v3482 = vmul.f32 %v3474, %v2847
    %v3483 = vmul.f32 %v3475, %v2848
    %v3484 = vmul.f32 %v3476, %v2849
    %v3485 = vmul.f32 %v3477, %v2850
    %v3486 = vmul.f32 %v3478, %v2851
    %v3487 = vmul.f32 %v3479, %v2852
    %v3488 = vmul.f32 %v3480, %v2853
    %v3489 = vsel %vm175, %v3481, 0.0
    %v3490 = vrot.slane %v3489, 4
    %v3491 = vadd.f32 %v3489, %v3490
    %v3492 = vrot.slane %v3491, 2
    %v3493 = vadd.f32 %v3491, %v3492
    %v3494 = vrot.slane %v3493, 1
    %v3495 = vadd.f32 %v3493, %v3494
    %v3496 = vsel %vm175, %v3482, 0.0
    %v3497 = vrot.slane %v3496, 4
    %v3498 = vadd.f32 %v3496, %v3497
    %v3499 = vrot.slane %v3498, 2
    %v3500 = vadd.f32 %v3498, %v3499
    %v3501 = vrot.slane %v3500, 1
    %v3502 = vadd.f32 %v3500, %v3501
    %v3503 = vsel %vm175, %v3483, 0.0
    %v3504 = vrot.slane %v3503, 4
    %v3505 = vadd.f32 %v3503, %v3504
    %v3506 = vrot.slane %v3505, 2
    %v3507 = vadd.f32 %v3505, %v3506
    %v3508 = vrot.slane %v3507, 1
    %v3509 = vadd.f32 %v3507, %v3508
    %v3510 = vsel %vm175, %v3484, 0.0
    %v3511 = vrot.slane %v3510, 4
    %v3512 = vadd.f32 %v3510, %v3511
    %v3513 = vrot.slane %v3512, 2
    %v3514 = vadd.f32 %v3512, %v3513
    %v3515 = vrot.slane %v3514, 1
    %v3516 = vadd.f32 %v3514, %v3515
    %v3517 = vsel %vm175, %v3485, 0.0
    %v3518 = vrot.slane %v3517, 4
    %v3519 = vadd.f32 %v3517, %v3518
    %v3520 = vrot.slane %v3519, 2
    %v3521 = vadd.f32 %v3519, %v3520
    %v3522 = vrot.slane %v3521, 1
    %v3523 = vadd.f32 %v3521, %v3522
    %v3524 = vsel %vm175, %v3486, 0.0
    %v3525 = vrot.slane %v3524, 4
    %v3526 = vadd.f32 %v3524, %v3525
    %v3527 = vrot.slane %v3526, 2
    %v3528 = vadd.f32 %v3526, %v3527
    %v3529 = vrot.slane %v3528, 1
    %v3530 = vadd.f32 %v3528, %v3529
    %v3531 = vsel %vm175, %v3487, 0.0
    %v3532 = vrot.slane %v3531, 4
    %v3533 = vadd.f32 %v3531, %v3532
    %v3534 = vrot.slane %v3533, 2
    %v3535 = vadd.f32 %v3533, %v3534
    %v3536 = vrot.slane %v3535, 1
    %v3537 = vadd.f32 %v3535, %v3536
    %v3538 = vsel %vm175, %v3488, 0.0
    %v3539 = vrot.slane %v3538, 4
    %v3540 = vadd.f32 %v3538, %v3539
    %v3541 = vrot.slane %v3540, 2
    %v3542 = vadd.f32 %v3540, %v3541
    %v3543 = vrot.slane %v3542, 1
    %v3544 = vadd.f32 %v3542, %v3543
    %v3553 = vsel %vm420, %v3502, %v3495
    %v3554 = vsel %vm422, %v3509, %v3553
    %v3555 = vsel %vm424, %v3516, %v3554
    %v3556 = vsel %vm426, %v3523, %v3555
    %v3557 = vsel %vm428, %v3530, %v3556
    %v3558 = vsel %vm430, %v3537, %v3557
    %v3559 = vsel %vm432, %v3544, %v3558
    %v3561 = vadd.f32 %v3360, %v3559
    %v3562 = vpack.c.bf16 %v3561, %v2824
    %v3563 = vlaneseq
    %v3564 = vshrl.u32 %v3563, 7
    %v3565 = vsub.s32 1, %v3564
    %v3566 = vrot.slane %v2026, %v3565
    %v3571 = vunpack.c.l.b16 %v2007
    %v3572 = vunpack.c.l.b16 %v2008
    %v3573 = vunpack.c.l.b16 %v2009
    %v3574 = vunpack.c.l.b16 %v2010
    %v3575 = vpack.c.b16 %v3572, %v3571
    %v3576 = vpack.c.b16 %v3574, %v3573
    %v3580 = vsel %vm175, %v3562, 0
    %3582 = vmatprep.subr.bf16.mxu0 0
    %3583 = vmatpush1.bf16.msra.mxu0 %v3575
    %3584 = vmatprep.subr.bf16.mxu0 0
    %3585 = vmatpush1.bf16.msra.mxu0 %v3576
    %3586 = vmatprep.subr.bf16.mxu0 0
    %3587 = vmatpush1.bf16.msra.mxu0 0
    %3588 = vmatprep.subr.bf16.mxu0 0
    %3589 = vmatpush1.bf16.msra.mxu0 0
    %3590 = vmatprep.subr.bf16.mxu0 0
    %3591 = vmatpush1.bf16.msra.mxu0 0
    %3592 = vmatprep.subr.bf16.mxu0 0
    %3593 = vmatpush1.bf16.msra.mxu0 0
    %3594 = vmatprep.subr.bf16.mxu0 0
    %3595 = vmatpush1.bf16.msra.mxu0 0
    %3596 = vmatprep.subr.bf16.mxu0 0
    %3597 = vmatpush1.bf16.msra.mxu0 0
    %3598 = vmatprep.subr.bf16.mxu0 0
    %3599 = vmatpush1.bf16.msra.mxu0 0
    %3600 = vmatprep.subr.bf16.mxu0 0
    %3601 = vmatpush1.bf16.msra.mxu0 0
    %3602 = vmatprep.subr.bf16.mxu0 0
    %3603 = vmatpush1.bf16.msra.mxu0 0
    %3604 = vmatprep.subr.bf16.mxu0 0
    %3605 = vmatpush1.bf16.msra.mxu0 0
    %3606 = vmatprep.subr.bf16.mxu0 0
    %3607 = vmatpush1.bf16.msra.mxu0 0
    %3608 = vmatprep.subr.bf16.mxu0 0
    %3609 = vmatpush1.bf16.msra.mxu0 0
    %3610 = vmatprep.subr.bf16.mxu0 0
    %3611 = vmatpush1.bf16.msra.mxu0 0
    %3612 = vmatprep.subr.bf16.mxu0 0
    %3613 = vmatpush1.bf16.msra.mxu0 0
    %3614 = vmatprep.mubr.bf16.mxu0 0
    %3615 = vmatmul.mubr.bf16.gmra.mrb[0].mxu0 %v3580
    %v3616 = vpop.f32.mrb[0].mxu0
    %v3617 = vadd.f32 %v3566, %v3616
    %v3618 = vpop.f32.mrb[0].mxu0
    %v3619 = vpop.f32.mrb[0].mxu0
    %v3620 = vadd.f32 %v3566, %v3619
    %v3621 = vpop.f32.mrb[0].mxu0
    %3622 = vdwg.mxu0
    %v3623 = vadd.f32 %v3617, %v1997
    %v3624 = vadd.f32 %v3620, %v1998
    %v3625 = vsel %vm175, %v3623, 0.0
    %3626 = vadd.xlane.f32.xlu0 %v3625
    %v3627 = vpop.xlane.xlu0 %3626
    %v3628 = vsel %vm175, %v3624, 0.0
    %3629 = vadd.xlane.f32.xlu0 %v3628
    %v3630 = vpop.xlane.xlu0 %3629
    %v3631 = vmul.f32 %v3627, %v1780
    %v3632 = vmul.f32 %v3630, %v1780
    %v3633 = vsub.f32 %v3623, %v3631
    %v3634 = vsub.f32 %v3624, %v3632
    %v3635 = vmul.f32 %v3633, %v3633
    %v3636 = vmul.f32 %v3634, %v3634
    %v3637 = vsel %vm175, %v3635, 0.0
    %3638 = vadd.xlane.f32.xlu0 %v3637
    %v3639 = vpop.xlane.xlu0 %3638
    %v3640 = vsel %vm175, %v3636, 0.0
    %3641 = vadd.xlane.f32.xlu0 %v3640
    %v3642 = vpop.xlane.xlu0 %3641
    %v3643 = vmul.f32 %v3639, %v1780
    %v3644 = vmul.f32 %v3642, %v1780
    %v3645 = vadd.f32 %v3643, 1e-12
    %v3646 = vadd.f32 %v3644, 1e-12
    %v3647 = vrsqrt.pop %v3645
    %v3648 = vrsqrt.pop %v3646
    %v3649 = vmul.f32 %v3633, %v3647
    %v3650 = vmul.f32 %v3634, %v3648
    %v3651 = vlaneseq
    %v3652 = vshrl.u32 %v3651, 7
    %v3653 = vsub.s32 2, %v3652
    %v3654 = vrot.slane %v2026, %v3653
    %v3655 = vmul.f32 %v3649, %v3654
    %v3656 = vmul.f32 %v3650, %v3654
    %v3657 = vlaneseq
    %v3658 = vshrl.u32 %v3657, 7
    %v3659 = vsub.s32 3, %v3658
    %v3660 = vrot.slane %v2026, %v3659
    %v3661 = vadd.f32 %v3655, %v3660
    %v3662 = vadd.f32 %v3656, %v3660
    %v3663 = vpack.c.bf16 %v3662, %v3661
    %v3664 = vlaneseq
    %v3665 = vshrl.u32 %v3664, 7
    %v3666 = vsub.s32 4, %v3665
    %v3667 = vrot.slane %v2026, %v3666
    %v3672 = vunpack.c.l.b16 %v2012
    %v3673 = vunpack.c.l.b16 %v2013
    %v3674 = vunpack.c.l.b16 %v2014
    %v3675 = vunpack.c.l.b16 %v2015
    %v3676 = vpack.c.b16 %v3673, %v3672
    %v3677 = vpack.c.b16 %v3675, %v3674
    %v3681 = vsel %vm175, %v3663, 0
    %3683 = vmatprep.subr.bf16.mxu0 0
    %3684 = vmatpush1.bf16.msra.mxu0 %v3676
    %3685 = vmatprep.subr.bf16.mxu0 0
    %3686 = vmatpush1.bf16.msra.mxu0 %v3677
    %3687 = vmatprep.subr.bf16.mxu0 0
    %3688 = vmatpush1.bf16.msra.mxu0 0
    %3689 = vmatprep.subr.bf16.mxu0 0
    %3690 = vmatpush1.bf16.msra.mxu0 0
    %3691 = vmatprep.subr.bf16.mxu0 0
    %3692 = vmatpush1.bf16.msra.mxu0 0
    %3693 = vmatprep.subr.bf16.mxu0 0
    %3694 = vmatpush1.bf16.msra.mxu0 0
    %3695 = vmatprep.subr.bf16.mxu0 0
    %3696 = vmatpush1.bf16.msra.mxu0 0
    %3697 = vmatprep.subr.bf16.mxu0 0
    %3698 = vmatpush1.bf16.msra.mxu0 0
    %3699 = vmatprep.subr.bf16.mxu0 0
    %3700 = vmatpush1.bf16.msra.mxu0 0
    %3701 = vmatprep.subr.bf16.mxu0 0
    %3702 = vmatpush1.bf16.msra.mxu0 0
    %3703 = vmatprep.subr.bf16.mxu0 0
    %3704 = vmatpush1.bf16.msra.mxu0 0
    %3705 = vmatprep.subr.bf16.mxu0 0
    %3706 = vmatpush1.bf16.msra.mxu0 0
    %3707 = vmatprep.subr.bf16.mxu0 0
    %3708 = vmatpush1.bf16.msra.mxu0 0
    %3709 = vmatprep.subr.bf16.mxu0 0
    %3710 = vmatpush1.bf16.msra.mxu0 0
    %3711 = vmatprep.subr.bf16.mxu0 0
    %3712 = vmatpush1.bf16.msra.mxu0 0
    %3713 = vmatprep.subr.bf16.mxu0 0
    %3714 = vmatpush1.bf16.msra.mxu0 0
    %3715 = vmatprep.mubr.bf16.mxu0 0
    %3716 = vmatmul.mubr.bf16.gmra.mrb[0].mxu0 %v3681
    %v3717 = vpop.f32.mrb[0].mxu0
    %v3718 = vadd.f32 %v3667, %v3717
    %v3719 = vpop.f32.mrb[0].mxu0
    %v3720 = vpop.f32.mrb[0].mxu0
    %v3721 = vadd.f32 %v3667, %v3720
    %v3722 = vpop.f32.mrb[0].mxu0
    %3723 = vdwg.mxu0
    %v3724 = vmul.f32 %v3718, 0.5
    %v3725 = vmul.f32 %v3721, 0.5
    %v3726 = vmul.f32 %v3718, %v1876
    %v3727 = vmul.f32 %v3721, %v1876
    %v3728 = verf.f32.pop %v3726
    %v3729 = verf.f32.pop %v3727
    %v3730 = vadd.f32 %v3728, 1.0
    %v3731 = vadd.f32 %v3729, 1.0
    %v3732 = vmul.f32 %v3724, %v3730
    %v3733 = vmul.f32 %v3725, %v3731
    %v3734 = vpack.c.bf16 %v3733, %v3732
    %v3735 = vlaneseq
    %v3736 = vshrl.u32 %v3735, 7
    %v3737 = vsub.s32 5, %v3736
    %v3738 = vrot.slane %v2026, %v3737
    %v3747 = vunpack.c.l.b16 %v2017
    %v3748 = vunpack.c.l.b16 %v2018
    %v3749 = vunpack.c.l.b16 %v2019
    %v3750 = vunpack.c.l.b16 %v2020
    %v3751 = vunpack.c.l.b16 %v2021
    %v3752 = vunpack.c.l.b16 %v2022
    %v3753 = vunpack.c.l.b16 %v2023
    %v3754 = vunpack.c.l.b16 %v2024
    %v3755 = vpack.c.b16 %v3748, %v3747
    %v3756 = vpack.c.b16 %v3750, %v3749
    %v3757 = vpack.c.b16 %v3752, %v3751
    %v3758 = vpack.c.b16 %v3754, %v3753
    %v3764 = vsel %vm1914, %v3734, 0
    %3766 = vmatprep.subr.bf16.mxu0 0
    %3767 = vmatpush1.bf16.msra.mxu0 %v3755
    %3768 = vmatprep.subr.bf16.mxu0 0
    %3769 = vmatpush1.bf16.msra.mxu0 %v3756
    %3770 = vmatprep.subr.bf16.mxu0 0
    %3771 = vmatpush1.bf16.msra.mxu0 %v3757
    %3772 = vmatprep.subr.bf16.mxu0 0
    %3773 = vmatpush1.bf16.msra.mxu0 %v3758
    %3774 = vmatprep.subr.bf16.mxu0 0
    %3775 = vmatpush1.bf16.msra.mxu0 0
    %3776 = vmatprep.subr.bf16.mxu0 0
    %3777 = vmatpush1.bf16.msra.mxu0 0
    %3778 = vmatprep.subr.bf16.mxu0 0
    %3779 = vmatpush1.bf16.msra.mxu0 0
    %3780 = vmatprep.subr.bf16.mxu0 0
    %3781 = vmatpush1.bf16.msra.mxu0 0
    %3782 = vmatprep.subr.bf16.mxu0 0
    %3783 = vmatpush1.bf16.msra.mxu0 0
    %3784 = vmatprep.subr.bf16.mxu0 0
    %3785 = vmatpush1.bf16.msra.mxu0 0
    %3786 = vmatprep.subr.bf16.mxu0 0
    %3787 = vmatpush1.bf16.msra.mxu0 0
    %3788 = vmatprep.subr.bf16.mxu0 0
    %3789 = vmatpush1.bf16.msra.mxu0 0
    %3790 = vmatprep.subr.bf16.mxu0 0
    %3791 = vmatpush1.bf16.msra.mxu0 0
    %3792 = vmatprep.subr.bf16.mxu0 0
    %3793 = vmatpush1.bf16.msra.mxu0 0
    %3794 = vmatprep.subr.bf16.mxu0 0
    %3795 = vmatpush1.bf16.msra.mxu0 0
    %3796 = vmatprep.subr.bf16.mxu0 0
    %3797 = vmatpush1.bf16.msra.mxu0 0
    %3798 = vmatprep.mubr.bf16.mxu0 0
    %3799 = vmatmul.mubr.bf16.gmra.mrb[0].mxu0 %v3764
    %v3800 = vpop.f32.mrb[0].mxu0
    %v3801 = vadd.f32 %v3738, %v3800
    %v3802 = vpop.f32.mrb[0].mxu0
    %v3803 = vpop.f32.mrb[0].mxu0
    %v3804 = vadd.f32 %v3738, %v3803
    %v3805 = vpop.f32.mrb[0].mxu0
    %3806 = vdwg.mxu0
    %v3807 = vadd.f32 %v3801, %v3661
    %v3808 = vadd.f32 %v3804, %v3662
    %v3809 = vsel %vm175, %v3807, 0.0
    %3810 = vadd.xlane.f32.xlu0 %v3809
    %v3811 = vpop.xlane.xlu0 %3810
    %v3812 = vsel %vm175, %v3808, 0.0
    %3813 = vadd.xlane.f32.xlu0 %v3812
    %v3814 = vpop.xlane.xlu0 %3813
    %v3815 = vmul.f32 %v3811, %v1780
    %v3816 = vmul.f32 %v3814, %v1780
    %v3817 = vsub.f32 %v3807, %v3815
    %v3818 = vsub.f32 %v3808, %v3816
    %v3819 = vmul.f32 %v3817, %v3817
    %v3820 = vmul.f32 %v3818, %v3818
    %v3821 = vsel %vm175, %v3819, 0.0
    %3822 = vadd.xlane.f32.xlu0 %v3821
    %v3823 = vpop.xlane.xlu0 %3822
    %v3824 = vsel %vm175, %v3820, 0.0
    %3825 = vadd.xlane.f32.xlu0 %v3824
    %v3826 = vpop.xlane.xlu0 %3825
    %v3827 = vmul.f32 %v3823, %v1780
    %v3828 = vmul.f32 %v3826, %v1780
    %v3829 = vadd.f32 %v3827, 1e-12
    %v3830 = vadd.f32 %v3828, 1e-12
    %v3831 = vrsqrt.pop %v3829
    %v3832 = vrsqrt.pop %v3830
    %v3833 = vmul.f32 %v3817, %v3831
    %v3834 = vmul.f32 %v3818, %v3832
    %v3835 = vlaneseq
    %v3836 = vshrl.u32 %v3835, 7
    %v3837 = vsub.s32 6, %v3836
    %v3838 = vrot.slane %v2026, %v3837
    %v3839 = vmul.f32 %v3833, %v3838
    %v3840 = vmul.f32 %v3834, %v3838
    %v3841 = vlaneseq
    %v3842 = vshrl.u32 %v3841, 7
    %v3843 = vsub.s32 7, %v3842
    %v3844 = vrot.slane %v2026, %v3843
    %v3845 = vadd.f32 %v3839, %v3844
    %v3846 = vadd.f32 %v3840, %v3844
    %s3847 = scalar_lea.vmem [#allocation14], 16
    %3848 = vst.msk [vmem:[%s3847] sm:$0xff] %vm175, %v3845
    %3849 = vst.msk [vmem:[%s3847 + $0x8] sm:$0xff] %vm175, %v3846
    // Predicated region
    $region74: #{tpu_custom_call.1} parent=1 // pred_check
      _
    $region75: #{tpu_custom_call.1} parent=1 // pred_check_branch
      %3851 = sbr.rel (0) target = $region77
    $region76: #{tpu_custom_call.1} parent=1 // pred_region
      %s3853 = ssub.s32 512, 512
      %3854 = vsyncadd [#allocation4], %s3853
      %s3855 = sshll.u32 [#allocation14], 4
      %s3856 = int_to_ptr.vmem [resolvable:$true] %s3855
      %3861 = dma.vmem_to_hbm [thread:$0]  %s3856, 512, %s11, [#allocation4], 128, 128, 8
    $region77: #{tpu_custom_call.1} parent=1 // pred_fallthru
      _
    // Predicated region
    $region78: #{tpu_custom_call.1} parent=1 // pred_check
      _
    $region79: #{tpu_custom_call.1} parent=1 // pred_check_branch
      %3863 = sbr.rel (0) target = $region81
    $region80: #{tpu_custom_call.1} parent=1 // pred_region
      %3864 = dma.done [#allocation4], 512
    $region81: #{tpu_custom_call.1} parent=1 // pred_fallthru
      _
    %3865 = vsyncpa [#allocation3], 1
    %3866 = vsyncpa [#allocation6], 1
    %3867 = vsyncpa [#allocation9], 1
    %3868 = vsyncpa [#allocation12], 1
    %3869 = vsyncpa [#allocation4], 1

</llo_original>
